<compile_context>
chip_gen: v5e
topology: v5e:2x2
jax: 0.10.0
libtpu: 0.0.40
codegen_flags: <defaults>
</compile_context>

<pallas_src>
import functools

import jax
import jax.numpy as jnp
import numpy as np
from jax import lax
from jax.experimental import pallas as pl
from jax.experimental.pallas import tpu as pltpu

EPS = 1e-5
KSIZE = 5
PAD = 2


# ----------------------------- fused Pallas kernel ---------------------------------
def _encoder_block_kernel(x_ref, w1_ref, b1_ref, g1_ref, bt1_ref, m1_ref, t_ref,
                          w2_ref, b2_ref, g2_ref, bt2_ref, s_ref, o_ref, *, wp, hw):
    """Fused conv1+LN1+ReLU+conv2+LN2+ReLU for one sample.

    x_ref  : (1, Cin, Hp*Wp)  zero-padded input, flattened on the padded (Hp,Wp) grid
    w1_ref : (25, Cout, Cin)  conv1 weight per (kh,kw) tap
    b1_ref : (Cout, 1)
    g1_ref : (Cout, A)        LN1 gamma in anchor layout, A = (H-1)*Wp + W
    bt1_ref: (Cout, A)        LN1 beta
    m1_ref : (1, A)           1.0 on valid anchors (real (h,w) positions), else 0.0
    t_ref  : (A, Hp*Wp)       0/1 scatter: valid anchor a -> padded-grid column a+PAD*Wp+PAD
    w2_ref : (25, Cout, Cout) conv2 weight per tap
    b2_ref : (Cout, 1)
    g2_ref : (Cout, P2)       LN2 gamma, P2 = (H/2)*(W/2)
    bt2_ref: (Cout, P2)
    s_ref  : (A, P2)          0/1 selector for the stride-2 output positions
    o_ref  : (1, Cout, P2)
    """
    A = g1_ref.shape[-1]
    cout = o_ref.shape[1]
    p2n = g2_ref.shape[-1]

    # ---------------- stage 1: 5x5 stride-1 conv as 25 shifted MXU matmuls ----------
    x2d = x_ref[0]                                               # (Cin, Hp*Wp)
    y1 = jnp.zeros((cout, A), jnp.float32)
    for kh in range(KSIZE):
        for kw in range(KSIZE):
            off = kh * wp + kw
            y1 = y1 + jnp.dot(w1_ref[kh * KSIZE + kw], x2d[:, off:off + A],
                              preferred_element_type=jnp.float32)
    y1 = y1 + b1_ref[...]                                        # bias broadcast over lanes

    # LayerNorm over the whole [Cout, H, W] slab: single pass, masked to valid anchors.
    mask = m1_ref[...]
    ym = y1 * mask
    inv_n1 = 1.0 / (cout * hw)
    mu1 = jnp.sum(ym) * inv_n1
    var1 = jnp.sum(ym * y1) * inv_n1 - mu1 * mu1
    z1 = (y1 - mu1) * lax.rsqrt(var1 + EPS) * g1_ref[...] + bt1_ref[...]
    z1 = jnp.maximum(z1, 0.0)                                    # ReLU

    # Re-embed into the zero-padded (Hp,Wp) grid of stage 2 via an exact 0/1 matmul
    # (also drops the invalid anchor columns).  Activation stays in VMEM/vregs.
    p2 = jnp.dot(z1, t_ref[...], preferred_element_type=jnp.float32)   # (Cout, Hp*Wp)

    # ---------------- stage 2: 5x5 stride-2 conv -------------------------------------
    y2 = jnp.zeros((cout, A), jnp.float32)
    for kh in range(KSIZE):
        for kw in range(KSIZE):
            off = kh * wp + kw
            y2 = y2 + jnp.dot(w2_ref[kh * KSIZE + kw], p2[:, off:off + A],
                              preferred_element_type=jnp.float32)
    # stride-2 decimation as an exact 0/1 selection matmul -> lane-dense (Cout, P2)
    y2 = jnp.dot(y2, s_ref[...], preferred_element_type=jnp.float32) + b2_ref[...]

    inv_n2 = 1.0 / (cout * p2n)
    mu2 = jnp.sum(y2) * inv_n2
    var2 = jnp.sum(y2 * y2) * inv_n2 - mu2 * mu2
    z2 = (y2 - mu2) * lax.rsqrt(var2 + EPS) * g2_ref[...] + bt2_ref[...]
    o_ref[0] = jnp.maximum(z2, 0.0)


# --------------------------------- wrapper ------------------------------------------
def encoder_block_forward(x, params):
    """Full EncoderBlock forward.  x: (N, Cin, H, W) -> (N, Cout, H//2, W//2)."""
    (w1, b1, g1, bt1, w2, b2, g2, bt2) = params
    N, Cin, H, W = x.shape
    Cout = w1.shape[0]
    Hp, Wp = H + 2 * PAD, W + 2 * PAD
    H2, W2 = H // 2, W // 2
    A = (H - 1) * Wp + W                 # anchor columns (output positions on padded grid)
    P2 = H2 * W2
    HWp = Hp * Wp

    # --- cheap layout plumbing (no 25x im2col blowup, no NCHW<->NHWC transposes) ---
    x_flat = jnp.pad(x, ((0, 0), (0, 0), (PAD, PAD), (PAD, PAD))).reshape(N, Cin, HWp)
    w1_taps = jnp.transpose(w1, (2, 3, 0, 1)).reshape(KSIZE * KSIZE, Cout, Cin)
    w2_taps = jnp.transpose(w2, (2, 3, 0, 1)).reshape(KSIZE * KSIZE, Cout, Cout)

    def ln_to_anchor(p):                 # (Cout, H, W) -> (Cout, A), no transpose
        return jnp.pad(p, ((0, 0), (0, 0), (0, Wp - W))).reshape(Cout, H * Wp)[:, :A]

    g1a, bt1a = ln_to_anchor(g1), ln_to_anchor(bt1)
    g2a, bt2a = g2.reshape(Cout, P2), bt2.reshape(Cout, P2)

    # host-side 0/1 constants: anchor validity, pad/scatter matrix, stride-2 selector
    a_idx = np.arange(A)
    valid = (a_idx % Wp) < W
    mask1 = jnp.asarray(valid.astype(np.float32)[None, :])                         # (1, A)
    t_np = (np.arange(HWp)[None, :] == (a_idx[:, None] + PAD * Wp + PAD)) & valid[:, None]
    t_mat = jnp.asarray(t_np.astype(np.float32))                                   # (A, HWp)
    sel = (2 * np.arange(H2)[:, None] * Wp + 2 * np.arange(W2)[None, :]).reshape(-1)
    s_mat = jnp.asarray((a_idx[:, None] == sel[None, :]).astype(np.float32))       # (A, P2)

    kern = functools.partial(_encoder_block_kernel, wp=Wp, hw=H * W)
    out = pl.pallas_call(
        kern,
        out_shape=jax.ShapeDtypeStruct((N, Cout, P2), jnp.float32),
        grid_spec=pltpu.PrefetchScalarGridSpec(
            num_scalar_prefetch=0,
            grid=(N,),
            in_specs=[
                pl.BlockSpec((1, Cin, HWp), lambda n: (n, 0, 0)),
                pl.BlockSpec((KSIZE * KSIZE, Cout, Cin), lambda n: (0, 0, 0)),
                pl.BlockSpec((Cout, 1), lambda n: (0, 0)),
                pl.BlockSpec((Cout, A), lambda n: (0, 0)),
                pl.BlockSpec((Cout, A), lambda n: (0, 0)),
                pl.BlockSpec((1, A), lambda n: (0, 0)),
                pl.BlockSpec((A, HWp), lambda n: (0, 0)),
                pl.BlockSpec((KSIZE * KSIZE, Cout, Cout), lambda n: (0, 0, 0)),
                pl.BlockSpec((Cout, 1), lambda n: (0, 0)),
                pl.BlockSpec((Cout, P2), lambda n: (0, 0)),
                pl.BlockSpec((Cout, P2), lambda n: (0, 0)),
                pl.BlockSpec((A, P2), lambda n: (0, 0)),
            ],
            out_specs=pl.BlockSpec((1, Cout, P2), lambda n: (n, 0, 0)),
        ),
        compiler_params=pltpu.CompilerParams(dimension_semantics=("parallel",)),
    )(x_flat, w1_taps, b1.reshape(Cout, 1), g1a, bt1a, mask1, t_mat,
      w2_taps, b2.reshape(Cout, 1), g2a, bt2a, s_mat)
    return out.reshape(N, Cout, H2, W2)


# --------------------------- pure-JAX reference --------------------------------------
def _layernorm_chw(y, gamma, beta):
    mean = jnp.mean(y, axis=(1, 2, 3), keepdims=True)
    var = jnp.mean((y - mean) ** 2, axis=(1, 2, 3), keepdims=True)
    return (y - mean) * lax.rsqrt(var + EPS) * gamma[None] + beta[None]


def ref_forward(x, params):
    (w1, b1, g1, bt1, w2, b2, g2, bt2) = params
    dn = ("NCHW", "OIHW", "NCHW")
    y = lax.conv_general_dilated(x, w1, (1, 1), ((2, 2), (2, 2)), dimension_numbers=dn)
    y = y + b1[None, :, None, None]
    y = jnp.maximum(_layernorm_chw(y, g1, bt1), 0.0)
    y = lax.conv_general_dilated(y, w2, (2, 2), ((2, 2), (2, 2)), dimension_numbers=dn)
    y = y + b2[None, :, None, None]
    y = jnp.maximum(_layernorm_chw(y, g2, bt2), 0.0)
    return y


# ----------------------------------- main ---------------------------------------------
if __name__ == "__main__":
    N, Cin, Cout, H, W = 2, 4, 8, 16, 16

    key = jax.random.PRNGKey(0)
    ks = jax.random.split(key, 9)
    x = jax.random.normal(ks[0], (N, Cin, H, W), jnp.float32)

    # Deterministic parameter init (shapes match nn.Conv2d / nn.LayerNorm).
    w1 = jax.random.normal(ks[1], (Cout, Cin, 5, 5), jnp.float32) * 0.1
    b1 = jax.random.normal(ks[2], (Cout,), jnp.float32) * 0.1
    g1 = 1.0 + 0.1 * jax.random.normal(ks[3], (Cout, H, W), jnp.float32)
    bt1 = 0.1 * jax.random.normal(ks[4], (Cout, H, W), jnp.float32)
    w2 = jax.random.normal(ks[5], (Cout, Cout, 5, 5), jnp.float32) * 0.1
    b2 = jax.random.normal(ks[6], (Cout,), jnp.float32) * 0.1
    g2 = 1.0 + 0.1 * jax.random.normal(ks[7], (Cout, H // 2, W // 2), jnp.float32)
    bt2 = 0.1 * jax.random.normal(ks[8], (Cout, H // 2, W // 2), jnp.float32)

    params = (w1, b1, g1, bt1, w2, b2, g2, bt2)

    fwd = jax.jit(encoder_block_forward)
    out = jax.block_until_ready(fwd(x, params))
    ref = jax.block_until_ready(ref_forward(x, params))

    assert out.shape == (N, Cout, H // 2, W // 2), out.shape
    assert jnp.allclose(out, ref, rtol=1e-4, atol=1e-4), float(jnp.max(jnp.abs(out - ref)))

    print("KERNEL_OK")
</pallas_src>

<mosaic_0001>
module attributes {stable_mosaic.version = 11 : i64} {
  func.func @_encoder_block_kernel(%arg0: i32, %arg1: memref<1x4x400xf32, #tpu.memory_space<vmem>>, %arg2: memref<25x8x4xf32, #tpu.memory_space<vmem>>, %arg3: memref<8x1xf32, #tpu.memory_space<vmem>>, %arg4: memref<8x316xf32, #tpu.memory_space<vmem>>, %arg5: memref<8x316xf32, #tpu.memory_space<vmem>>, %arg6: memref<1x316xf32, #tpu.memory_space<vmem>>, %arg7: memref<316x400xf32, #tpu.memory_space<vmem>>, %arg8: memref<25x8x8xf32, #tpu.memory_space<vmem>>, %arg9: memref<8x1xf32, #tpu.memory_space<vmem>>, %arg10: memref<8x64xf32, #tpu.memory_space<vmem>>, %arg11: memref<8x64xf32, #tpu.memory_space<vmem>>, %arg12: memref<316x64xf32, #tpu.memory_space<vmem>>, %arg13: memref<1x8x64xf32, #tpu.memory_space<vmem>>) attributes {dimension_semantics = [#tpu.dimension_semantics<parallel>], iteration_bounds = array<i64: 2>, scalar_prefetch = 0 : i64, scratch_operands = 0 : i64, tpu.core_type = #tpu.core_type<tc>, window_params = [{transform_indices = @transform_0, window_bounds = array<i64: 1, 4, 400>}, {pipeline_mode = #tpu.pipeline_mode<synchronous>, transform_indices = @transform_1, window_bounds = array<i64: 25, 8, 4>}, {pipeline_mode = #tpu.pipeline_mode<synchronous>, transform_indices = @transform_2, window_bounds = array<i64: 8, 1>}, {pipeline_mode = #tpu.pipeline_mode<synchronous>, transform_indices = @transform_3, window_bounds = array<i64: 8, 316>}, {pipeline_mode = #tpu.pipeline_mode<synchronous>, transform_indices = @transform_4, window_bounds = array<i64: 8, 316>}, {pipeline_mode = #tpu.pipeline_mode<synchronous>, transform_indices = @transform_5, window_bounds = array<i64: 1, 316>}, {pipeline_mode = #tpu.pipeline_mode<synchronous>, transform_indices = @transform_6, window_bounds = array<i64: 316, 400>}, {pipeline_mode = #tpu.pipeline_mode<synchronous>, transform_indices = @transform_7, window_bounds = array<i64: 25, 8, 8>}, {pipeline_mode = #tpu.pipeline_mode<synchronous>, transform_indices = @transform_8, window_bounds = array<i64: 8, 1>}, {pipeline_mode = #tpu.pipeline_mode<synchronous>, transform_indices = @transform_9, window_bounds = array<i64: 8, 64>}, {pipeline_mode = #tpu.pipeline_mode<synchronous>, transform_indices = @transform_10, window_bounds = array<i64: 8, 64>}, {pipeline_mode = #tpu.pipeline_mode<synchronous>, transform_indices = @transform_11, window_bounds = array<i64: 316, 64>}, {transform_indices = @transform_12, window_bounds = array<i64: 1, 8, 64>}]} {
    %c0 = arith.constant 0 : index
    %c0_0 = arith.constant 0 : index
    %c0_1 = arith.constant 0 : index
    %0 = vector.load %arg1[%c0, %c0_0, %c0_1] : memref<1x4x400xf32, #tpu.memory_space<vmem>>, vector<1x4x400xf32>
    %1 = vector.shape_cast %0 : vector<1x4x400xf32> to vector<4x400xf32>
    %cst = arith.constant 0.000000e+00 : f32
    %2 = vector.broadcast %cst : f32 to vector<8x316xf32>
    %c0_2 = arith.constant 0 : index
    %c0_3 = arith.constant 0 : index
    %c0_4 = arith.constant 0 : index
    %3 = vector.load %arg2[%c0_2, %c0_3, %c0_4] : memref<25x8x4xf32, #tpu.memory_space<vmem>>, vector<1x8x4xf32>
    %4 = vector.shape_cast %3 : vector<1x8x4xf32> to vector<8x4xf32>
    %5 = vector.extract_strided_slice %1 {offsets = [0, 0], sizes = [4, 316], strides = [1, 1]} : vector<4x400xf32> to vector<4x316xf32>
    %cst_5 = arith.constant dense<0.000000e+00> : vector<8x316xf32>
    %6 = tpu.matmul %4, %5, %cst_5 {dimension_numbers = #tpu.dot_dimension_numbers<[1], [0], [0], [1], [0, 0, 1, 1], [], []>} : vector<8x4xf32>, vector<4x316xf32>, vector<8x316xf32> -> vector<8x316xf32>
    %7 = arith.addf %2, %6 : vector<8x316xf32>
    %c1 = arith.constant 1 : index
    %c0_6 = arith.constant 0 : index
    %c0_7 = arith.constant 0 : index
    %8 = vector.load %arg2[%c1, %c0_6, %c0_7] : memref<25x8x4xf32, #tpu.memory_space<vmem>>, vector<1x8x4xf32>
    %9 = vector.shape_cast %8 : vector<1x8x4xf32> to vector<8x4xf32>
    %10 = vector.extract_strided_slice %1 {offsets = [0, 1], sizes = [4, 316], strides = [1, 1]} : vector<4x400xf32> to vector<4x316xf32>
    %cst_8 = arith.constant dense<0.000000e+00> : vector<8x316xf32>
    %11 = tpu.matmul %9, %10, %cst_8 {dimension_numbers = #tpu.dot_dimension_numbers<[1], [0], [0], [1], [0, 0, 1, 1], [], []>} : vector<8x4xf32>, vector<4x316xf32>, vector<8x316xf32> -> vector<8x316xf32>
    %12 = arith.addf %7, %11 : vector<8x316xf32>
    %c2 = arith.constant 2 : index
    %c0_9 = arith.constant 0 : index
    %c0_10 = arith.constant 0 : index
    %13 = vector.load %arg2[%c2, %c0_9, %c0_10] : memref<25x8x4xf32, #tpu.memory_space<vmem>>, vector<1x8x4xf32>
    %14 = vector.shape_cast %13 : vector<1x8x4xf32> to vector<8x4xf32>
    %15 = vector.extract_strided_slice %1 {offsets = [0, 2], sizes = [4, 316], strides = [1, 1]} : vector<4x400xf32> to vector<4x316xf32>
    %cst_11 = arith.constant dense<0.000000e+00> : vector<8x316xf32>
    %16 = tpu.matmul %14, %15, %cst_11 {dimension_numbers = #tpu.dot_dimension_numbers<[1], [0], [0], [1], [0, 0, 1, 1], [], []>} : vector<8x4xf32>, vector<4x316xf32>, vector<8x316xf32> -> vector<8x316xf32>
    %17 = arith.addf %12, %16 : vector<8x316xf32>
    %c3 = arith.constant 3 : index
    %c0_12 = arith.constant 0 : index
    %c0_13 = arith.constant 0 : index
    %18 = vector.load %arg2[%c3, %c0_12, %c0_13] : memref<25x8x4xf32, #tpu.memory_space<vmem>>, vector<1x8x4xf32>
    %19 = vector.shape_cast %18 : vector<1x8x4xf32> to vector<8x4xf32>
    %20 = vector.extract_strided_slice %1 {offsets = [0, 3], sizes = [4, 316], strides = [1, 1]} : vector<4x400xf32> to vector<4x316xf32>
    %cst_14 = arith.constant dense<0.000000e+00> : vector<8x316xf32>
    %21 = tpu.matmul %19, %20, %cst_14 {dimension_numbers = #tpu.dot_dimension_numbers<[1], [0], [0], [1], [0, 0, 1, 1], [], []>} : vector<8x4xf32>, vector<4x316xf32>, vector<8x316xf32> -> vector<8x316xf32>
    %22 = arith.addf %17, %21 : vector<8x316xf32>
    %c4 = arith.constant 4 : index
    %c0_15 = arith.constant 0 : index
    %c0_16 = arith.constant 0 : index
    %23 = vector.load %arg2[%c4, %c0_15, %c0_16] : memref<25x8x4xf32, #tpu.memory_space<vmem>>, vector<1x8x4xf32>
    %24 = vector.shape_cast %23 : vector<1x8x4xf32> to vector<8x4xf32>
    %25 = vector.extract_strided_slice %1 {offsets = [0, 4], sizes = [4, 316], strides = [1, 1]} : vector<4x400xf32> to vector<4x316xf32>
    %cst_17 = arith.constant dense<0.000000e+00> : vector<8x316xf32>
    %26 = tpu.matmul %24, %25, %cst_17 {dimension_numbers = #tpu.dot_dimension_numbers<[1], [0], [0], [1], [0, 0, 1, 1], [], []>} : vector<8x4xf32>, vector<4x316xf32>, vector<8x316xf32> -> vector<8x316xf32>
    %27 = arith.addf %22, %26 : vector<8x316xf32>
    %c5 = arith.constant 5 : index
    %c0_18 = arith.constant 0 : index
    %c0_19 = arith.constant 0 : index
    %28 = vector.load %arg2[%c5, %c0_18, %c0_19] : memref<25x8x4xf32, #tpu.memory_space<vmem>>, vector<1x8x4xf32>
    %29 = vector.shape_cast %28 : vector<1x8x4xf32> to vector<8x4xf32>
    %30 = vector.extract_strided_slice %1 {offsets = [0, 20], sizes = [4, 316], strides = [1, 1]} : vector<4x400xf32> to vector<4x316xf32>
    %cst_20 = arith.constant dense<0.000000e+00> : vector<8x316xf32>
    %31 = tpu.matmul %29, %30, %cst_20 {dimension_numbers = #tpu.dot_dimension_numbers<[1], [0], [0], [1], [0, 0, 1, 1], [], []>} : vector<8x4xf32>, vector<4x316xf32>, vector<8x316xf32> -> vector<8x316xf32>
    %32 = arith.addf %27, %31 : vector<8x316xf32>
    %c6 = arith.constant 6 : index
    %c0_21 = arith.constant 0 : index
    %c0_22 = arith.constant 0 : index
    %33 = vector.load %arg2[%c6, %c0_21, %c0_22] : memref<25x8x4xf32, #tpu.memory_space<vmem>>, vector<1x8x4xf32>
    %34 = vector.shape_cast %33 : vector<1x8x4xf32> to vector<8x4xf32>
    %35 = vector.extract_strided_slice %1 {offsets = [0, 21], sizes = [4, 316], strides = [1, 1]} : vector<4x400xf32> to vector<4x316xf32>
    %cst_23 = arith.constant dense<0.000000e+00> : vector<8x316xf32>
    %36 = tpu.matmul %34, %35, %cst_23 {dimension_numbers = #tpu.dot_dimension_numbers<[1], [0], [0], [1], [0, 0, 1, 1], [], []>} : vector<8x4xf32>, vector<4x316xf32>, vector<8x316xf32> -> vector<8x316xf32>
    %37 = arith.addf %32, %36 : vector<8x316xf32>
    %c7 = arith.constant 7 : index
    %c0_24 = arith.constant 0 : index
    %c0_25 = arith.constant 0 : index
    %38 = vector.load %arg2[%c7, %c0_24, %c0_25] : memref<25x8x4xf32, #tpu.memory_space<vmem>>, vector<1x8x4xf32>
    %39 = vector.shape_cast %38 : vector<1x8x4xf32> to vector<8x4xf32>
    %40 = vector.extract_strided_slice %1 {offsets = [0, 22], sizes = [4, 316], strides = [1, 1]} : vector<4x400xf32> to vector<4x316xf32>
    %cst_26 = arith.constant dense<0.000000e+00> : vector<8x316xf32>
    %41 = tpu.matmul %39, %40, %cst_26 {dimension_numbers = #tpu.dot_dimension_numbers<[1], [0], [0], [1], [0, 0, 1, 1], [], []>} : vector<8x4xf32>, vector<4x316xf32>, vector<8x316xf32> -> vector<8x316xf32>
    %42 = arith.addf %37, %41 : vector<8x316xf32>
    %c8 = arith.constant 8 : index
    %c0_27 = arith.constant 0 : index
    %c0_28 = arith.constant 0 : index
    %43 = vector.load %arg2[%c8, %c0_27, %c0_28] : memref<25x8x4xf32, #tpu.memory_space<vmem>>, vector<1x8x4xf32>
    %44 = vector.shape_cast %43 : vector<1x8x4xf32> to vector<8x4xf32>
    %45 = vector.extract_strided_slice %1 {offsets = [0, 23], sizes = [4, 316], strides = [1, 1]} : vector<4x400xf32> to vector<4x316xf32>
    %cst_29 = arith.constant dense<0.000000e+00> : vector<8x316xf32>
    %46 = tpu.matmul %44, %45, %cst_29 {dimension_numbers = #tpu.dot_dimension_numbers<[1], [0], [0], [1], [0, 0, 1, 1], [], []>} : vector<8x4xf32>, vector<4x316xf32>, vector<8x316xf32> -> vector<8x316xf32>
    %47 = arith.addf %42, %46 : vector<8x316xf32>
    %c9 = arith.constant 9 : index
    %c0_30 = arith.constant 0 : index
    %c0_31 = arith.constant 0 : index
    %48 = vector.load %arg2[%c9, %c0_30, %c0_31] : memref<25x8x4xf32, #tpu.memory_space<vmem>>, vector<1x8x4xf32>
    %49 = vector.shape_cast %48 : vector<1x8x4xf32> to vector<8x4xf32>
    %50 = vector.extract_strided_slice %1 {offsets = [0, 24], sizes = [4, 316], strides = [1, 1]} : vector<4x400xf32> to vector<4x316xf32>
    %cst_32 = arith.constant dense<0.000000e+00> : vector<8x316xf32>
    %51 = tpu.matmul %49, %50, %cst_32 {dimension_numbers = #tpu.dot_dimension_numbers<[1], [0], [0], [1], [0, 0, 1, 1], [], []>} : vector<8x4xf32>, vector<4x316xf32>, vector<8x316xf32> -> vector<8x316xf32>
    %52 = arith.addf %47, %51 : vector<8x316xf32>
    %c10 = arith.constant 10 : index
    %c0_33 = arith.constant 0 : index
    %c0_34 = arith.constant 0 : index
    %53 = vector.load %arg2[%c10, %c0_33, %c0_34] : memref<25x8x4xf32, #tpu.memory_space<vmem>>, vector<1x8x4xf32>
    %54 = vector.shape_cast %53 : vector<1x8x4xf32> to vector<8x4xf32>
    %55 = vector.extract_strided_slice %1 {offsets = [0, 40], sizes = [4, 316], strides = [1, 1]} : vector<4x400xf32> to vector<4x316xf32>
    %cst_35 = arith.constant dense<0.000000e+00> : vector<8x316xf32>
    %56 = tpu.matmul %54, %55, %cst_35 {dimension_numbers = #tpu.dot_dimension_numbers<[1], [0], [0], [1], [0, 0, 1, 1], [], []>} : vector<8x4xf32>, vector<4x316xf32>, vector<8x316xf32> -> vector<8x316xf32>
    %57 = arith.addf %52, %56 : vector<8x316xf32>
    %c11 = arith.constant 11 : index
    %c0_36 = arith.constant 0 : index
    %c0_37 = arith.constant 0 : index
    %58 = vector.load %arg2[%c11, %c0_36, %c0_37] : memref<25x8x4xf32, #tpu.memory_space<vmem>>, vector<1x8x4xf32>
    %59 = vector.shape_cast %58 : vector<1x8x4xf32> to vector<8x4xf32>
    %60 = vector.extract_strided_slice %1 {offsets = [0, 41], sizes = [4, 316], strides = [1, 1]} : vector<4x400xf32> to vector<4x316xf32>
    %cst_38 = arith.constant dense<0.000000e+00> : vector<8x316xf32>
    %61 = tpu.matmul %59, %60, %cst_38 {dimension_numbers = #tpu.dot_dimension_numbers<[1], [0], [0], [1], [0, 0, 1, 1], [], []>} : vector<8x4xf32>, vector<4x316xf32>, vector<8x316xf32> -> vector<8x316xf32>
    %62 = arith.addf %57, %61 : vector<8x316xf32>
    %c12 = arith.constant 12 : index
    %c0_39 = arith.constant 0 : index
    %c0_40 = arith.constant 0 : index
    %63 = vector.load %arg2[%c12, %c0_39, %c0_40] : memref<25x8x4xf32, #tpu.memory_space<vmem>>, vector<1x8x4xf32>
    %64 = vector.shape_cast %63 : vector<1x8x4xf32> to vector<8x4xf32>
    %65 = vector.extract_strided_slice %1 {offsets = [0, 42], sizes = [4, 316], strides = [1, 1]} : vector<4x400xf32> to vector<4x316xf32>
    %cst_41 = arith.constant dense<0.000000e+00> : vector<8x316xf32>
    %66 = tpu.matmul %64, %65, %cst_41 {dimension_numbers = #tpu.dot_dimension_numbers<[1], [0], [0], [1], [0, 0, 1, 1], [], []>} : vector<8x4xf32>, vector<4x316xf32>, vector<8x316xf32> -> vector<8x316xf32>
    %67 = arith.addf %62, %66 : vector<8x316xf32>
    %c13 = arith.constant 13 : index
    %c0_42 = arith.constant 0 : index
    %c0_43 = arith.constant 0 : index
    %68 = vector.load %arg2[%c13, %c0_42, %c0_43] : memref<25x8x4xf32, #tpu.memory_space<vmem>>, vector<1x8x4xf32>
    %69 = vector.shape_cast %68 : vector<1x8x4xf32> to vector<8x4xf32>
    %70 = vector.extract_strided_slice %1 {offsets = [0, 43], sizes = [4, 316], strides = [1, 1]} : vector<4x400xf32> to vector<4x316xf32>
    %cst_44 = arith.constant dense<0.000000e+00> : vector<8x316xf32>
    %71 = tpu.matmul %69, %70, %cst_44 {dimension_numbers = #tpu.dot_dimension_numbers<[1], [0], [0], [1], [0, 0, 1, 1], [], []>} : vector<8x4xf32>, vector<4x316xf32>, vector<8x316xf32> -> vector<8x316xf32>
    %72 = arith.addf %67, %71 : vector<8x316xf32>
    %c14 = arith.constant 14 : index
    %c0_45 = arith.constant 0 : index
    %c0_46 = arith.constant 0 : index
    %73 = vector.load %arg2[%c14, %c0_45, %c0_46] : memref<25x8x4xf32, #tpu.memory_space<vmem>>, vector<1x8x4xf32>
    %74 = vector.shape_cast %73 : vector<1x8x4xf32> to vector<8x4xf32>
    %75 = vector.extract_strided_slice %1 {offsets = [0, 44], sizes = [4, 316], strides = [1, 1]} : vector<4x400xf32> to vector<4x316xf32>
    %cst_47 = arith.constant dense<0.000000e+00> : vector<8x316xf32>
    %76 = tpu.matmul %74, %75, %cst_47 {dimension_numbers = #tpu.dot_dimension_numbers<[1], [0], [0], [1], [0, 0, 1, 1], [], []>} : vector<8x4xf32>, vector<4x316xf32>, vector<8x316xf32> -> vector<8x316xf32>
    %77 = arith.addf %72, %76 : vector<8x316xf32>
    %c15 = arith.constant 15 : index
    %c0_48 = arith.constant 0 : index
    %c0_49 = arith.constant 0 : index
    %78 = vector.load %arg2[%c15, %c0_48, %c0_49] : memref<25x8x4xf32, #tpu.memory_space<vmem>>, vector<1x8x4xf32>
    %79 = vector.shape_cast %78 : vector<1x8x4xf32> to vector<8x4xf32>
    %80 = vector.extract_strided_slice %1 {offsets = [0, 60], sizes = [4, 316], strides = [1, 1]} : vector<4x400xf32> to vector<4x316xf32>
    %cst_50 = arith.constant dense<0.000000e+00> : vector<8x316xf32>
    %81 = tpu.matmul %79, %80, %cst_50 {dimension_numbers = #tpu.dot_dimension_numbers<[1], [0], [0], [1], [0, 0, 1, 1], [], []>} : vector<8x4xf32>, vector<4x316xf32>, vector<8x316xf32> -> vector<8x316xf32>
    %82 = arith.addf %77, %81 : vector<8x316xf32>
    %c16 = arith.constant 16 : index
    %c0_51 = arith.constant 0 : index
    %c0_52 = arith.constant 0 : index
    %83 = vector.load %arg2[%c16, %c0_51, %c0_52] : memref<25x8x4xf32, #tpu.memory_space<vmem>>, vector<1x8x4xf32>
    %84 = vector.shape_cast %83 : vector<1x8x4xf32> to vector<8x4xf32>
    %85 = vector.extract_strided_slice %1 {offsets = [0, 61], sizes = [4, 316], strides = [1, 1]} : vector<4x400xf32> to vector<4x316xf32>
    %cst_53 = arith.constant dense<0.000000e+00> : vector<8x316xf32>
    %86 = tpu.matmul %84, %85, %cst_53 {dimension_numbers = #tpu.dot_dimension_numbers<[1], [0], [0], [1], [0, 0, 1, 1], [], []>} : vector<8x4xf32>, vector<4x316xf32>, vector<8x316xf32> -> vector<8x316xf32>
    %87 = arith.addf %82, %86 : vector<8x316xf32>
    %c17 = arith.constant 17 : index
    %c0_54 = arith.constant 0 : index
    %c0_55 = arith.constant 0 : index
    %88 = vector.load %arg2[%c17, %c0_54, %c0_55] : memref<25x8x4xf32, #tpu.memory_space<vmem>>, vector<1x8x4xf32>
    %89 = vector.shape_cast %88 : vector<1x8x4xf32> to vector<8x4xf32>
    %90 = vector.extract_strided_slice %1 {offsets = [0, 62], sizes = [4, 316], strides = [1, 1]} : vector<4x400xf32> to vector<4x316xf32>
    %cst_56 = arith.constant dense<0.000000e+00> : vector<8x316xf32>
    %91 = tpu.matmul %89, %90, %cst_56 {dimension_numbers = #tpu.dot_dimension_numbers<[1], [0], [0], [1], [0, 0, 1, 1], [], []>} : vector<8x4xf32>, vector<4x316xf32>, vector<8x316xf32> -> vector<8x316xf32>
    %92 = arith.addf %87, %91 : vector<8x316xf32>
    %c18 = arith.constant 18 : index
    %c0_57 = arith.constant 0 : index
    %c0_58 = arith.constant 0 : index
    %93 = vector.load %arg2[%c18, %c0_57, %c0_58] : memref<25x8x4xf32, #tpu.memory_space<vmem>>, vector<1x8x4xf32>
    %94 = vector.shape_cast %93 : vector<1x8x4xf32> to vector<8x4xf32>
    %95 = vector.extract_strided_slice %1 {offsets = [0, 63], sizes = [4, 316], strides = [1, 1]} : vector<4x400xf32> to vector<4x316xf32>
    %cst_59 = arith.constant dense<0.000000e+00> : vector<8x316xf32>
    %96 = tpu.matmul %94, %95, %cst_59 {dimension_numbers = #tpu.dot_dimension_numbers<[1], [0], [0], [1], [0, 0, 1, 1], [], []>} : vector<8x4xf32>, vector<4x316xf32>, vector<8x316xf32> -> vector<8x316xf32>
    %97 = arith.addf %92, %96 : vector<8x316xf32>
    %c19 = arith.constant 19 : index
    %c0_60 = arith.constant 0 : index
    %c0_61 = arith.constant 0 : index
    %98 = vector.load %arg2[%c19, %c0_60, %c0_61] : memref<25x8x4xf32, #tpu.memory_space<vmem>>, vector<1x8x4xf32>
    %99 = vector.shape_cast %98 : vector<1x8x4xf32> to vector<8x4xf32>
    %100 = vector.extract_strided_slice %1 {offsets = [0, 64], sizes = [4, 316], strides = [1, 1]} : vector<4x400xf32> to vector<4x316xf32>
    %cst_62 = arith.constant dense<0.000000e+00> : vector<8x316xf32>
    %101 = tpu.matmul %99, %100, %cst_62 {dimension_numbers = #tpu.dot_dimension_numbers<[1], [0], [0], [1], [0, 0, 1, 1], [], []>} : vector<8x4xf32>, vector<4x316xf32>, vector<8x316xf32> -> vector<8x316xf32>
    %102 = arith.addf %97, %101 : vector<8x316xf32>
    %c20 = arith.constant 20 : index
    %c0_63 = arith.constant 0 : index
    %c0_64 = arith.constant 0 : index
    %103 = vector.load %arg2[%c20, %c0_63, %c0_64] : memref<25x8x4xf32, #tpu.memory_space<vmem>>, vector<1x8x4xf32>
    %104 = vector.shape_cast %103 : vector<1x8x4xf32> to vector<8x4xf32>
    %105 = vector.extract_strided_slice %1 {offsets = [0, 80], sizes = [4, 316], strides = [1, 1]} : vector<4x400xf32> to vector<4x316xf32>
    %cst_65 = arith.constant dense<0.000000e+00> : vector<8x316xf32>
    %106 = tpu.matmul %104, %105, %cst_65 {dimension_numbers = #tpu.dot_dimension_numbers<[1], [0], [0], [1], [0, 0, 1, 1], [], []>} : vector<8x4xf32>, vector<4x316xf32>, vector<8x316xf32> -> vector<8x316xf32>
    %107 = arith.addf %102, %106 : vector<8x316xf32>
    %c21 = arith.constant 21 : index
    %c0_66 = arith.constant 0 : index
    %c0_67 = arith.constant 0 : index
    %108 = vector.load %arg2[%c21, %c0_66, %c0_67] : memref<25x8x4xf32, #tpu.memory_space<vmem>>, vector<1x8x4xf32>
    %109 = vector.shape_cast %108 : vector<1x8x4xf32> to vector<8x4xf32>
    %110 = vector.extract_strided_slice %1 {offsets = [0, 81], sizes = [4, 316], strides = [1, 1]} : vector<4x400xf32> to vector<4x316xf32>
    %cst_68 = arith.constant dense<0.000000e+00> : vector<8x316xf32>
    %111 = tpu.matmul %109, %110, %cst_68 {dimension_numbers = #tpu.dot_dimension_numbers<[1], [0], [0], [1], [0, 0, 1, 1], [], []>} : vector<8x4xf32>, vector<4x316xf32>, vector<8x316xf32> -> vector<8x316xf32>
    %112 = arith.addf %107, %111 : vector<8x316xf32>
    %c22 = arith.constant 22 : index
    %c0_69 = arith.constant 0 : index
    %c0_70 = arith.constant 0 : index
    %113 = vector.load %arg2[%c22, %c0_69, %c0_70] : memref<25x8x4xf32, #tpu.memory_space<vmem>>, vector<1x8x4xf32>
    %114 = vector.shape_cast %113 : vector<1x8x4xf32> to vector<8x4xf32>
    %115 = vector.extract_strided_slice %1 {offsets = [0, 82], sizes = [4, 316], strides = [1, 1]} : vector<4x400xf32> to vector<4x316xf32>
    %cst_71 = arith.constant dense<0.000000e+00> : vector<8x316xf32>
    %116 = tpu.matmul %114, %115, %cst_71 {dimension_numbers = #tpu.dot_dimension_numbers<[1], [0], [0], [1], [0, 0, 1, 1], [], []>} : vector<8x4xf32>, vector<4x316xf32>, vector<8x316xf32> -> vector<8x316xf32>
    %117 = arith.addf %112, %116 : vector<8x316xf32>
    %c23 = arith.constant 23 : index
    %c0_72 = arith.constant 0 : index
    %c0_73 = arith.constant 0 : index
    %118 = vector.load %arg2[%c23, %c0_72, %c0_73] : memref<25x8x4xf32, #tpu.memory_space<vmem>>, vector<1x8x4xf32>
    %119 = vector.shape_cast %118 : vector<1x8x4xf32> to vector<8x4xf32>
    %120 = vector.extract_strided_slice %1 {offsets = [0, 83], sizes = [4, 316], strides = [1, 1]} : vector<4x400xf32> to vector<4x316xf32>
    %cst_74 = arith.constant dense<0.000000e+00> : vector<8x316xf32>
    %121 = tpu.matmul %119, %120, %cst_74 {dimension_numbers = #tpu.dot_dimension_numbers<[1], [0], [0], [1], [0, 0, 1, 1], [], []>} : vector<8x4xf32>, vector<4x316xf32>, vector<8x316xf32> -> vector<8x316xf32>
    %122 = arith.addf %117, %121 : vector<8x316xf32>
    %c24 = arith.constant 24 : index
    %c0_75 = arith.constant 0 : index
    %c0_76 = arith.constant 0 : index
    %123 = vector.load %arg2[%c24, %c0_75, %c0_76] : memref<25x8x4xf32, #tpu.memory_space<vmem>>, vector<1x8x4xf32>
    %124 = vector.shape_cast %123 : vector<1x8x4xf32> to vector<8x4xf32>
    %125 = vector.extract_strided_slice %1 {offsets = [0, 84], sizes = [4, 316], strides = [1, 1]} : vector<4x400xf32> to vector<4x316xf32>
    %cst_77 = arith.constant dense<0.000000e+00> : vector<8x316xf32>
    %126 = tpu.matmul %124, %125, %cst_77 {dimension_numbers = #tpu.dot_dimension_numbers<[1], [0], [0], [1], [0, 0, 1, 1], [], []>} : vector<8x4xf32>, vector<4x316xf32>, vector<8x316xf32> -> vector<8x316xf32>
    %127 = arith.addf %122, %126 : vector<8x316xf32>
    %c0_78 = arith.constant 0 : index
    %c0_79 = arith.constant 0 : index
    %128 = vector.load %arg3[%c0_78, %c0_79] : memref<8x1xf32, #tpu.memory_space<vmem>>, vector<8x1xf32>
    %129 = vector.broadcast %128 : vector<8x1xf32> to vector<8x316xf32>
    %130 = arith.addf %127, %129 : vector<8x316xf32>
    %c0_80 = arith.constant 0 : index
    %c0_81 = arith.constant 0 : index
    %131 = vector.load %arg6[%c0_80, %c0_81] : memref<1x316xf32, #tpu.memory_space<vmem>>, vector<1x316xf32>
    %132 = vector.broadcast %131 : vector<1x316xf32> to vector<8x316xf32>
    %133 = arith.mulf %130, %132 : vector<8x316xf32>
    %134 = vector.shape_cast %133 : vector<8x316xf32> to vector<1x8x316xf32>
    %cst_82 = arith.constant dense<0.000000e+00> : vector<1xf32>
    %135 = vector.multi_reduction <add>, %134, %cst_82 [1, 2] : vector<1x8x316xf32> to vector<1xf32>
    %136 = vector.shape_cast %135 : vector<1xf32> to vector<1x1x1xf32>
    %137 = vector.extract %136[0, 0, 0] : f32 from vector<1x1x1xf32>
    %cst_83 = arith.constant 4.8828125E-4 : f32
    %138 = arith.mulf %137, %cst_83 : f32
    %139 = arith.mulf %133, %130 : vector<8x316xf32>
    %140 = vector.shape_cast %139 : vector<8x316xf32> to vector<1x8x316xf32>
    %cst_84 = arith.constant dense<0.000000e+00> : vector<1xf32>
    %141 = vector.multi_reduction <add>, %140, %cst_84 [1, 2] : vector<1x8x316xf32> to vector<1xf32>
    %142 = vector.shape_cast %141 : vector<1xf32> to vector<1x1x1xf32>
    %143 = vector.extract %142[0, 0, 0] : f32 from vector<1x1x1xf32>
    %cst_85 = arith.constant 4.8828125E-4 : f32
    %144 = arith.mulf %143, %cst_85 : f32
    %145 = arith.mulf %138, %138 : f32
    %146 = arith.subf %144, %145 : f32
    %147 = vector.broadcast %138 : f32 to vector<8x316xf32>
    %148 = arith.subf %130, %147 : vector<8x316xf32>
    %cst_86 = arith.constant 9.99999974E-6 : f32
    %149 = arith.addf %146, %cst_86 : f32
    %150 = math.rsqrt %149 : f32
    %151 = vector.broadcast %150 : f32 to vector<8x316xf32>
    %152 = arith.mulf %148, %151 : vector<8x316xf32>
    %c0_87 = arith.constant 0 : index
    %c0_88 = arith.constant 0 : index
    %153 = vector.load %arg4[%c0_87, %c0_88] : memref<8x316xf32, #tpu.memory_space<vmem>>, vector<8x316xf32>
    %154 = arith.mulf %152, %153 : vector<8x316xf32>
    %c0_89 = arith.constant 0 : index
    %c0_90 = arith.constant 0 : index
    %155 = vector.load %arg5[%c0_89, %c0_90] : memref<8x316xf32, #tpu.memory_space<vmem>>, vector<8x316xf32>
    %156 = arith.addf %154, %155 : vector<8x316xf32>
    %cst_91 = arith.constant 0.000000e+00 : f32
    %157 = vector.broadcast %cst_91 : f32 to vector<8x316xf32>
    %158 = arith.maximumf %156, %157 : vector<8x316xf32>
    %c0_92 = arith.constant 0 : index
    %c0_93 = arith.constant 0 : index
    %159 = vector.load %arg7[%c0_92, %c0_93] : memref<316x400xf32, #tpu.memory_space<vmem>>, vector<316x400xf32>
    %cst_94 = arith.constant dense<0.000000e+00> : vector<8x400xf32>
    %160 = tpu.matmul %158, %159, %cst_94 {dimension_numbers = #tpu.dot_dimension_numbers<[1], [0], [0], [1], [0, 0, 1, 1], [], []>} : vector<8x316xf32>, vector<316x400xf32>, vector<8x400xf32> -> vector<8x400xf32>
    %cst_95 = arith.constant 0.000000e+00 : f32
    %161 = vector.broadcast %cst_95 : f32 to vector<8x316xf32>
    %c0_96 = arith.constant 0 : index
    %c0_97 = arith.constant 0 : index
    %c0_98 = arith.constant 0 : index
    %162 = vector.load %arg8[%c0_96, %c0_97, %c0_98] : memref<25x8x8xf32, #tpu.memory_space<vmem>>, vector<1x8x8xf32>
    %163 = vector.shape_cast %162 : vector<1x8x8xf32> to vector<8x8xf32>
    %164 = vector.extract_strided_slice %160 {offsets = [0, 0], sizes = [8, 316], strides = [1, 1]} : vector<8x400xf32> to vector<8x316xf32>
    %cst_99 = arith.constant dense<0.000000e+00> : vector<8x316xf32>
    %165 = tpu.matmul %163, %164, %cst_99 {dimension_numbers = #tpu.dot_dimension_numbers<[1], [0], [0], [1], [0, 0, 1, 1], [], []>} : vector<8x8xf32>, vector<8x316xf32>, vector<8x316xf32> -> vector<8x316xf32>
    %166 = arith.addf %161, %165 : vector<8x316xf32>
    %c1_100 = arith.constant 1 : index
    %c0_101 = arith.constant 0 : index
    %c0_102 = arith.constant 0 : index
    %167 = vector.load %arg8[%c1_100, %c0_101, %c0_102] : memref<25x8x8xf32, #tpu.memory_space<vmem>>, vector<1x8x8xf32>
    %168 = vector.shape_cast %167 : vector<1x8x8xf32> to vector<8x8xf32>
    %169 = vector.extract_strided_slice %160 {offsets = [0, 1], sizes = [8, 316], strides = [1, 1]} : vector<8x400xf32> to vector<8x316xf32>
    %cst_103 = arith.constant dense<0.000000e+00> : vector<8x316xf32>
    %170 = tpu.matmul %168, %169, %cst_103 {dimension_numbers = #tpu.dot_dimension_numbers<[1], [0], [0], [1], [0, 0, 1, 1], [], []>} : vector<8x8xf32>, vector<8x316xf32>, vector<8x316xf32> -> vector<8x316xf32>
    %171 = arith.addf %166, %170 : vector<8x316xf32>
    %c2_104 = arith.constant 2 : index
    %c0_105 = arith.constant 0 : index
    %c0_106 = arith.constant 0 : index
    %172 = vector.load %arg8[%c2_104, %c0_105, %c0_106] : memref<25x8x8xf32, #tpu.memory_space<vmem>>, vector<1x8x8xf32>
    %173 = vector.shape_cast %172 : vector<1x8x8xf32> to vector<8x8xf32>
    %174 = vector.extract_strided_slice %160 {offsets = [0, 2], sizes = [8, 316], strides = [1, 1]} : vector<8x400xf32> to vector<8x316xf32>
    %cst_107 = arith.constant dense<0.000000e+00> : vector<8x316xf32>
    %175 = tpu.matmul %173, %174, %cst_107 {dimension_numbers = #tpu.dot_dimension_numbers<[1], [0], [0], [1], [0, 0, 1, 1], [], []>} : vector<8x8xf32>, vector<8x316xf32>, vector<8x316xf32> -> vector<8x316xf32>
    %176 = arith.addf %171, %175 : vector<8x316xf32>
    %c3_108 = arith.constant 3 : index
    %c0_109 = arith.constant 0 : index
    %c0_110 = arith.constant 0 : index
    %177 = vector.load %arg8[%c3_108, %c0_109, %c0_110] : memref<25x8x8xf32, #tpu.memory_space<vmem>>, vector<1x8x8xf32>
    %178 = vector.shape_cast %177 : vector<1x8x8xf32> to vector<8x8xf32>
    %179 = vector.extract_strided_slice %160 {offsets = [0, 3], sizes = [8, 316], strides = [1, 1]} : vector<8x400xf32> to vector<8x316xf32>
    %cst_111 = arith.constant dense<0.000000e+00> : vector<8x316xf32>
    %180 = tpu.matmul %178, %179, %cst_111 {dimension_numbers = #tpu.dot_dimension_numbers<[1], [0], [0], [1], [0, 0, 1, 1], [], []>} : vector<8x8xf32>, vector<8x316xf32>, vector<8x316xf32> -> vector<8x316xf32>
    %181 = arith.addf %176, %180 : vector<8x316xf32>
    %c4_112 = arith.constant 4 : index
    %c0_113 = arith.constant 0 : index
    %c0_114 = arith.constant 0 : index
    %182 = vector.load %arg8[%c4_112, %c0_113, %c0_114] : memref<25x8x8xf32, #tpu.memory_space<vmem>>, vector<1x8x8xf32>
    %183 = vector.shape_cast %182 : vector<1x8x8xf32> to vector<8x8xf32>
    %184 = vector.extract_strided_slice %160 {offsets = [0, 4], sizes = [8, 316], strides = [1, 1]} : vector<8x400xf32> to vector<8x316xf32>
    %cst_115 = arith.constant dense<0.000000e+00> : vector<8x316xf32>
    %185 = tpu.matmul %183, %184, %cst_115 {dimension_numbers = #tpu.dot_dimension_numbers<[1], [0], [0], [1], [0, 0, 1, 1], [], []>} : vector<8x8xf32>, vector<8x316xf32>, vector<8x316xf32> -> vector<8x316xf32>
    %186 = arith.addf %181, %185 : vector<8x316xf32>
    %c5_116 = arith.constant 5 : index
    %c0_117 = arith.constant 0 : index
    %c0_118 = arith.constant 0 : index
    %187 = vector.load %arg8[%c5_116, %c0_117, %c0_118] : memref<25x8x8xf32, #tpu.memory_space<vmem>>, vector<1x8x8xf32>
    %188 = vector.shape_cast %187 : vector<1x8x8xf32> to vector<8x8xf32>
    %189 = vector.extract_strided_slice %160 {offsets = [0, 20], sizes = [8, 316], strides = [1, 1]} : vector<8x400xf32> to vector<8x316xf32>
    %cst_119 = arith.constant dense<0.000000e+00> : vector<8x316xf32>
    %190 = tpu.matmul %188, %189, %cst_119 {dimension_numbers = #tpu.dot_dimension_numbers<[1], [0], [0], [1], [0, 0, 1, 1], [], []>} : vector<8x8xf32>, vector<8x316xf32>, vector<8x316xf32> -> vector<8x316xf32>
    %191 = arith.addf %186, %190 : vector<8x316xf32>
    %c6_120 = arith.constant 6 : index
    %c0_121 = arith.constant 0 : index
    %c0_122 = arith.constant 0 : index
    %192 = vector.load %arg8[%c6_120, %c0_121, %c0_122] : memref<25x8x8xf32, #tpu.memory_space<vmem>>, vector<1x8x8xf32>
    %193 = vector.shape_cast %192 : vector<1x8x8xf32> to vector<8x8xf32>
    %194 = vector.extract_strided_slice %160 {offsets = [0, 21], sizes = [8, 316], strides = [1, 1]} : vector<8x400xf32> to vector<8x316xf32>
    %cst_123 = arith.constant dense<0.000000e+00> : vector<8x316xf32>
    %195 = tpu.matmul %193, %194, %cst_123 {dimension_numbers = #tpu.dot_dimension_numbers<[1], [0], [0], [1], [0, 0, 1, 1], [], []>} : vector<8x8xf32>, vector<8x316xf32>, vector<8x316xf32> -> vector<8x316xf32>
    %196 = arith.addf %191, %195 : vector<8x316xf32>
    %c7_124 = arith.constant 7 : index
    %c0_125 = arith.constant 0 : index
    %c0_126 = arith.constant 0 : index
    %197 = vector.load %arg8[%c7_124, %c0_125, %c0_126] : memref<25x8x8xf32, #tpu.memory_space<vmem>>, vector<1x8x8xf32>
    %198 = vector.shape_cast %197 : vector<1x8x8xf32> to vector<8x8xf32>
    %199 = vector.extract_strided_slice %160 {offsets = [0, 22], sizes = [8, 316], strides = [1, 1]} : vector<8x400xf32> to vector<8x316xf32>
    %cst_127 = arith.constant dense<0.000000e+00> : vector<8x316xf32>
    %200 = tpu.matmul %198, %199, %cst_127 {dimension_numbers = #tpu.dot_dimension_numbers<[1], [0], [0], [1], [0, 0, 1, 1], [], []>} : vector<8x8xf32>, vector<8x316xf32>, vector<8x316xf32> -> vector<8x316xf32>
    %201 = arith.addf %196, %200 : vector<8x316xf32>
    %c8_128 = arith.constant 8 : index
    %c0_129 = arith.constant 0 : index
    %c0_130 = arith.constant 0 : index
    %202 = vector.load %arg8[%c8_128, %c0_129, %c0_130] : memref<25x8x8xf32, #tpu.memory_space<vmem>>, vector<1x8x8xf32>
    %203 = vector.shape_cast %202 : vector<1x8x8xf32> to vector<8x8xf32>
    %204 = vector.extract_strided_slice %160 {offsets = [0, 23], sizes = [8, 316], strides = [1, 1]} : vector<8x400xf32> to vector<8x316xf32>
    %cst_131 = arith.constant dense<0.000000e+00> : vector<8x316xf32>
    %205 = tpu.matmul %203, %204, %cst_131 {dimension_numbers = #tpu.dot_dimension_numbers<[1], [0], [0], [1], [0, 0, 1, 1], [], []>} : vector<8x8xf32>, vector<8x316xf32>, vector<8x316xf32> -> vector<8x316xf32>
    %206 = arith.addf %201, %205 : vector<8x316xf32>
    %c9_132 = arith.constant 9 : index
    %c0_133 = arith.constant 0 : index
    %c0_134 = arith.constant 0 : index
    %207 = vector.load %arg8[%c9_132, %c0_133, %c0_134] : memref<25x8x8xf32, #tpu.memory_space<vmem>>, vector<1x8x8xf32>
    %208 = vector.shape_cast %207 : vector<1x8x8xf32> to vector<8x8xf32>
    %209 = vector.extract_strided_slice %160 {offsets = [0, 24], sizes = [8, 316], strides = [1, 1]} : vector<8x400xf32> to vector<8x316xf32>
    %cst_135 = arith.constant dense<0.000000e+00> : vector<8x316xf32>
    %210 = tpu.matmul %208, %209, %cst_135 {dimension_numbers = #tpu.dot_dimension_numbers<[1], [0], [0], [1], [0, 0, 1, 1], [], []>} : vector<8x8xf32>, vector<8x316xf32>, vector<8x316xf32> -> vector<8x316xf32>
    %211 = arith.addf %206, %210 : vector<8x316xf32>
    %c10_136 = arith.constant 10 : index
    %c0_137 = arith.constant 0 : index
    %c0_138 = arith.constant 0 : index
    %212 = vector.load %arg8[%c10_136, %c0_137, %c0_138] : memref<25x8x8xf32, #tpu.memory_space<vmem>>, vector<1x8x8xf32>
    %213 = vector.shape_cast %212 : vector<1x8x8xf32> to vector<8x8xf32>
    %214 = vector.extract_strided_slice %160 {offsets = [0, 40], sizes = [8, 316], strides = [1, 1]} : vector<8x400xf32> to vector<8x316xf32>
    %cst_139 = arith.constant dense<0.000000e+00> : vector<8x316xf32>
    %215 = tpu.matmul %213, %214, %cst_139 {dimension_numbers = #tpu.dot_dimension_numbers<[1], [0], [0], [1], [0, 0, 1, 1], [], []>} : vector<8x8xf32>, vector<8x316xf32>, vector<8x316xf32> -> vector<8x316xf32>
    %216 = arith.addf %211, %215 : vector<8x316xf32>
    %c11_140 = arith.constant 11 : index
    %c0_141 = arith.constant 0 : index
    %c0_142 = arith.constant 0 : index
    %217 = vector.load %arg8[%c11_140, %c0_141, %c0_142] : memref<25x8x8xf32, #tpu.memory_space<vmem>>, vector<1x8x8xf32>
    %218 = vector.shape_cast %217 : vector<1x8x8xf32> to vector<8x8xf32>
    %219 = vector.extract_strided_slice %160 {offsets = [0, 41], sizes = [8, 316], strides = [1, 1]} : vector<8x400xf32> to vector<8x316xf32>
    %cst_143 = arith.constant dense<0.000000e+00> : vector<8x316xf32>
    %220 = tpu.matmul %218, %219, %cst_143 {dimension_numbers = #tpu.dot_dimension_numbers<[1], [0], [0], [1], [0, 0, 1, 1], [], []>} : vector<8x8xf32>, vector<8x316xf32>, vector<8x316xf32> -> vector<8x316xf32>
    %221 = arith.addf %216, %220 : vector<8x316xf32>
    %c12_144 = arith.constant 12 : index
    %c0_145 = arith.constant 0 : index
    %c0_146 = arith.constant 0 : index
    %222 = vector.load %arg8[%c12_144, %c0_145, %c0_146] : memref<25x8x8xf32, #tpu.memory_space<vmem>>, vector<1x8x8xf32>
    %223 = vector.shape_cast %222 : vector<1x8x8xf32> to vector<8x8xf32>
    %224 = vector.extract_strided_slice %160 {offsets = [0, 42], sizes = [8, 316], strides = [1, 1]} : vector<8x400xf32> to vector<8x316xf32>
    %cst_147 = arith.constant dense<0.000000e+00> : vector<8x316xf32>
    %225 = tpu.matmul %223, %224, %cst_147 {dimension_numbers = #tpu.dot_dimension_numbers<[1], [0], [0], [1], [0, 0, 1, 1], [], []>} : vector<8x8xf32>, vector<8x316xf32>, vector<8x316xf32> -> vector<8x316xf32>
    %226 = arith.addf %221, %225 : vector<8x316xf32>
    %c13_148 = arith.constant 13 : index
    %c0_149 = arith.constant 0 : index
    %c0_150 = arith.constant 0 : index
    %227 = vector.load %arg8[%c13_148, %c0_149, %c0_150] : memref<25x8x8xf32, #tpu.memory_space<vmem>>, vector<1x8x8xf32>
    %228 = vector.shape_cast %227 : vector<1x8x8xf32> to vector<8x8xf32>
    %229 = vector.extract_strided_slice %160 {offsets = [0, 43], sizes = [8, 316], strides = [1, 1]} : vector<8x400xf32> to vector<8x316xf32>
    %cst_151 = arith.constant dense<0.000000e+00> : vector<8x316xf32>
    %230 = tpu.matmul %228, %229, %cst_151 {dimension_numbers = #tpu.dot_dimension_numbers<[1], [0], [0], [1], [0, 0, 1, 1], [], []>} : vector<8x8xf32>, vector<8x316xf32>, vector<8x316xf32> -> vector<8x316xf32>
    %231 = arith.addf %226, %230 : vector<8x316xf32>
    %c14_152 = arith.constant 14 : index
    %c0_153 = arith.constant 0 : index
    %c0_154 = arith.constant 0 : index
    %232 = vector.load %arg8[%c14_152, %c0_153, %c0_154] : memref<25x8x8xf32, #tpu.memory_space<vmem>>, vector<1x8x8xf32>
    %233 = vector.shape_cast %232 : vector<1x8x8xf32> to vector<8x8xf32>
    %234 = vector.extract_strided_slice %160 {offsets = [0, 44], sizes = [8, 316], strides = [1, 1]} : vector<8x400xf32> to vector<8x316xf32>
    %cst_155 = arith.constant dense<0.000000e+00> : vector<8x316xf32>
    %235 = tpu.matmul %233, %234, %cst_155 {dimension_numbers = #tpu.dot_dimension_numbers<[1], [0], [0], [1], [0, 0, 1, 1], [], []>} : vector<8x8xf32>, vector<8x316xf32>, vector<8x316xf32> -> vector<8x316xf32>
    %236 = arith.addf %231, %235 : vector<8x316xf32>
    %c15_156 = arith.constant 15 : index
    %c0_157 = arith.constant 0 : index
    %c0_158 = arith.constant 0 : index
    %237 = vector.load %arg8[%c15_156, %c0_157, %c0_158] : memref<25x8x8xf32, #tpu.memory_space<vmem>>, vector<1x8x8xf32>
    %238 = vector.shape_cast %237 : vector<1x8x8xf32> to vector<8x8xf32>
    %239 = vector.extract_strided_slice %160 {offsets = [0, 60], sizes = [8, 316], strides = [1, 1]} : vector<8x400xf32> to vector<8x316xf32>
    %cst_159 = arith.constant dense<0.000000e+00> : vector<8x316xf32>
    %240 = tpu.matmul %238, %239, %cst_159 {dimension_numbers = #tpu.dot_dimension_numbers<[1], [0], [0], [1], [0, 0, 1, 1], [], []>} : vector<8x8xf32>, vector<8x316xf32>, vector<8x316xf32> -> vector<8x316xf32>
    %241 = arith.addf %236, %240 : vector<8x316xf32>
    %c16_160 = arith.constant 16 : index
    %c0_161 = arith.constant 0 : index
    %c0_162 = arith.constant 0 : index
    %242 = vector.load %arg8[%c16_160, %c0_161, %c0_162] : memref<25x8x8xf32, #tpu.memory_space<vmem>>, vector<1x8x8xf32>
    %243 = vector.shape_cast %242 : vector<1x8x8xf32> to vector<8x8xf32>
    %244 = vector.extract_strided_slice %160 {offsets = [0, 61], sizes = [8, 316], strides = [1, 1]} : vector<8x400xf32> to vector<8x316xf32>
    %cst_163 = arith.constant dense<0.000000e+00> : vector<8x316xf32>
    %245 = tpu.matmul %243, %244, %cst_163 {dimension_numbers = #tpu.dot_dimension_numbers<[1], [0], [0], [1], [0, 0, 1, 1], [], []>} : vector<8x8xf32>, vector<8x316xf32>, vector<8x316xf32> -> vector<8x316xf32>
    %246 = arith.addf %241, %245 : vector<8x316xf32>
    %c17_164 = arith.constant 17 : index
    %c0_165 = arith.constant 0 : index
    %c0_166 = arith.constant 0 : index
    %247 = vector.load %arg8[%c17_164, %c0_165, %c0_166] : memref<25x8x8xf32, #tpu.memory_space<vmem>>, vector<1x8x8xf32>
    %248 = vector.shape_cast %247 : vector<1x8x8xf32> to vector<8x8xf32>
    %249 = vector.extract_strided_slice %160 {offsets = [0, 62], sizes = [8, 316], strides = [1, 1]} : vector<8x400xf32> to vector<8x316xf32>
    %cst_167 = arith.constant dense<0.000000e+00> : vector<8x316xf32>
    %250 = tpu.matmul %248, %249, %cst_167 {dimension_numbers = #tpu.dot_dimension_numbers<[1], [0], [0], [1], [0, 0, 1, 1], [], []>} : vector<8x8xf32>, vector<8x316xf32>, vector<8x316xf32> -> vector<8x316xf32>
    %251 = arith.addf %246, %250 : vector<8x316xf32>
    %c18_168 = arith.constant 18 : index
    %c0_169 = arith.constant 0 : index
    %c0_170 = arith.constant 0 : index
    %252 = vector.load %arg8[%c18_168, %c0_169, %c0_170] : memref<25x8x8xf32, #tpu.memory_space<vmem>>, vector<1x8x8xf32>
    %253 = vector.shape_cast %252 : vector<1x8x8xf32> to vector<8x8xf32>
    %254 = vector.extract_strided_slice %160 {offsets = [0, 63], sizes = [8, 316], strides = [1, 1]} : vector<8x400xf32> to vector<8x316xf32>
    %cst_171 = arith.constant dense<0.000000e+00> : vector<8x316xf32>
    %255 = tpu.matmul %253, %254, %cst_171 {dimension_numbers = #tpu.dot_dimension_numbers<[1], [0], [0], [1], [0, 0, 1, 1], [], []>} : vector<8x8xf32>, vector<8x316xf32>, vector<8x316xf32> -> vector<8x316xf32>
    %256 = arith.addf %251, %255 : vector<8x316xf32>
    %c19_172 = arith.constant 19 : index
    %c0_173 = arith.constant 0 : index
    %c0_174 = arith.constant 0 : index
    %257 = vector.load %arg8[%c19_172, %c0_173, %c0_174] : memref<25x8x8xf32, #tpu.memory_space<vmem>>, vector<1x8x8xf32>
    %258 = vector.shape_cast %257 : vector<1x8x8xf32> to vector<8x8xf32>
    %259 = vector.extract_strided_slice %160 {offsets = [0, 64], sizes = [8, 316], strides = [1, 1]} : vector<8x400xf32> to vector<8x316xf32>
    %cst_175 = arith.constant dense<0.000000e+00> : vector<8x316xf32>
    %260 = tpu.matmul %258, %259, %cst_175 {dimension_numbers = #tpu.dot_dimension_numbers<[1], [0], [0], [1], [0, 0, 1, 1], [], []>} : vector<8x8xf32>, vector<8x316xf32>, vector<8x316xf32> -> vector<8x316xf32>
    %261 = arith.addf %256, %260 : vector<8x316xf32>
    %c20_176 = arith.constant 20 : index
    %c0_177 = arith.constant 0 : index
    %c0_178 = arith.constant 0 : index
    %262 = vector.load %arg8[%c20_176, %c0_177, %c0_178] : memref<25x8x8xf32, #tpu.memory_space<vmem>>, vector<1x8x8xf32>
    %263 = vector.shape_cast %262 : vector<1x8x8xf32> to vector<8x8xf32>
    %264 = vector.extract_strided_slice %160 {offsets = [0, 80], sizes = [8, 316], strides = [1, 1]} : vector<8x400xf32> to vector<8x316xf32>
    %cst_179 = arith.constant dense<0.000000e+00> : vector<8x316xf32>
    %265 = tpu.matmul %263, %264, %cst_179 {dimension_numbers = #tpu.dot_dimension_numbers<[1], [0], [0], [1], [0, 0, 1, 1], [], []>} : vector<8x8xf32>, vector<8x316xf32>, vector<8x316xf32> -> vector<8x316xf32>
    %266 = arith.addf %261, %265 : vector<8x316xf32>
    %c21_180 = arith.constant 21 : index
    %c0_181 = arith.constant 0 : index
    %c0_182 = arith.constant 0 : index
    %267 = vector.load %arg8[%c21_180, %c0_181, %c0_182] : memref<25x8x8xf32, #tpu.memory_space<vmem>>, vector<1x8x8xf32>
    %268 = vector.shape_cast %267 : vector<1x8x8xf32> to vector<8x8xf32>
    %269 = vector.extract_strided_slice %160 {offsets = [0, 81], sizes = [8, 316], strides = [1, 1]} : vector<8x400xf32> to vector<8x316xf32>
    %cst_183 = arith.constant dense<0.000000e+00> : vector<8x316xf32>
    %270 = tpu.matmul %268, %269, %cst_183 {dimension_numbers = #tpu.dot_dimension_numbers<[1], [0], [0], [1], [0, 0, 1, 1], [], []>} : vector<8x8xf32>, vector<8x316xf32>, vector<8x316xf32> -> vector<8x316xf32>
    %271 = arith.addf %266, %270 : vector<8x316xf32>
    %c22_184 = arith.constant 22 : index
    %c0_185 = arith.constant 0 : index
    %c0_186 = arith.constant 0 : index
    %272 = vector.load %arg8[%c22_184, %c0_185, %c0_186] : memref<25x8x8xf32, #tpu.memory_space<vmem>>, vector<1x8x8xf32>
    %273 = vector.shape_cast %272 : vector<1x8x8xf32> to vector<8x8xf32>
    %274 = vector.extract_strided_slice %160 {offsets = [0, 82], sizes = [8, 316], strides = [1, 1]} : vector<8x400xf32> to vector<8x316xf32>
    %cst_187 = arith.constant dense<0.000000e+00> : vector<8x316xf32>
    %275 = tpu.matmul %273, %274, %cst_187 {dimension_numbers = #tpu.dot_dimension_numbers<[1], [0], [0], [1], [0, 0, 1, 1], [], []>} : vector<8x8xf32>, vector<8x316xf32>, vector<8x316xf32> -> vector<8x316xf32>
    %276 = arith.addf %271, %275 : vector<8x316xf32>
    %c23_188 = arith.constant 23 : index
    %c0_189 = arith.constant 0 : index
    %c0_190 = arith.constant 0 : index
    %277 = vector.load %arg8[%c23_188, %c0_189, %c0_190] : memref<25x8x8xf32, #tpu.memory_space<vmem>>, vector<1x8x8xf32>
    %278 = vector.shape_cast %277 : vector<1x8x8xf32> to vector<8x8xf32>
    %279 = vector.extract_strided_slice %160 {offsets = [0, 83], sizes = [8, 316], strides = [1, 1]} : vector<8x400xf32> to vector<8x316xf32>
    %cst_191 = arith.constant dense<0.000000e+00> : vector<8x316xf32>
    %280 = tpu.matmul %278, %279, %cst_191 {dimension_numbers = #tpu.dot_dimension_numbers<[1], [0], [0], [1], [0, 0, 1, 1], [], []>} : vector<8x8xf32>, vector<8x316xf32>, vector<8x316xf32> -> vector<8x316xf32>
    %281 = arith.addf %276, %280 : vector<8x316xf32>
    %c24_192 = arith.constant 24 : index
    %c0_193 = arith.constant 0 : index
    %c0_194 = arith.constant 0 : index
    %282 = vector.load %arg8[%c24_192, %c0_193, %c0_194] : memref<25x8x8xf32, #tpu.memory_space<vmem>>, vector<1x8x8xf32>
    %283 = vector.shape_cast %282 : vector<1x8x8xf32> to vector<8x8xf32>
    %284 = vector.extract_strided_slice %160 {offsets = [0, 84], sizes = [8, 316], strides = [1, 1]} : vector<8x400xf32> to vector<8x316xf32>
    %cst_195 = arith.constant dense<0.000000e+00> : vector<8x316xf32>
    %285 = tpu.matmul %283, %284, %cst_195 {dimension_numbers = #tpu.dot_dimension_numbers<[1], [0], [0], [1], [0, 0, 1, 1], [], []>} : vector<8x8xf32>, vector<8x316xf32>, vector<8x316xf32> -> vector<8x316xf32>
    %286 = arith.addf %281, %285 : vector<8x316xf32>
    %c0_196 = arith.constant 0 : index
    %c0_197 = arith.constant 0 : index
    %287 = vector.load %arg12[%c0_196, %c0_197] : memref<316x64xf32, #tpu.memory_space<vmem>>, vector<316x64xf32>
    %cst_198 = arith.constant dense<0.000000e+00> : vector<8x64xf32>
    %288 = tpu.matmul %286, %287, %cst_198 {dimension_numbers = #tpu.dot_dimension_numbers<[1], [0], [0], [1], [0, 0, 1, 1], [], []>} : vector<8x316xf32>, vector<316x64xf32>, vector<8x64xf32> -> vector<8x64xf32>
    %c0_199 = arith.constant 0 : index
    %c0_200 = arith.constant 0 : index
    %289 = vector.load %arg9[%c0_199, %c0_200] : memref<8x1xf32, #tpu.memory_space<vmem>>, vector<8x1xf32>
    %290 = vector.broadcast %289 : vector<8x1xf32> to vector<8x64xf32>
    %291 = arith.addf %288, %290 : vector<8x64xf32>
    %292 = vector.shape_cast %291 : vector<8x64xf32> to vector<1x8x64xf32>
    %cst_201 = arith.constant dense<0.000000e+00> : vector<1xf32>
    %293 = vector.multi_reduction <add>, %292, %cst_201 [1, 2] : vector<1x8x64xf32> to vector<1xf32>
    %294 = vector.shape_cast %293 : vector<1xf32> to vector<1x1x1xf32>
    %295 = vector.extract %294[0, 0, 0] : f32 from vector<1x1x1xf32>
    %cst_202 = arith.constant 0.001953125 : f32
    %296 = arith.mulf %295, %cst_202 : f32
    %297 = arith.mulf %291, %291 : vector<8x64xf32>
    %298 = vector.shape_cast %297 : vector<8x64xf32> to vector<1x8x64xf32>
    %cst_203 = arith.constant dense<0.000000e+00> : vector<1xf32>
    %299 = vector.multi_reduction <add>, %298, %cst_203 [1, 2] : vector<1x8x64xf32> to vector<1xf32>
    %300 = vector.shape_cast %299 : vector<1xf32> to vector<1x1x1xf32>
    %301 = vector.extract %300[0, 0, 0] : f32 from vector<1x1x1xf32>
    %cst_204 = arith.constant 0.001953125 : f32
    %302 = arith.mulf %301, %cst_204 : f32
    %303 = arith.mulf %296, %296 : f32
    %304 = arith.subf %302, %303 : f32
    %305 = vector.broadcast %296 : f32 to vector<8x64xf32>
    %306 = arith.subf %291, %305 : vector<8x64xf32>
    %cst_205 = arith.constant 9.99999974E-6 : f32
    %307 = arith.addf %304, %cst_205 : f32
    %308 = math.rsqrt %307 : f32
    %309 = vector.broadcast %308 : f32 to vector<8x64xf32>
    %310 = arith.mulf %306, %309 : vector<8x64xf32>
    %c0_206 = arith.constant 0 : index
    %c0_207 = arith.constant 0 : index
    %311 = vector.load %arg10[%c0_206, %c0_207] : memref<8x64xf32, #tpu.memory_space<vmem>>, vector<8x64xf32>
    %312 = arith.mulf %310, %311 : vector<8x64xf32>
    %c0_208 = arith.constant 0 : index
    %c0_209 = arith.constant 0 : index
    %313 = vector.load %arg11[%c0_208, %c0_209] : memref<8x64xf32, #tpu.memory_space<vmem>>, vector<8x64xf32>
    %314 = arith.addf %312, %313 : vector<8x64xf32>
    %cst_210 = arith.constant 0.000000e+00 : f32
    %315 = vector.broadcast %cst_210 : f32 to vector<8x64xf32>
    %316 = arith.maximumf %314, %315 : vector<8x64xf32>
    %c0_211 = arith.constant 0 : index
    %c0_212 = arith.constant 0 : index
    %c0_213 = arith.constant 0 : index
    %317 = vector.load %arg13[%c0_211, %c0_212, %c0_213] : memref<1x8x64xf32, #tpu.memory_space<vmem>>, vector<1x8x64xf32>
    %318 = vector.shape_cast %317 : vector<1x8x64xf32> to vector<8x64xf32>
    %319 = vector.shape_cast %316 : vector<8x64xf32> to vector<1x8x64xf32>
    tpu.vector_store %arg13[%c0_211, %c0_212, %c0_213], %319 {strides = array<i32>} : memref<1x8x64xf32, #tpu.memory_space<vmem>>, vector<1x8x64xf32>,
    return
  }
  func.func @transform_0(%arg0: i32) -> (i32, i32, i32) {
    %c0_i32 = arith.constant 0 : i32
    %c0_i32_0 = arith.constant 0 : i32
    %c0_i32_1 = arith.constant 0 : i32
    return %arg0, %c0_i32, %c0_i32_0 : i32, i32, i32
  }
  func.func @transform_1(%arg0: i32) -> (i32, i32, i32) {
    %c0_i32 = arith.constant 0 : i32
    %c0_i32_0 = arith.constant 0 : i32
    %c0_i32_1 = arith.constant 0 : i32
    %c0_i32_2 = arith.constant 0 : i32
    return %c0_i32, %c0_i32_0, %c0_i32_1 : i32, i32, i32
  }
  func.func @transform_2(%arg0: i32) -> (i32, i32) {
    %c0_i32 = arith.constant 0 : i32
    %c0_i32_0 = arith.constant 0 : i32
    %c0_i32_1 = arith.constant 0 : i32
    return %c0_i32, %c0_i32_0 : i32, i32
  }
  func.func @transform_3(%arg0: i32) -> (i32, i32) {
    %c0_i32 = arith.constant 0 : i32
    %c0_i32_0 = arith.constant 0 : i32
    %c0_i32_1 = arith.constant 0 : i32
    return %c0_i32, %c0_i32_0 : i32, i32
  }
  func.func @transform_4(%arg0: i32) -> (i32, i32) {
    %c0_i32 = arith.constant 0 : i32
    %c0_i32_0 = arith.constant 0 : i32
    %c0_i32_1 = arith.constant 0 : i32
    return %c0_i32, %c0_i32_0 : i32, i32
  }
  func.func @transform_5(%arg0: i32) -> (i32, i32) {
    %c0_i32 = arith.constant 0 : i32
    %c0_i32_0 = arith.constant 0 : i32
    %c0_i32_1 = arith.constant 0 : i32
    return %c0_i32, %c0_i32_0 : i32, i32
  }
  func.func @transform_6(%arg0: i32) -> (i32, i32) {
    %c0_i32 = arith.constant 0 : i32
    %c0_i32_0 = arith.constant 0 : i32
    %c0_i32_1 = arith.constant 0 : i32
    return %c0_i32, %c0_i32_0 : i32, i32
  }
  func.func @transform_7(%arg0: i32) -> (i32, i32, i32) {
    %c0_i32 = arith.constant 0 : i32
    %c0_i32_0 = arith.constant 0 : i32
    %c0_i32_1 = arith.constant 0 : i32
    %c0_i32_2 = arith.constant 0 : i32
    return %c0_i32, %c0_i32_0, %c0_i32_1 : i32, i32, i32
  }
  func.func @transform_8(%arg0: i32) -> (i32, i32) {
    %c0_i32 = arith.constant 0 : i32
    %c0_i32_0 = arith.constant 0 : i32
    %c0_i32_1 = arith.constant 0 : i32
    return %c0_i32, %c0_i32_0 : i32, i32
  }
  func.func @transform_9(%arg0: i32) -> (i32, i32) {
    %c0_i32 = arith.constant 0 : i32
    %c0_i32_0 = arith.constant 0 : i32
    %c0_i32_1 = arith.constant 0 : i32
    return %c0_i32, %c0_i32_0 : i32, i32
  }
  func.func @transform_10(%arg0: i32) -> (i32, i32) {
    %c0_i32 = arith.constant 0 : i32
    %c0_i32_0 = arith.constant 0 : i32
    %c0_i32_1 = arith.constant 0 : i32
    return %c0_i32, %c0_i32_0 : i32, i32
  }
  func.func @transform_11(%arg0: i32) -> (i32, i32) {
    %c0_i32 = arith.constant 0 : i32
    %c0_i32_0 = arith.constant 0 : i32
    %c0_i32_1 = arith.constant 0 : i32
    return %c0_i32, %c0_i32_0 : i32, i32
  }
  func.func @transform_12(%arg0: i32) -> (i32, i32, i32) {
    %c0_i32 = arith.constant 0 : i32
    %c0_i32_0 = arith.constant 0 : i32
    %c0_i32_1 = arith.constant 0 : i32
    return %arg0, %c0_i32, %c0_i32_0 : i32, i32, i32
  }
}

</mosaic_0001>

<llo_original>
// kernel: encoder_block_forward.1
$region0: #{encoder_block_forward.1}
  #allocation0 [shape = 'u32[]', space=smem, size = 0x4, offset = 0x4, fixed_abs, tag = 'smem constant byte address 0x4 - core index']
  #allocation1 [shape = 'u32[72,128]{1,0:T(1,128)}', space=vmem, size = 0x9000, scoped, tag = 'internal scratch']
  %s0 = inlined_call_operand.vmem [shape: f32[2,4,400], index: 0, kind: input, shape index: {}]
  %s1 = inlined_call_operand.vmem [shape: f32[25,8,4], index: 1, kind: input, shape index: {}]
  %s2 = inlined_call_operand.vmem [shape: f32[8,1], index: 2, kind: input, shape index: {}]
  %s3 = inlined_call_operand.vmem [shape: f32[8,316], index: 3, kind: input, shape index: {}]
  %s4 = inlined_call_operand.vmem [shape: f32[8,316], index: 4, kind: input, shape index: {}]
  %s5 = inlined_call_operand.vmem [shape: f32[1,316], index: 5, kind: input, shape index: {}]
  %s6 = inlined_call_operand.hbm [shape: f32[316,400], index: 6, kind: input, shape index: {}]
  %s7 = inlined_call_operand.vmem [shape: f32[25,8,8], index: 7, kind: input, shape index: {}]
  %s8 = inlined_call_operand.vmem [shape: f32[8,1], index: 8, kind: input, shape index: {}]
  %s9 = inlined_call_operand.vmem [shape: f32[8,64], index: 9, kind: input, shape index: {}]
  %s10 = inlined_call_operand.vmem [shape: f32[8,64], index: 10, kind: input, shape index: {}]
  %s11 = inlined_call_operand.vmem [shape: f32[316,64], index: 11, kind: input, shape index: {}]
  %s12 = inlined_call_operand.vmem [shape: f32[2,8,64], index: 12, kind: output, shape index: {}]
  %s13 = sld [smem:[#allocation0]]
  $region85: #{encoder_block_forward.1} parent=0
    _
  %s15 = ssub.s32 1, %s13
  %s16 = scalar_select 0, %s15, %s13
  $region1: #{encoder_block_forward.1} parent=0
    #allocation2 [shape = 'u8[655360]{0}', space=vmem, size = 0xa0000, scoped, tag = 'input window, operand 6, single buffered']
    #allocation3 [shape = 's32[2]{0}', space=sflag, size = 0x8, scoped, tag = 'scoped memory for encoder_block_forward.1']
    %17 = vsyncpa [#allocation3], 0
    loop: start=0, step=1, limit=4
    $region2: #{encoder_block_forward.1} parent=1 // loop_pre_header
      _
    $region3: #{encoder_block_forward.1} parent=1 // loop_header
      %s19 = sphi 0, %s23
      %p20 = scmp.ge.s32.totalorder %s19, 4
      %s29 = sphi 0, %s31
      %s32 = sphi 0, %s29
      %s33 = sphi 0, %s32
      %s49 = sphi 0, %s33
      %s53 = sphi 0, %s53
      %s55 = sphi 0, %s53
      %s56 = sphi 0, %s55
      %s70 = sphi 0, %s56
      %s74 = sphi 0, %s74
      %s76 = sphi 0, %s74
      %s77 = sphi 0, %s76
      %s91 = sphi 0, %s77
      %s95 = sphi 0, %s95
      %s97 = sphi 0, %s95
      %s98 = sphi 0, %s97
      %s112 = sphi 0, %s98
      %s116 = sphi 0, %s116
      %s118 = sphi 0, %s116
      %s119 = sphi 0, %s118
      %s133 = sphi 0, %s119
      %s137 = sphi 0, %s137
      %s139 = sphi 0, %s137
      %s140 = sphi 0, %s139
      %s154 = sphi 0, %s140
      %s158 = sphi 0, %s158
      %s160 = sphi 0, %s158
      %s161 = sphi 0, %s160
      %s175 = sphi 0, %s161
      %s179 = sphi 0, %s179
      %s181 = sphi 0, %s179
      %s182 = sphi 0, %s181
      %s196 = sphi 0, %s182
      %s200 = sphi 0, %s200
      %s202 = sphi 0, %s200
      %s203 = sphi 0, %s202
      %s217 = sphi 0, %s203
      %s221 = sphi 0, %s221
      %s223 = sphi 0, %s221
      %s224 = sphi 0, %s223
      %s238 = sphi 0, %s224
      %s242 = sphi 0, %s242
      %s244 = sphi 0, %s242
      %s245 = sphi 0, %s244
      %s259 = sphi 0, %s245
      %s263 = sphi 0, %s263
      %s265 = sphi 0, %s263
      %s266 = sphi 0, %s265
      %s280 = sphi 0, %s266
      %s286 = sphi 0, %s288
      %s289 = sphi 0, %s286
      %s290 = sphi 0, %s289
      %s306 = sphi 0, %s290
    $region4: #{encoder_block_forward.1} parent=1 // loop_header_branch
      %22 = sbr.rel (%p20) target = $region8
    $region5: #{encoder_block_forward.1} parent=1 // loop_body
      %s24 = ssub.s32 %s19, 1
      %s25 = ssub.s32 %s19, 2
      %s26 = sadd.s32 %s19, 1
      %s27 = ssub.s32 %s19, %s26
      %p28 = scmp.eq.s32.totalorder %s27, 0
      %s30 = sadd.s32 %s29, 1
      %s31 = scalar_select %p28, %s29, %s30
      %p34 = pneg %p28
      %p35 = scmp.eq.s32.totalorder %s19, 1
      %p36 = por %p34, %p35
      %p37 = scmp.ne.s32.totalorder %s29, %s32
      %p38 = scmp.eq.s32.totalorder %s19, 0
      %p39 = por %p37, %p38
      %p40 = scmp.ne.s32.totalorder %s29, %s32
      %p41 = scmp.eq.s32.totalorder %s24, 1
      %p42 = por %p40, %p41
      %p43 = scmp.ne.s32.totalorder %s32, %s33
      %p44 = scmp.eq.s32.totalorder %s24, 0
      %p45 = por %p43, %p44
      %p46 = scmp.ne.s32.totalorder %s32, %s33
      %p47 = scmp.eq.s32.totalorder %s25, 1
      %p48 = por %p46, %p47
      %p50 = scmp.ne.s32.totalorder %s33, %s49
      %p51 = scmp.eq.s32.totalorder %s25, 0
      %p52 = por %p50, %p51
      %s54 = sadd.s32 %s53, 1
      %p57 = scmp.eq.s32.totalorder %s19, 1
      %p58 = scmp.ne.s32.totalorder %s53, %s55
      %p59 = scmp.eq.s32.totalorder %s19, 0
      %p60 = por %p58, %p59
      %p61 = scmp.ne.s32.totalorder %s53, %s55
      %p62 = scmp.eq.s32.totalorder %s24, 1
      %p63 = por %p61, %p62
      %p64 = scmp.ne.s32.totalorder %s55, %s56
      %p65 = scmp.eq.s32.totalorder %s24, 0
      %p66 = por %p64, %p65
      %p67 = scmp.ne.s32.totalorder %s55, %s56
      %p68 = scmp.eq.s32.totalorder %s25, 1
      %p69 = por %p67, %p68
      %p71 = scmp.ne.s32.totalorder %s56, %s70
      %p72 = scmp.eq.s32.totalorder %s25, 0
      %p73 = por %p71, %p72
      %s75 = sadd.s32 %s74, 1
      %p78 = scmp.eq.s32.totalorder %s19, 1
      %p79 = scmp.ne.s32.totalorder %s74, %s76
      %p80 = scmp.eq.s32.totalorder %s19, 0
      %p81 = por %p79, %p80
      %p82 = scmp.ne.s32.totalorder %s74, %s76
      %p83 = scmp.eq.s32.totalorder %s24, 1
      %p84 = por %p82, %p83
      %p85 = scmp.ne.s32.totalorder %s76, %s77
      %p86 = scmp.eq.s32.totalorder %s24, 0
      %p87 = por %p85, %p86
      %p88 = scmp.ne.s32.totalorder %s76, %s77
      %p89 = scmp.eq.s32.totalorder %s25, 1
      %p90 = por %p88, %p89
      %p92 = scmp.ne.s32.totalorder %s77, %s91
      %p93 = scmp.eq.s32.totalorder %s25, 0
      %p94 = por %p92, %p93
      %s96 = sadd.s32 %s95, 1
      %p99 = scmp.eq.s32.totalorder %s19, 1
      %p100 = scmp.ne.s32.totalorder %s95, %s97
      %p101 = scmp.eq.s32.totalorder %s19, 0
      %p102 = por %p100, %p101
      %p103 = scmp.ne.s32.totalorder %s95, %s97
      %p104 = scmp.eq.s32.totalorder %s24, 1
      %p105 = por %p103, %p104
      %p106 = scmp.ne.s32.totalorder %s97, %s98
      %p107 = scmp.eq.s32.totalorder %s24, 0
      %p108 = por %p106, %p107
      %p109 = scmp.ne.s32.totalorder %s97, %s98
      %p110 = scmp.eq.s32.totalorder %s25, 1
      %p111 = por %p109, %p110
      %p113 = scmp.ne.s32.totalorder %s98, %s112
      %p114 = scmp.eq.s32.totalorder %s25, 0
      %p115 = por %p113, %p114
      %s117 = sadd.s32 %s116, 1
      %p120 = scmp.eq.s32.totalorder %s19, 1
      %p121 = scmp.ne.s32.totalorder %s116, %s118
      %p122 = scmp.eq.s32.totalorder %s19, 0
      %p123 = por %p121, %p122
      %p124 = scmp.ne.s32.totalorder %s116, %s118
      %p125 = scmp.eq.s32.totalorder %s24, 1
      %p126 = por %p124, %p125
      %p127 = scmp.ne.s32.totalorder %s118, %s119
      %p128 = scmp.eq.s32.totalorder %s24, 0
      %p129 = por %p127, %p128
      %p130 = scmp.ne.s32.totalorder %s118, %s119
      %p131 = scmp.eq.s32.totalorder %s25, 1
      %p132 = por %p130, %p131
      %p134 = scmp.ne.s32.totalorder %s119, %s133
      %p135 = scmp.eq.s32.totalorder %s25, 0
      %p136 = por %p134, %p135
      %s138 = sadd.s32 %s137, 1
      %p141 = scmp.eq.s32.totalorder %s19, 1
      %p142 = scmp.ne.s32.totalorder %s137, %s139
      %p143 = scmp.eq.s32.totalorder %s19, 0
      %p144 = por %p142, %p143
      %p145 = scmp.ne.s32.totalorder %s137, %s139
      %p146 = scmp.eq.s32.totalorder %s24, 1
      %p147 = por %p145, %p146
      %p148 = scmp.ne.s32.totalorder %s139, %s140
      %p149 = scmp.eq.s32.totalorder %s24, 0
      %p150 = por %p148, %p149
      %p151 = scmp.ne.s32.totalorder %s139, %s140
      %p152 = scmp.eq.s32.totalorder %s25, 1
      %p153 = por %p151, %p152
      %p155 = scmp.ne.s32.totalorder %s140, %s154
      %p156 = scmp.eq.s32.totalorder %s25, 0
      %p157 = por %p155, %p156
      %s159 = sadd.s32 %s158, 1
      %p162 = scmp.eq.s32.totalorder %s19, 1
      %p163 = scmp.ne.s32.totalorder %s158, %s160
      %p164 = scmp.eq.s32.totalorder %s19, 0
      %p165 = por %p163, %p164
      %p166 = scmp.ne.s32.totalorder %s158, %s160
      %p167 = scmp.eq.s32.totalorder %s24, 1
      %p168 = por %p166, %p167
      %p169 = scmp.ne.s32.totalorder %s160, %s161
      %p170 = scmp.eq.s32.totalorder %s24, 0
      %p171 = por %p169, %p170
      %p172 = scmp.ne.s32.totalorder %s160, %s161
      %p173 = scmp.eq.s32.totalorder %s25, 1
      %p174 = por %p172, %p173
      %p176 = scmp.ne.s32.totalorder %s161, %s175
      %p177 = scmp.eq.s32.totalorder %s25, 0
      %p178 = por %p176, %p177
      %s180 = sadd.s32 %s179, 1
      %p183 = scmp.eq.s32.totalorder %s19, 1
      %p184 = scmp.ne.s32.totalorder %s179, %s181
      %p185 = scmp.eq.s32.totalorder %s19, 0
      %p186 = por %p184, %p185
      %p187 = scmp.ne.s32.totalorder %s179, %s181
      %p188 = scmp.eq.s32.totalorder %s24, 1
      %p189 = por %p187, %p188
      %p190 = scmp.ne.s32.totalorder %s181, %s182
      %p191 = scmp.eq.s32.totalorder %s24, 0
      %p192 = por %p190, %p191
      %p193 = scmp.ne.s32.totalorder %s181, %s182
      %p194 = scmp.eq.s32.totalorder %s25, 1
      %p195 = por %p193, %p194
      %p197 = scmp.ne.s32.totalorder %s182, %s196
      %p198 = scmp.eq.s32.totalorder %s25, 0
      %p199 = por %p197, %p198
      %s201 = sadd.s32 %s200, 1
      %p204 = scmp.eq.s32.totalorder %s19, 1
      %p205 = scmp.ne.s32.totalorder %s200, %s202
      %p206 = scmp.eq.s32.totalorder %s19, 0
      %p207 = por %p205, %p206
      %p208 = scmp.ne.s32.totalorder %s200, %s202
      %p209 = scmp.eq.s32.totalorder %s24, 1
      %p210 = por %p208, %p209
      %p211 = scmp.ne.s32.totalorder %s202, %s203
      %p212 = scmp.eq.s32.totalorder %s24, 0
      %p213 = por %p211, %p212
      %p214 = scmp.ne.s32.totalorder %s202, %s203
      %p215 = scmp.eq.s32.totalorder %s25, 1
      %p216 = por %p214, %p215
      %p218 = scmp.ne.s32.totalorder %s203, %s217
      %p219 = scmp.eq.s32.totalorder %s25, 0
      %p220 = por %p218, %p219
      %s222 = sadd.s32 %s221, 1
      %p225 = scmp.eq.s32.totalorder %s19, 1
      %p226 = scmp.ne.s32.totalorder %s221, %s223
      %p227 = scmp.eq.s32.totalorder %s19, 0
      %p228 = por %p226, %p227
      %p229 = scmp.ne.s32.totalorder %s221, %s223
      %p230 = scmp.eq.s32.totalorder %s24, 1
      %p231 = por %p229, %p230
      %p232 = scmp.ne.s32.totalorder %s223, %s224
      %p233 = scmp.eq.s32.totalorder %s24, 0
      %p234 = por %p232, %p233
      %p235 = scmp.ne.s32.totalorder %s223, %s224
      %p236 = scmp.eq.s32.totalorder %s25, 1
      %p237 = por %p235, %p236
      %p239 = scmp.ne.s32.totalorder %s224, %s238
      %p240 = scmp.eq.s32.totalorder %s25, 0
      %p241 = por %p239, %p240
      %s243 = sadd.s32 %s242, 1
      %p246 = scmp.eq.s32.totalorder %s19, 1
      %p247 = scmp.ne.s32.totalorder %s242, %s244
      %p248 = scmp.eq.s32.totalorder %s19, 0
      %p249 = por %p247, %p248
      %p250 = scmp.ne.s32.totalorder %s242, %s244
      %p251 = scmp.eq.s32.totalorder %s24, 1
      %p252 = por %p250, %p251
      %p253 = scmp.ne.s32.totalorder %s244, %s245
      %p254 = scmp.eq.s32.totalorder %s24, 0
      %p255 = por %p253, %p254
      %p256 = scmp.ne.s32.totalorder %s244, %s245
      %p257 = scmp.eq.s32.totalorder %s25, 1
      %p258 = por %p256, %p257
      %p260 = scmp.ne.s32.totalorder %s245, %s259
      %p261 = scmp.eq.s32.totalorder %s25, 0
      %p262 = por %p260, %p261
      %s264 = sadd.s32 %s263, 1
      %p267 = scmp.eq.s32.totalorder %s19, 1
      %p268 = scmp.ne.s32.totalorder %s263, %s265
      %p269 = scmp.eq.s32.totalorder %s19, 0
      %p270 = por %p268, %p269
      %p271 = scmp.ne.s32.totalorder %s263, %s265
      %p272 = scmp.eq.s32.totalorder %s24, 1
      %p273 = por %p271, %p272
      %p274 = scmp.ne.s32.totalorder %s265, %s266
      %p275 = scmp.eq.s32.totalorder %s24, 0
      %p276 = por %p274, %p275
      %p277 = scmp.ne.s32.totalorder %s265, %s266
      %p278 = scmp.eq.s32.totalorder %s25, 1
      %p279 = por %p277, %p278
      %p281 = scmp.ne.s32.totalorder %s266, %s280
      %p282 = scmp.eq.s32.totalorder %s25, 0
      %p283 = por %p281, %p282
      %s284 = ssub.s32 %s19, %s26
      %p285 = scmp.eq.s32.totalorder %s284, 0
      %s287 = sadd.s32 %s286, 1
      %s288 = scalar_select %p285, %s286, %s287
      %p291 = pneg %p285
      %p292 = scmp.eq.s32.totalorder %s19, 1
      %p293 = por %p291, %p292
      %p294 = scmp.ne.s32.totalorder %s286, %s289
      %p295 = scmp.eq.s32.totalorder %s19, 0
      %p296 = por %p294, %p295
      %p297 = scmp.ne.s32.totalorder %s286, %s289
      %p298 = scmp.eq.s32.totalorder %s24, 1
      %p299 = por %p297, %p298
      %p300 = scmp.ne.s32.totalorder %s289, %s290
      %p301 = scmp.eq.s32.totalorder %s24, 0
      %p302 = por %p300, %p301
      %p303 = scmp.ne.s32.totalorder %s289, %s290
      %p304 = scmp.eq.s32.totalorder %s25, 1
      %p305 = por %p303, %p304
      %p307 = scmp.ne.s32.totalorder %s290, %s306
      %p308 = scmp.eq.s32.totalorder %s25, 0
      %p309 = por %p307, %p308
      %p310 = scmp.le.s32.totalorder 1, %s19
      %p311 = scmp.lt.s32.totalorder %s19, 3
      %p312 = pnand %p310, %p311
      %p313 = pneg %p312
      // Predicated region
      $region9: #{encoder_block_forward.1} parent=5 // pred_check
        _
      $region10: #{encoder_block_forward.1} parent=5 // pred_check_branch
        %315 = sbr.rel (%p312) target = $region12
      $region11: #{encoder_block_forward.1} parent=5 // pred_region
        %s316 = ssub.s32 %s19, 1
        // Predicated region
        $region13: #{encoder_block_forward.1} parent=11 // pred_check
          %p317 = pneg %p66
        $region14: #{encoder_block_forward.1} parent=11 // pred_check_branch
          %319 = sbr.rel (%p317) target = $region16
        $region15: #{encoder_block_forward.1} parent=11 // pred_region
          _
        $region16: #{encoder_block_forward.1} parent=11 // pred_fallthru
          _
        // Predicated region
        $region17: #{encoder_block_forward.1} parent=11 // pred_check
          %p320 = pneg %p87
        $region18: #{encoder_block_forward.1} parent=11 // pred_check_branch
          %322 = sbr.rel (%p320) target = $region20
        $region19: #{encoder_block_forward.1} parent=11 // pred_region
          _
        $region20: #{encoder_block_forward.1} parent=11 // pred_fallthru
          _
        // Predicated region
        $region21: #{encoder_block_forward.1} parent=11 // pred_check
          %p323 = pneg %p108
        $region22: #{encoder_block_forward.1} parent=11 // pred_check_branch
          %325 = sbr.rel (%p323) target = $region24
        $region23: #{encoder_block_forward.1} parent=11 // pred_region
          _
        $region24: #{encoder_block_forward.1} parent=11 // pred_fallthru
          _
        // Predicated region
        $region25: #{encoder_block_forward.1} parent=11 // pred_check
          %p326 = pneg %p129
        $region26: #{encoder_block_forward.1} parent=11 // pred_check_branch
          %328 = sbr.rel (%p326) target = $region28
        $region27: #{encoder_block_forward.1} parent=11 // pred_region
          _
        $region28: #{encoder_block_forward.1} parent=11 // pred_fallthru
          _
        // Predicated region
        $region29: #{encoder_block_forward.1} parent=11 // pred_check
          %p329 = pneg %p150
        $region30: #{encoder_block_forward.1} parent=11 // pred_check_branch
          %331 = sbr.rel (%p329) target = $region32
        $region31: #{encoder_block_forward.1} parent=11 // pred_region
          _
        $region32: #{encoder_block_forward.1} parent=11 // pred_fallthru
          _
        // Predicated region
        $region33: #{encoder_block_forward.1} parent=11 // pred_check
          %p332 = pneg %p171
        $region34: #{encoder_block_forward.1} parent=11 // pred_check_branch
          %334 = sbr.rel (%p332) target = $region36
        $region35: #{encoder_block_forward.1} parent=11 // pred_region
          %336 = vsyncadd [#allocation3], 0
          %s337 = sshll.u32 %s6, 4
          %s338 = int_to_ptr.hbm [resolvable:$true] %s337
          %s339 = sshll.u32 [#allocation2], 4
          %s340 = int_to_ptr.vmem [resolvable:$true] %s339
          %345 = dma.hbm_to_vmem [thread:$0]  %s338, 20480, %s340, [#allocation3], 512, 512, 32
        $region36: #{encoder_block_forward.1} parent=11 // pred_fallthru
          _
        // Predicated region
        $region37: #{encoder_block_forward.1} parent=11 // pred_check
          %p346 = pneg %p192
        $region38: #{encoder_block_forward.1} parent=11 // pred_check_branch
          %348 = sbr.rel (%p346) target = $region40
        $region39: #{encoder_block_forward.1} parent=11 // pred_region
          _
        $region40: #{encoder_block_forward.1} parent=11 // pred_fallthru
          _
        // Predicated region
        $region41: #{encoder_block_forward.1} parent=11 // pred_check
          %p349 = pneg %p213
        $region42: #{encoder_block_forward.1} parent=11 // pred_check_branch
          %351 = sbr.rel (%p349) target = $region44
        $region43: #{encoder_block_forward.1} parent=11 // pred_region
          _
        $region44: #{encoder_block_forward.1} parent=11 // pred_fallthru
          _
        // Predicated region
        $region45: #{encoder_block_forward.1} parent=11 // pred_check
          %p352 = pneg %p234
        $region46: #{encoder_block_forward.1} parent=11 // pred_check_branch
          %354 = sbr.rel (%p352) target = $region48
        $region47: #{encoder_block_forward.1} parent=11 // pred_region
          _
        $region48: #{encoder_block_forward.1} parent=11 // pred_fallthru
          _
        // Predicated region
        $region49: #{encoder_block_forward.1} parent=11 // pred_check
          %p355 = pneg %p255
        $region50: #{encoder_block_forward.1} parent=11 // pred_check_branch
          %357 = sbr.rel (%p355) target = $region52
        $region51: #{encoder_block_forward.1} parent=11 // pred_region
          _
        $region52: #{encoder_block_forward.1} parent=11 // pred_fallthru
          _
        // Predicated region
        $region53: #{encoder_block_forward.1} parent=11 // pred_check
          %p358 = pneg %p276
        $region54: #{encoder_block_forward.1} parent=11 // pred_check_branch
          %360 = sbr.rel (%p358) target = $region56
        $region55: #{encoder_block_forward.1} parent=11 // pred_region
          _
        $region56: #{encoder_block_forward.1} parent=11 // pred_fallthru
          _
      $region12: #{encoder_block_forward.1} parent=5 // pred_fallthru
        _
      %p361 = scmp.lt.s32.totalorder %s19, 2
      // Predicated region
      $region57: #{encoder_block_forward.1} parent=5 // pred_check
        %p362 = pneg %p361
      $region58: #{encoder_block_forward.1} parent=5 // pred_check_branch
        %364 = sbr.rel (%p362) target = $region60
      $region59: #{encoder_block_forward.1} parent=5 // pred_region
        // Predicated region
        $region61: #{encoder_block_forward.1} parent=59 // pred_check
          %p365 = pneg %p39
        $region62: #{encoder_block_forward.1} parent=59 // pred_check_branch
          %367 = sbr.rel (%p365) target = $region64
        $region63: #{encoder_block_forward.1} parent=59 // pred_region
          %p368 = scmp.lt.s32.totalorder %s19, 1
          %s369 = scalar_select %p368, %s19, 1
          %s370 = smul.addr %s369, 4
          %s371 = smul.addr %s370, 4
          %s372 = scalar_lea.vmem %s0, %s371
        $region64: #{encoder_block_forward.1} parent=59 // pred_fallthru
          _
      $region60: #{encoder_block_forward.1} parent=5 // pred_fallthru
        _
      %p373 = scmp.le.s32.totalorder 1, %s19
      %p374 = scmp.lt.s32.totalorder %s19, 3
      %p375 = pnand %p373, %p374
      %p376 = pneg %p375
      // Predicated region
      $region65: #{encoder_block_forward.1} parent=5 // pred_check
        _
      $region66: #{encoder_block_forward.1} parent=5 // pred_check_branch
        %378 = sbr.rel (%p375) target = $region68
      $region67: #{encoder_block_forward.1} parent=5 // pred_region
        %s379 = ssub.s32 %s19, 1
        // Predicated region
        $region69: #{encoder_block_forward.1} parent=67 // pred_check
          %p380 = pneg %p171
        $region70: #{encoder_block_forward.1} parent=67 // pred_check_branch
          %382 = sbr.rel (%p380) target = $region72
        $region71: #{encoder_block_forward.1} parent=67 // pred_region
          %384 = dma.done [#allocation3], 20480
        $region72: #{encoder_block_forward.1} parent=67 // pred_fallthru
          _
        %p385 = scmp.lt.s32.totalorder %s24, 1
        %s386 = scalar_select %p385, %s24, 1
        %s387 = smul.addr %s386, 4
        %s388 = smul.addr %s387, 4
        %s389 = scalar_lea.vmem %s0, %s388
        %p390 = pneg %p45
        %p391 = pneg %p42
        %p392 = pneg %p66
        %p393 = pneg %p63
        %p394 = pneg %p87
        %p395 = pneg %p84
        %p396 = pneg %p108
        %p397 = pneg %p105
        %p398 = pneg %p129
        %p399 = pneg %p126
        %p400 = pneg %p150
        %p401 = pneg %p147
        %p402 = pneg %p171
        %p403 = pneg %p168
        %p404 = pneg %p192
        %p405 = pneg %p189
        %p406 = pneg %p213
        %p407 = pneg %p210
        %p408 = pneg %p234
        %p409 = pneg %p231
        %p410 = pneg %p255
        %p411 = pneg %p252
        %p412 = pneg %p276
        %p413 = pneg %p273
        %p414 = pneg %p302
        %p415 = pneg %p299
        %p416 = scmp.lt.s32.totalorder %s24, 1
        %s417 = scalar_select %p416, %s24, 1
        %s418 = smul.addr %s417, 8
        %s419 = scalar_lea.vmem %s12, %s418
        %p420 = scmp.lt.s32.totalorder %s24, 1
        %s421 = scalar_select %p420, %s24, 1
        %s422 = smul.addr %s421, 4
        %s423 = smul.addr %s422, 4
        %s424 = scalar_lea.vmem %s0, %s423
        %p425 = scmp.lt.s32.totalorder %s24, 1
        %s426 = scalar_select %p425, %s24, 1
        %s427 = smul.addr %s426, 8
        %s428 = scalar_lea.vmem %s12, %s427
        %v429 = vld [vmem:[%s424] sm:$0xff]
        %v430 = vld [vmem:[%s424 + $0x8] sm:$0xff]
        %v431 = vld [vmem:[%s1] sm:$0xff]
        %s432 = scalar_lea.vmem %s1, 8
        %v433 = vld [vmem:[%s432] sm:$0xff]
        %436 = vst [vmem:[#allocation1] ss:$2 sm:$0xff] %v429
        %s437 = scalar_lea.vmem [#allocation1], 16
        %438 = vst [vmem:[%s437] ss:$2 sm:$0xff] %v430
        %v439 = vld.sshfl [vmem:[#allocation1] sm:$0xff pattern:$0x75316420]
        %v440 = vld.sshfl [vmem:[#allocation1 + $0x8] sm:$0xff pattern:$0x75316420]
        %v441 = vld.sshfl [vmem:[#allocation1 + $0x10] sm:$0xff pattern:$0x75316420]
        %442 = vrot.lane.b32.xlu0 %v439, 127
        %v443 = vpop.permute.xlu0 %442
        %444 = vrot.lane.b32.xlu0 %v440, 127
        %v445 = vpop.permute.xlu0 %444
        %446 = vrot.lane.b32.xlu0 %v441, 127
        %v447 = vpop.permute.xlu0 %446
        %vm448 = vcmask 1039360
        %v449 = vsel %vm448, %v443, %v445
        %v450 = vsel %vm448, %v445, %v447
        %vm451 = vcmask 31744
        %v453 = vsel %vm451, %v433, 0
        %vm455 = vcmask 1043456
        %v456 = vsel %vm455, %v449, 0
        %v458 = vsel %vm455, %v450, 0
        %v460 = vsel %vm455, %v447, 0
        %462 = vmatpush.msra.mxu0 0.0
        %463 = vmatpush.msra.mxu0 0.0
        %464 = vmatpush.msra.mxu0 0.0
        %465 = vmatpush.msra.mxu0 0.0
        %466 = vmatpush.msra.mxu0 0.0
        %467 = vmatpush.msra.mxu0 0.0
        %468 = vmatpush.msra.mxu0 0.0
        %469 = vmatpush.msra.mxu0 0.0
        %470 = vmatpush.msra.mxu0 0.0
        %471 = vmatpush.msra.mxu0 0.0
        %472 = vmatpush.msra.mxu0 0.0
        %473 = vmatpush.msra.mxu0 0.0
        %474 = vmatpush.msra.mxu0 0.0
        %475 = vmatpush.msra.mxu0 0.0
        %476 = vmatpush.msra.mxu0 0.0
        %477 = vmatpush.msra.mxu0 %v456
        %478 = vmatmul.f32.gmra.mxu0 %v453
        %v479 = vpop.f32.mrf.mxu0
        %v480 = vadd.f32 0.0, %v479
        %481 = vdwg.mxu0
        %482 = vmatpush.msra.mxu0 0.0
        %483 = vmatpush.msra.mxu0 0.0
        %484 = vmatpush.msra.mxu0 0.0
        %485 = vmatpush.msra.mxu0 0.0
        %486 = vmatpush.msra.mxu0 0.0
        %487 = vmatpush.msra.mxu0 0.0
        %488 = vmatpush.msra.mxu0 0.0
        %489 = vmatpush.msra.mxu0 0.0
        %490 = vmatpush.msra.mxu0 0.0
        %491 = vmatpush.msra.mxu0 0.0
        %492 = vmatpush.msra.mxu0 0.0
        %493 = vmatpush.msra.mxu0 0.0
        %494 = vmatpush.msra.mxu0 0.0
        %495 = vmatpush.msra.mxu0 0.0
        %496 = vmatpush.msra.mxu0 0.0
        %497 = vmatpush.msra.mxu0 %v458
        %498 = vmatmul.f32.gmra.mxu0 %v453
        %v499 = vpop.f32.mrf.mxu0
        %v500 = vadd.f32 0.0, %v499
        %501 = vdwg.mxu0
        %502 = vmatpush.msra.mxu0 0.0
        %503 = vmatpush.msra.mxu0 0.0
        %504 = vmatpush.msra.mxu0 0.0
        %505 = vmatpush.msra.mxu0 0.0
        %506 = vmatpush.msra.mxu0 0.0
        %507 = vmatpush.msra.mxu0 0.0
        %508 = vmatpush.msra.mxu0 0.0
        %509 = vmatpush.msra.mxu0 0.0
        %510 = vmatpush.msra.mxu0 0.0
        %511 = vmatpush.msra.mxu0 0.0
        %512 = vmatpush.msra.mxu0 0.0
        %513 = vmatpush.msra.mxu0 0.0
        %514 = vmatpush.msra.mxu0 0.0
        %515 = vmatpush.msra.mxu0 0.0
        %516 = vmatpush.msra.mxu0 0.0
        %517 = vmatpush.msra.mxu0 %v460
        %518 = vmatmul.f32.gmra.mxu0 %v453
        %v519 = vpop.f32.mrf.mxu0
        %v520 = vadd.f32 0.0, %v519
        %521 = vdwg.mxu0
        %522 = vst [vmem:[#allocation1] ss:$2 sm:$0xff] %v429
        %s523 = scalar_lea.vmem [#allocation1], 16
        %524 = vst [vmem:[%s523] ss:$2 sm:$0xff] %v430
        %v525 = vld.sshfl [vmem:[#allocation1] sm:$0xff pattern:$0x75316420]
        %v526 = vld.sshfl [vmem:[#allocation1 + $0x8] sm:$0xff pattern:$0x75316420]
        %v527 = vld.sshfl [vmem:[#allocation1 + $0x10] sm:$0xff pattern:$0x75316420]
        %v529 = vsel %vm451, %v431, 0
        %v531 = vsel %vm455, %v525, 0
        %v533 = vsel %vm455, %v526, 0
        %v535 = vsel %vm455, %v527, 0
        %537 = vmatpush.msra.mxu0 0.0
        %538 = vmatpush.msra.mxu0 0.0
        %539 = vmatpush.msra.mxu0 0.0
        %540 = vmatpush.msra.mxu0 0.0
        %541 = vmatpush.msra.mxu0 0.0
        %542 = vmatpush.msra.mxu0 0.0
        %543 = vmatpush.msra.mxu0 0.0
        %544 = vmatpush.msra.mxu0 0.0
        %545 = vmatpush.msra.mxu0 0.0
        %546 = vmatpush.msra.mxu0 0.0
        %547 = vmatpush.msra.mxu0 0.0
        %548 = vmatpush.msra.mxu0 0.0
        %549 = vmatpush.msra.mxu0 0.0
        %550 = vmatpush.msra.mxu0 0.0
        %551 = vmatpush.msra.mxu0 0.0
        %552 = vmatpush.msra.mxu0 %v531
        %553 = vmatmul.f32.gmra.mxu0 %v529
        %v554 = vpop.f32.mrf.mxu0
        %v555 = vadd.f32 %v480, %v554
        %556 = vdwg.mxu0
        %557 = vmatpush.msra.mxu0 0.0
        %558 = vmatpush.msra.mxu0 0.0
        %559 = vmatpush.msra.mxu0 0.0
        %560 = vmatpush.msra.mxu0 0.0
        %561 = vmatpush.msra.mxu0 0.0
        %562 = vmatpush.msra.mxu0 0.0
        %563 = vmatpush.msra.mxu0 0.0
        %564 = vmatpush.msra.mxu0 0.0
        %565 = vmatpush.msra.mxu0 0.0
        %566 = vmatpush.msra.mxu0 0.0
        %567 = vmatpush.msra.mxu0 0.0
        %568 = vmatpush.msra.mxu0 0.0
        %569 = vmatpush.msra.mxu0 0.0
        %570 = vmatpush.msra.mxu0 0.0
        %571 = vmatpush.msra.mxu0 0.0
        %572 = vmatpush.msra.mxu0 %v533
        %573 = vmatmul.f32.gmra.mxu0 %v529
        %v574 = vpop.f32.mrf.mxu0
        %v575 = vadd.f32 %v500, %v574
        %576 = vdwg.mxu0
        %577 = vmatpush.msra.mxu0 0.0
        %578 = vmatpush.msra.mxu0 0.0
        %579 = vmatpush.msra.mxu0 0.0
        %580 = vmatpush.msra.mxu0 0.0
        %581 = vmatpush.msra.mxu0 0.0
        %582 = vmatpush.msra.mxu0 0.0
        %583 = vmatpush.msra.mxu0 0.0
        %584 = vmatpush.msra.mxu0 0.0
        %585 = vmatpush.msra.mxu0 0.0
        %586 = vmatpush.msra.mxu0 0.0
        %587 = vmatpush.msra.mxu0 0.0
        %588 = vmatpush.msra.mxu0 0.0
        %589 = vmatpush.msra.mxu0 0.0
        %590 = vmatpush.msra.mxu0 0.0
        %591 = vmatpush.msra.mxu0 0.0
        %592 = vmatpush.msra.mxu0 %v535
        %593 = vmatmul.f32.gmra.mxu0 %v529
        %v594 = vpop.f32.mrf.mxu0
        %v595 = vadd.f32 %v520, %v594
        %596 = vdwg.mxu0
        %s597 = scalar_lea.vmem %s1, 16
        %v598 = vld [vmem:[%s597] sm:$0xff]
        %599 = vst [vmem:[#allocation1] ss:$2 sm:$0xff] %v429
        %s600 = scalar_lea.vmem [#allocation1], 16
        %601 = vst [vmem:[%s600] ss:$2 sm:$0xff] %v430
        %v602 = vld.sshfl [vmem:[#allocation1] sm:$0xff pattern:$0x75316420]
        %v603 = vld.sshfl [vmem:[#allocation1 + $0x8] sm:$0xff pattern:$0x75316420]
        %v604 = vld.sshfl [vmem:[#allocation1 + $0x10] sm:$0xff pattern:$0x75316420]
        %605 = vrot.lane.b32.xlu0 %v602, 126
        %v606 = vpop.permute.xlu0 %605
        %607 = vrot.lane.b32.xlu0 %v603, 126
        %v608 = vpop.permute.xlu0 %607
        %609 = vrot.lane.b32.xlu0 %v604, 126
        %v610 = vpop.permute.xlu0 %609
        %vm611 = vcmask 1031168
        %v612 = vsel %vm611, %v606, %v608
        %v613 = vsel %vm611, %v608, %v610
        %v615 = vsel %vm451, %v598, 0
        %v617 = vsel %vm455, %v612, 0
        %v619 = vsel %vm455, %v613, 0
        %v621 = vsel %vm455, %v610, 0
        %623 = vmatpush.msra.mxu0 0.0
        %624 = vmatpush.msra.mxu0 0.0
        %625 = vmatpush.msra.mxu0 0.0
        %626 = vmatpush.msra.mxu0 0.0
        %627 = vmatpush.msra.mxu0 0.0
        %628 = vmatpush.msra.mxu0 0.0
        %629 = vmatpush.msra.mxu0 0.0
        %630 = vmatpush.msra.mxu0 0.0
        %631 = vmatpush.msra.mxu0 0.0
        %632 = vmatpush.msra.mxu0 0.0
        %633 = vmatpush.msra.mxu0 0.0
        %634 = vmatpush.msra.mxu0 0.0
        %635 = vmatpush.msra.mxu0 0.0
        %636 = vmatpush.msra.mxu0 0.0
        %637 = vmatpush.msra.mxu0 0.0
        %638 = vmatpush.msra.mxu0 %v617
        %639 = vmatmul.f32.gmra.mxu0 %v615
        %v640 = vpop.f32.mrf.mxu0
        %v641 = vadd.f32 0.0, %v640
        %642 = vdwg.mxu0
        %643 = vmatpush.msra.mxu0 0.0
        %644 = vmatpush.msra.mxu0 0.0
        %645 = vmatpush.msra.mxu0 0.0
        %646 = vmatpush.msra.mxu0 0.0
        %647 = vmatpush.msra.mxu0 0.0
        %648 = vmatpush.msra.mxu0 0.0
        %649 = vmatpush.msra.mxu0 0.0
        %650 = vmatpush.msra.mxu0 0.0
        %651 = vmatpush.msra.mxu0 0.0
        %652 = vmatpush.msra.mxu0 0.0
        %653 = vmatpush.msra.mxu0 0.0
        %654 = vmatpush.msra.mxu0 0.0
        %655 = vmatpush.msra.mxu0 0.0
        %656 = vmatpush.msra.mxu0 0.0
        %657 = vmatpush.msra.mxu0 0.0
        %658 = vmatpush.msra.mxu0 %v619
        %659 = vmatmul.f32.gmra.mxu0 %v615
        %v660 = vpop.f32.mrf.mxu0
        %v661 = vadd.f32 0.0, %v660
        %662 = vdwg.mxu0
        %663 = vmatpush.msra.mxu0 0.0
        %664 = vmatpush.msra.mxu0 0.0
        %665 = vmatpush.msra.mxu0 0.0
        %666 = vmatpush.msra.mxu0 0.0
        %667 = vmatpush.msra.mxu0 0.0
        %668 = vmatpush.msra.mxu0 0.0
        %669 = vmatpush.msra.mxu0 0.0
        %670 = vmatpush.msra.mxu0 0.0
        %671 = vmatpush.msra.mxu0 0.0
        %672 = vmatpush.msra.mxu0 0.0
        %673 = vmatpush.msra.mxu0 0.0
        %674 = vmatpush.msra.mxu0 0.0
        %675 = vmatpush.msra.mxu0 0.0
        %676 = vmatpush.msra.mxu0 0.0
        %677 = vmatpush.msra.mxu0 0.0
        %678 = vmatpush.msra.mxu0 %v621
        %679 = vmatmul.f32.gmra.mxu0 %v615
        %v680 = vpop.f32.mrf.mxu0
        %v681 = vadd.f32 0.0, %v680
        %682 = vdwg.mxu0
        %v683 = vadd.f32 %v555, %v641
        %v684 = vadd.f32 %v575, %v661
        %v685 = vadd.f32 %v595, %v681
        %s686 = scalar_lea.vmem %s1, 24
        %v687 = vld [vmem:[%s686] sm:$0xff]
        %688 = vst [vmem:[#allocation1] ss:$2 sm:$0xff] %v429
        %s689 = scalar_lea.vmem [#allocation1], 16
        %690 = vst [vmem:[%s689] ss:$2 sm:$0xff] %v430
        %v691 = vld.sshfl [vmem:[#allocation1] sm:$0xff pattern:$0x75316420]
        %v692 = vld.sshfl [vmem:[#allocation1 + $0x8] sm:$0xff pattern:$0x75316420]
        %v693 = vld.sshfl [vmem:[#allocation1 + $0x10] sm:$0xff pattern:$0x75316420]
        %694 = vrot.lane.b32.xlu0 %v691, 125
        %v695 = vpop.permute.xlu0 %694
        %696 = vrot.lane.b32.xlu0 %v692, 125
        %v697 = vpop.permute.xlu0 %696
        %698 = vrot.lane.b32.xlu0 %v693, 125
        %v699 = vpop.permute.xlu0 %698
        %vm700 = vcmask 1022976
        %v701 = vsel %vm700, %v695, %v697
        %v702 = vsel %vm700, %v697, %v699
        %v704 = vsel %vm451, %v687, 0
        %v706 = vsel %vm455, %v701, 0
        %v708 = vsel %vm455, %v702, 0
        %v710 = vsel %vm455, %v699, 0
        %712 = vmatpush.msra.mxu0 0.0
        %713 = vmatpush.msra.mxu0 0.0
        %714 = vmatpush.msra.mxu0 0.0
        %715 = vmatpush.msra.mxu0 0.0
        %716 = vmatpush.msra.mxu0 0.0
        %717 = vmatpush.msra.mxu0 0.0
        %718 = vmatpush.msra.mxu0 0.0
        %719 = vmatpush.msra.mxu0 0.0
        %720 = vmatpush.msra.mxu0 0.0
        %721 = vmatpush.msra.mxu0 0.0
        %722 = vmatpush.msra.mxu0 0.0
        %723 = vmatpush.msra.mxu0 0.0
        %724 = vmatpush.msra.mxu0 0.0
        %725 = vmatpush.msra.mxu0 0.0
        %726 = vmatpush.msra.mxu0 0.0
        %727 = vmatpush.msra.mxu0 %v706
        %728 = vmatmul.f32.gmra.mxu0 %v704
        %v729 = vpop.f32.mrf.mxu0
        %v730 = vadd.f32 0.0, %v729
        %731 = vdwg.mxu0
        %732 = vmatpush.msra.mxu0 0.0
        %733 = vmatpush.msra.mxu0 0.0
        %734 = vmatpush.msra.mxu0 0.0
        %735 = vmatpush.msra.mxu0 0.0
        %736 = vmatpush.msra.mxu0 0.0
        %737 = vmatpush.msra.mxu0 0.0
        %738 = vmatpush.msra.mxu0 0.0
        %739 = vmatpush.msra.mxu0 0.0
        %740 = vmatpush.msra.mxu0 0.0
        %741 = vmatpush.msra.mxu0 0.0
        %742 = vmatpush.msra.mxu0 0.0
        %743 = vmatpush.msra.mxu0 0.0
        %744 = vmatpush.msra.mxu0 0.0
        %745 = vmatpush.msra.mxu0 0.0
        %746 = vmatpush.msra.mxu0 0.0
        %747 = vmatpush.msra.mxu0 %v708
        %748 = vmatmul.f32.gmra.mxu0 %v704
        %v749 = vpop.f32.mrf.mxu0
        %v750 = vadd.f32 0.0, %v749
        %751 = vdwg.mxu0
        %752 = vmatpush.msra.mxu0 0.0
        %753 = vmatpush.msra.mxu0 0.0
        %754 = vmatpush.msra.mxu0 0.0
        %755 = vmatpush.msra.mxu0 0.0
        %756 = vmatpush.msra.mxu0 0.0
        %757 = vmatpush.msra.mxu0 0.0
        %758 = vmatpush.msra.mxu0 0.0
        %759 = vmatpush.msra.mxu0 0.0
        %760 = vmatpush.msra.mxu0 0.0
        %761 = vmatpush.msra.mxu0 0.0
        %762 = vmatpush.msra.mxu0 0.0
        %763 = vmatpush.msra.mxu0 0.0
        %764 = vmatpush.msra.mxu0 0.0
        %765 = vmatpush.msra.mxu0 0.0
        %766 = vmatpush.msra.mxu0 0.0
        %767 = vmatpush.msra.mxu0 %v710
        %768 = vmatmul.f32.gmra.mxu0 %v704
        %v769 = vpop.f32.mrf.mxu0
        %v770 = vadd.f32 0.0, %v769
        %771 = vdwg.mxu0
        %v772 = vadd.f32 %v683, %v730
        %v773 = vadd.f32 %v684, %v750
        %v774 = vadd.f32 %v685, %v770
        %s775 = scalar_lea.vmem %s1, 32
        %v776 = vld [vmem:[%s775] sm:$0xff]
        %777 = vst [vmem:[#allocation1] ss:$2 sm:$0xff] %v429
        %s778 = scalar_lea.vmem [#allocation1], 16
        %779 = vst [vmem:[%s778] ss:$2 sm:$0xff] %v430
        %v780 = vld.sshfl [vmem:[#allocation1] sm:$0xff pattern:$0x75316420]
        %v781 = vld.sshfl [vmem:[#allocation1 + $0x8] sm:$0xff pattern:$0x75316420]
        %v782 = vld.sshfl [vmem:[#allocation1 + $0x10] sm:$0xff pattern:$0x75316420]
        %783 = vrot.lane.b32.xlu0 %v780, 124
        %v784 = vpop.permute.xlu0 %783
        %785 = vrot.lane.b32.xlu0 %v781, 124
        %v786 = vpop.permute.xlu0 %785
        %787 = vrot.lane.b32.xlu0 %v782, 124
        %v788 = vpop.permute.xlu0 %787
        %vm789 = vcmask 1014784
        %v790 = vsel %vm789, %v784, %v786
        %v791 = vsel %vm789, %v786, %v788
        %v793 = vsel %vm451, %v776, 0
        %v795 = vsel %vm455, %v790, 0
        %v797 = vsel %vm455, %v791, 0
        %v799 = vsel %vm455, %v788, 0
        %801 = vmatpush.msra.mxu0 0.0
        %802 = vmatpush.msra.mxu0 0.0
        %803 = vmatpush.msra.mxu0 0.0
        %804 = vmatpush.msra.mxu0 0.0
        %805 = vmatpush.msra.mxu0 0.0
        %806 = vmatpush.msra.mxu0 0.0
        %807 = vmatpush.msra.mxu0 0.0
        %808 = vmatpush.msra.mxu0 0.0
        %809 = vmatpush.msra.mxu0 0.0
        %810 = vmatpush.msra.mxu0 0.0
        %811 = vmatpush.msra.mxu0 0.0
        %812 = vmatpush.msra.mxu0 0.0
        %813 = vmatpush.msra.mxu0 0.0
        %814 = vmatpush.msra.mxu0 0.0
        %815 = vmatpush.msra.mxu0 0.0
        %816 = vmatpush.msra.mxu0 %v795
        %817 = vmatmul.f32.gmra.mxu0 %v793
        %v818 = vpop.f32.mrf.mxu0
        %v819 = vadd.f32 0.0, %v818
        %820 = vdwg.mxu0
        %821 = vmatpush.msra.mxu0 0.0
        %822 = vmatpush.msra.mxu0 0.0
        %823 = vmatpush.msra.mxu0 0.0
        %824 = vmatpush.msra.mxu0 0.0
        %825 = vmatpush.msra.mxu0 0.0
        %826 = vmatpush.msra.mxu0 0.0
        %827 = vmatpush.msra.mxu0 0.0
        %828 = vmatpush.msra.mxu0 0.0
        %829 = vmatpush.msra.mxu0 0.0
        %830 = vmatpush.msra.mxu0 0.0
        %831 = vmatpush.msra.mxu0 0.0
        %832 = vmatpush.msra.mxu0 0.0
        %833 = vmatpush.msra.mxu0 0.0
        %834 = vmatpush.msra.mxu0 0.0
        %835 = vmatpush.msra.mxu0 0.0
        %836 = vmatpush.msra.mxu0 %v797
        %837 = vmatmul.f32.gmra.mxu0 %v793
        %v838 = vpop.f32.mrf.mxu0
        %v839 = vadd.f32 0.0, %v838
        %840 = vdwg.mxu0
        %841 = vmatpush.msra.mxu0 0.0
        %842 = vmatpush.msra.mxu0 0.0
        %843 = vmatpush.msra.mxu0 0.0
        %844 = vmatpush.msra.mxu0 0.0
        %845 = vmatpush.msra.mxu0 0.0
        %846 = vmatpush.msra.mxu0 0.0
        %847 = vmatpush.msra.mxu0 0.0
        %848 = vmatpush.msra.mxu0 0.0
        %849 = vmatpush.msra.mxu0 0.0
        %850 = vmatpush.msra.mxu0 0.0
        %851 = vmatpush.msra.mxu0 0.0
        %852 = vmatpush.msra.mxu0 0.0
        %853 = vmatpush.msra.mxu0 0.0
        %854 = vmatpush.msra.mxu0 0.0
        %855 = vmatpush.msra.mxu0 0.0
        %856 = vmatpush.msra.mxu0 %v799
        %857 = vmatmul.f32.gmra.mxu0 %v793
        %v858 = vpop.f32.mrf.mxu0
        %v859 = vadd.f32 0.0, %v858
        %860 = vdwg.mxu0
        %v861 = vadd.f32 %v772, %v819
        %v862 = vadd.f32 %v773, %v839
        %v863 = vadd.f32 %v774, %v859
        %s864 = scalar_lea.vmem %s1, 40
        %v865 = vld [vmem:[%s864] sm:$0xff]
        %866 = vst [vmem:[#allocation1] ss:$2 sm:$0xff] %v429
        %s867 = scalar_lea.vmem [#allocation1], 16
        %868 = vst [vmem:[%s867] ss:$2 sm:$0xff] %v430
        %v869 = vld.sshfl [vmem:[#allocation1] sm:$0xff pattern:$0x75316420]
        %v870 = vld.sshfl [vmem:[#allocation1 + $0x8] sm:$0xff pattern:$0x75316420]
        %v871 = vld.sshfl [vmem:[#allocation1 + $0x10] sm:$0xff pattern:$0x75316420]
        %872 = vrot.lane.b32.xlu0 %v869, 108
        %v873 = vpop.permute.xlu0 %872
        %874 = vrot.lane.b32.xlu0 %v870, 108
        %v875 = vpop.permute.xlu0 %874
        %876 = vrot.lane.b32.xlu0 %v871, 108
        %v877 = vpop.permute.xlu0 %876
        %vm878 = vcmask 883712
        %v879 = vsel %vm878, %v873, %v875
        %v880 = vsel %vm878, %v875, %v877
        %v882 = vsel %vm451, %v865, 0
        %v884 = vsel %vm455, %v879, 0
        %v886 = vsel %vm455, %v880, 0
        %v888 = vsel %vm455, %v877, 0
        %890 = vmatpush.msra.mxu0 0.0
        %891 = vmatpush.msra.mxu0 0.0
        %892 = vmatpush.msra.mxu0 0.0
        %893 = vmatpush.msra.mxu0 0.0
        %894 = vmatpush.msra.mxu0 0.0
        %895 = vmatpush.msra.mxu0 0.0
        %896 = vmatpush.msra.mxu0 0.0
        %897 = vmatpush.msra.mxu0 0.0
        %898 = vmatpush.msra.mxu0 0.0
        %899 = vmatpush.msra.mxu0 0.0
        %900 = vmatpush.msra.mxu0 0.0
        %901 = vmatpush.msra.mxu0 0.0
        %902 = vmatpush.msra.mxu0 0.0
        %903 = vmatpush.msra.mxu0 0.0
        %904 = vmatpush.msra.mxu0 0.0
        %905 = vmatpush.msra.mxu0 %v884
        %906 = vmatmul.f32.gmra.mxu0 %v882
        %v907 = vpop.f32.mrf.mxu0
        %v908 = vadd.f32 0.0, %v907
        %909 = vdwg.mxu0
        %910 = vmatpush.msra.mxu0 0.0
        %911 = vmatpush.msra.mxu0 0.0
        %912 = vmatpush.msra.mxu0 0.0
        %913 = vmatpush.msra.mxu0 0.0
        %914 = vmatpush.msra.mxu0 0.0
        %915 = vmatpush.msra.mxu0 0.0
        %916 = vmatpush.msra.mxu0 0.0
        %917 = vmatpush.msra.mxu0 0.0
        %918 = vmatpush.msra.mxu0 0.0
        %919 = vmatpush.msra.mxu0 0.0
        %920 = vmatpush.msra.mxu0 0.0
        %921 = vmatpush.msra.mxu0 0.0
        %922 = vmatpush.msra.mxu0 0.0
        %923 = vmatpush.msra.mxu0 0.0
        %924 = vmatpush.msra.mxu0 0.0
        %925 = vmatpush.msra.mxu0 %v886
        %926 = vmatmul.f32.gmra.mxu0 %v882
        %v927 = vpop.f32.mrf.mxu0
        %v928 = vadd.f32 0.0, %v927
        %929 = vdwg.mxu0
        %930 = vmatpush.msra.mxu0 0.0
        %931 = vmatpush.msra.mxu0 0.0
        %932 = vmatpush.msra.mxu0 0.0
        %933 = vmatpush.msra.mxu0 0.0
        %934 = vmatpush.msra.mxu0 0.0
        %935 = vmatpush.msra.mxu0 0.0
        %936 = vmatpush.msra.mxu0 0.0
        %937 = vmatpush.msra.mxu0 0.0
        %938 = vmatpush.msra.mxu0 0.0
        %939 = vmatpush.msra.mxu0 0.0
        %940 = vmatpush.msra.mxu0 0.0
        %941 = vmatpush.msra.mxu0 0.0
        %942 = vmatpush.msra.mxu0 0.0
        %943 = vmatpush.msra.mxu0 0.0
        %944 = vmatpush.msra.mxu0 0.0
        %945 = vmatpush.msra.mxu0 %v888
        %946 = vmatmul.f32.gmra.mxu0 %v882
        %v947 = vpop.f32.mrf.mxu0
        %v948 = vadd.f32 0.0, %v947
        %949 = vdwg.mxu0
        %v950 = vadd.f32 %v861, %v908
        %v951 = vadd.f32 %v862, %v928
        %v952 = vadd.f32 %v863, %v948
        %s953 = scalar_lea.vmem %s1, 48
        %v954 = vld [vmem:[%s953] sm:$0xff]
        %955 = vst [vmem:[#allocation1] ss:$2 sm:$0xff] %v429
        %s956 = scalar_lea.vmem [#allocation1], 16
        %957 = vst [vmem:[%s956] ss:$2 sm:$0xff] %v430
        %v958 = vld.sshfl [vmem:[#allocation1] sm:$0xff pattern:$0x75316420]
        %v959 = vld.sshfl [vmem:[#allocation1 + $0x8] sm:$0xff pattern:$0x75316420]
        %v960 = vld.sshfl [vmem:[#allocation1 + $0x10] sm:$0xff pattern:$0x75316420]
        %961 = vrot.lane.b32.xlu0 %v958, 107
        %v962 = vpop.permute.xlu0 %961
        %963 = vrot.lane.b32.xlu0 %v959, 107
        %v964 = vpop.permute.xlu0 %963
        %965 = vrot.lane.b32.xlu0 %v960, 107
        %v966 = vpop.permute.xlu0 %965
        %vm967 = vcmask 875520
        %v968 = vsel %vm967, %v962, %v964
        %v969 = vsel %vm967, %v964, %v966
        %v971 = vsel %vm451, %v954, 0
        %v973 = vsel %vm455, %v968, 0
        %v975 = vsel %vm455, %v969, 0
        %v977 = vsel %vm455, %v966, 0
        %979 = vmatpush.msra.mxu0 0.0
        %980 = vmatpush.msra.mxu0 0.0
        %981 = vmatpush.msra.mxu0 0.0
        %982 = vmatpush.msra.mxu0 0.0
        %983 = vmatpush.msra.mxu0 0.0
        %984 = vmatpush.msra.mxu0 0.0
        %985 = vmatpush.msra.mxu0 0.0
        %986 = vmatpush.msra.mxu0 0.0
        %987 = vmatpush.msra.mxu0 0.0
        %988 = vmatpush.msra.mxu0 0.0
        %989 = vmatpush.msra.mxu0 0.0
        %990 = vmatpush.msra.mxu0 0.0
        %991 = vmatpush.msra.mxu0 0.0
        %992 = vmatpush.msra.mxu0 0.0
        %993 = vmatpush.msra.mxu0 0.0
        %994 = vmatpush.msra.mxu0 %v973
        %995 = vmatmul.f32.gmra.mxu0 %v971
        %v996 = vpop.f32.mrf.mxu0
        %v997 = vadd.f32 0.0, %v996
        %998 = vdwg.mxu0
        %999 = vmatpush.msra.mxu0 0.0
        %1000 = vmatpush.msra.mxu0 0.0
        %1001 = vmatpush.msra.mxu0 0.0
        %1002 = vmatpush.msra.mxu0 0.0
        %1003 = vmatpush.msra.mxu0 0.0
        %1004 = vmatpush.msra.mxu0 0.0
        %1005 = vmatpush.msra.mxu0 0.0
        %1006 = vmatpush.msra.mxu0 0.0
        %1007 = vmatpush.msra.mxu0 0.0
        %1008 = vmatpush.msra.mxu0 0.0
        %1009 = vmatpush.msra.mxu0 0.0
        %1010 = vmatpush.msra.mxu0 0.0
        %1011 = vmatpush.msra.mxu0 0.0
        %1012 = vmatpush.msra.mxu0 0.0
        %1013 = vmatpush.msra.mxu0 0.0
        %1014 = vmatpush.msra.mxu0 %v975
        %1015 = vmatmul.f32.gmra.mxu0 %v971
        %v1016 = vpop.f32.mrf.mxu0
        %v1017 = vadd.f32 0.0, %v1016
        %1018 = vdwg.mxu0
        %1019 = vmatpush.msra.mxu0 0.0
        %1020 = vmatpush.msra.mxu0 0.0
        %1021 = vmatpush.msra.mxu0 0.0
        %1022 = vmatpush.msra.mxu0 0.0
        %1023 = vmatpush.msra.mxu0 0.0
        %1024 = vmatpush.msra.mxu0 0.0
        %1025 = vmatpush.msra.mxu0 0.0
        %1026 = vmatpush.msra.mxu0 0.0
        %1027 = vmatpush.msra.mxu0 0.0
        %1028 = vmatpush.msra.mxu0 0.0
        %1029 = vmatpush.msra.mxu0 0.0
        %1030 = vmatpush.msra.mxu0 0.0
        %1031 = vmatpush.msra.mxu0 0.0
        %1032 = vmatpush.msra.mxu0 0.0
        %1033 = vmatpush.msra.mxu0 0.0
        %1034 = vmatpush.msra.mxu0 %v977
        %1035 = vmatmul.f32.gmra.mxu0 %v971
        %v1036 = vpop.f32.mrf.mxu0
        %v1037 = vadd.f32 0.0, %v1036
        %1038 = vdwg.mxu0
        %v1039 = vadd.f32 %v950, %v997
        %v1040 = vadd.f32 %v951, %v1017
        %v1041 = vadd.f32 %v952, %v1037
        %s1042 = scalar_lea.vmem %s1, 56
        %v1043 = vld [vmem:[%s1042] sm:$0xff]
        %1044 = vst [vmem:[#allocation1] ss:$2 sm:$0xff] %v429
        %s1045 = scalar_lea.vmem [#allocation1], 16
        %1046 = vst [vmem:[%s1045] ss:$2 sm:$0xff] %v430
        %v1047 = vld.sshfl [vmem:[#allocation1] sm:$0xff pattern:$0x75316420]
        %v1048 = vld.sshfl [vmem:[#allocation1 + $0x8] sm:$0xff pattern:$0x75316420]
        %v1049 = vld.sshfl [vmem:[#allocation1 + $0x10] sm:$0xff pattern:$0x75316420]
        %1050 = vrot.lane.b32.xlu0 %v1047, 106
        %v1051 = vpop.permute.xlu0 %1050
        %1052 = vrot.lane.b32.xlu0 %v1048, 106
        %v1053 = vpop.permute.xlu0 %1052
        %1054 = vrot.lane.b32.xlu0 %v1049, 106
        %v1055 = vpop.permute.xlu0 %1054
        %vm1056 = vcmask 867328
        %v1057 = vsel %vm1056, %v1051, %v1053
        %v1058 = vsel %vm1056, %v1053, %v1055
        %v1060 = vsel %vm451, %v1043, 0
        %v1062 = vsel %vm455, %v1057, 0
        %v1064 = vsel %vm455, %v1058, 0
        %v1066 = vsel %vm455, %v1055, 0
        %1068 = vmatpush.msra.mxu0 0.0
        %1069 = vmatpush.msra.mxu0 0.0
        %1070 = vmatpush.msra.mxu0 0.0
        %1071 = vmatpush.msra.mxu0 0.0
        %1072 = vmatpush.msra.mxu0 0.0
        %1073 = vmatpush.msra.mxu0 0.0
        %1074 = vmatpush.msra.mxu0 0.0
        %1075 = vmatpush.msra.mxu0 0.0
        %1076 = vmatpush.msra.mxu0 0.0
        %1077 = vmatpush.msra.mxu0 0.0
        %1078 = vmatpush.msra.mxu0 0.0
        %1079 = vmatpush.msra.mxu0 0.0
        %1080 = vmatpush.msra.mxu0 0.0
        %1081 = vmatpush.msra.mxu0 0.0
        %1082 = vmatpush.msra.mxu0 0.0
        %1083 = vmatpush.msra.mxu0 %v1062
        %1084 = vmatmul.f32.gmra.mxu0 %v1060
        %v1085 = vpop.f32.mrf.mxu0
        %v1086 = vadd.f32 0.0, %v1085
        %1087 = vdwg.mxu0
        %1088 = vmatpush.msra.mxu0 0.0
        %1089 = vmatpush.msra.mxu0 0.0
        %1090 = vmatpush.msra.mxu0 0.0
        %1091 = vmatpush.msra.mxu0 0.0
        %1092 = vmatpush.msra.mxu0 0.0
        %1093 = vmatpush.msra.mxu0 0.0
        %1094 = vmatpush.msra.mxu0 0.0
        %1095 = vmatpush.msra.mxu0 0.0
        %1096 = vmatpush.msra.mxu0 0.0
        %1097 = vmatpush.msra.mxu0 0.0
        %1098 = vmatpush.msra.mxu0 0.0
        %1099 = vmatpush.msra.mxu0 0.0
        %1100 = vmatpush.msra.mxu0 0.0
        %1101 = vmatpush.msra.mxu0 0.0
        %1102 = vmatpush.msra.mxu0 0.0
        %1103 = vmatpush.msra.mxu0 %v1064
        %1104 = vmatmul.f32.gmra.mxu0 %v1060
        %v1105 = vpop.f32.mrf.mxu0
        %v1106 = vadd.f32 0.0, %v1105
        %1107 = vdwg.mxu0
        %1108 = vmatpush.msra.mxu0 0.0
        %1109 = vmatpush.msra.mxu0 0.0
        %1110 = vmatpush.msra.mxu0 0.0
        %1111 = vmatpush.msra.mxu0 0.0
        %1112 = vmatpush.msra.mxu0 0.0
        %1113 = vmatpush.msra.mxu0 0.0
        %1114 = vmatpush.msra.mxu0 0.0
        %1115 = vmatpush.msra.mxu0 0.0
        %1116 = vmatpush.msra.mxu0 0.0
        %1117 = vmatpush.msra.mxu0 0.0
        %1118 = vmatpush.msra.mxu0 0.0
        %1119 = vmatpush.msra.mxu0 0.0
        %1120 = vmatpush.msra.mxu0 0.0
        %1121 = vmatpush.msra.mxu0 0.0
        %1122 = vmatpush.msra.mxu0 0.0
        %1123 = vmatpush.msra.mxu0 %v1066
        %1124 = vmatmul.f32.gmra.mxu0 %v1060
        %v1125 = vpop.f32.mrf.mxu0
        %v1126 = vadd.f32 0.0, %v1125
        %1127 = vdwg.mxu0
        %v1128 = vadd.f32 %v1039, %v1086
        %v1129 = vadd.f32 %v1040, %v1106
        %v1130 = vadd.f32 %v1041, %v1126
        %s1131 = scalar_lea.vmem %s1, 64
        %v1132 = vld [vmem:[%s1131] sm:$0xff]
        %1133 = vst [vmem:[#allocation1] ss:$2 sm:$0xff] %v429
        %s1134 = scalar_lea.vmem [#allocation1], 16
        %1135 = vst [vmem:[%s1134] ss:$2 sm:$0xff] %v430
        %v1136 = vld.sshfl [vmem:[#allocation1] sm:$0xff pattern:$0x75316420]
        %v1137 = vld.sshfl [vmem:[#allocation1 + $0x8] sm:$0xff pattern:$0x75316420]
        %v1138 = vld.sshfl [vmem:[#allocation1 + $0x10] sm:$0xff pattern:$0x75316420]
        %1139 = vrot.lane.b32.xlu0 %v1136, 105
        %v1140 = vpop.permute.xlu0 %1139
        %1141 = vrot.lane.b32.xlu0 %v1137, 105
        %v1142 = vpop.permute.xlu0 %1141
        %1143 = vrot.lane.b32.xlu0 %v1138, 105
        %v1144 = vpop.permute.xlu0 %1143
        %vm1145 = vcmask 859136
        %v1146 = vsel %vm1145, %v1140, %v1142
        %v1147 = vsel %vm1145, %v1142, %v1144
        %v1149 = vsel %vm451, %v1132, 0
        %v1151 = vsel %vm455, %v1146, 0
        %v1153 = vsel %vm455, %v1147, 0
        %v1155 = vsel %vm455, %v1144, 0
        %1157 = vmatpush.msra.mxu0 0.0
        %1158 = vmatpush.msra.mxu0 0.0
        %1159 = vmatpush.msra.mxu0 0.0
        %1160 = vmatpush.msra.mxu0 0.0
        %1161 = vmatpush.msra.mxu0 0.0
        %1162 = vmatpush.msra.mxu0 0.0
        %1163 = vmatpush.msra.mxu0 0.0
        %1164 = vmatpush.msra.mxu0 0.0
        %1165 = vmatpush.msra.mxu0 0.0
        %1166 = vmatpush.msra.mxu0 0.0
        %1167 = vmatpush.msra.mxu0 0.0
        %1168 = vmatpush.msra.mxu0 0.0
        %1169 = vmatpush.msra.mxu0 0.0
        %1170 = vmatpush.msra.mxu0 0.0
        %1171 = vmatpush.msra.mxu0 0.0
        %1172 = vmatpush.msra.mxu0 %v1151
        %1173 = vmatmul.f32.gmra.mxu0 %v1149
        %v1174 = vpop.f32.mrf.mxu0
        %v1175 = vadd.f32 0.0, %v1174
        %1176 = vdwg.mxu0
        %1177 = vmatpush.msra.mxu0 0.0
        %1178 = vmatpush.msra.mxu0 0.0
        %1179 = vmatpush.msra.mxu0 0.0
        %1180 = vmatpush.msra.mxu0 0.0
        %1181 = vmatpush.msra.mxu0 0.0
        %1182 = vmatpush.msra.mxu0 0.0
        %1183 = vmatpush.msra.mxu0 0.0
        %1184 = vmatpush.msra.mxu0 0.0
        %1185 = vmatpush.msra.mxu0 0.0
        %1186 = vmatpush.msra.mxu0 0.0
        %1187 = vmatpush.msra.mxu0 0.0
        %1188 = vmatpush.msra.mxu0 0.0
        %1189 = vmatpush.msra.mxu0 0.0
        %1190 = vmatpush.msra.mxu0 0.0
        %1191 = vmatpush.msra.mxu0 0.0
        %1192 = vmatpush.msra.mxu0 %v1153
        %1193 = vmatmul.f32.gmra.mxu0 %v1149
        %v1194 = vpop.f32.mrf.mxu0
        %v1195 = vadd.f32 0.0, %v1194
        %1196 = vdwg.mxu0
        %1197 = vmatpush.msra.mxu0 0.0
        %1198 = vmatpush.msra.mxu0 0.0
        %1199 = vmatpush.msra.mxu0 0.0
        %1200 = vmatpush.msra.mxu0 0.0
        %1201 = vmatpush.msra.mxu0 0.0
        %1202 = vmatpush.msra.mxu0 0.0
        %1203 = vmatpush.msra.mxu0 0.0
        %1204 = vmatpush.msra.mxu0 0.0
        %1205 = vmatpush.msra.mxu0 0.0
        %1206 = vmatpush.msra.mxu0 0.0
        %1207 = vmatpush.msra.mxu0 0.0
        %1208 = vmatpush.msra.mxu0 0.0
        %1209 = vmatpush.msra.mxu0 0.0
        %1210 = vmatpush.msra.mxu0 0.0
        %1211 = vmatpush.msra.mxu0 0.0
        %1212 = vmatpush.msra.mxu0 %v1155
        %1213 = vmatmul.f32.gmra.mxu0 %v1149
        %v1214 = vpop.f32.mrf.mxu0
        %v1215 = vadd.f32 0.0, %v1214
        %1216 = vdwg.mxu0
        %v1217 = vadd.f32 %v1128, %v1175
        %v1218 = vadd.f32 %v1129, %v1195
        %v1219 = vadd.f32 %v1130, %v1215
        %s1220 = scalar_lea.vmem %s1, 72
        %v1221 = vld [vmem:[%s1220] sm:$0xff]
        %1222 = vst [vmem:[#allocation1] ss:$2 sm:$0xff] %v429
        %s1223 = scalar_lea.vmem [#allocation1], 16
        %1224 = vst [vmem:[%s1223] ss:$2 sm:$0xff] %v430
        %v1225 = vld.sshfl [vmem:[#allocation1] sm:$0xff pattern:$0x75316420]
        %v1226 = vld.sshfl [vmem:[#allocation1 + $0x8] sm:$0xff pattern:$0x75316420]
        %v1227 = vld.sshfl [vmem:[#allocation1 + $0x10] sm:$0xff pattern:$0x75316420]
        %1228 = vrot.lane.b32.xlu0 %v1225, 104
        %v1229 = vpop.permute.xlu0 %1228
        %1230 = vrot.lane.b32.xlu0 %v1226, 104
        %v1231 = vpop.permute.xlu0 %1230
        %1232 = vrot.lane.b32.xlu0 %v1227, 104
        %v1233 = vpop.permute.xlu0 %1232
        %vm1234 = vcmask 850944
        %v1235 = vsel %vm1234, %v1229, %v1231
        %v1236 = vsel %vm1234, %v1231, %v1233
        %v1238 = vsel %vm451, %v1221, 0
        %v1240 = vsel %vm455, %v1235, 0
        %v1242 = vsel %vm455, %v1236, 0
        %v1244 = vsel %vm455, %v1233, 0
        %1246 = vmatpush.msra.mxu0 0.0
        %1247 = vmatpush.msra.mxu0 0.0
        %1248 = vmatpush.msra.mxu0 0.0
        %1249 = vmatpush.msra.mxu0 0.0
        %1250 = vmatpush.msra.mxu0 0.0
        %1251 = vmatpush.msra.mxu0 0.0
        %1252 = vmatpush.msra.mxu0 0.0
        %1253 = vmatpush.msra.mxu0 0.0
        %1254 = vmatpush.msra.mxu0 0.0
        %1255 = vmatpush.msra.mxu0 0.0
        %1256 = vmatpush.msra.mxu0 0.0
        %1257 = vmatpush.msra.mxu0 0.0
        %1258 = vmatpush.msra.mxu0 0.0
        %1259 = vmatpush.msra.mxu0 0.0
        %1260 = vmatpush.msra.mxu0 0.0
        %1261 = vmatpush.msra.mxu0 %v1240
        %1262 = vmatmul.f32.gmra.mxu0 %v1238
        %v1263 = vpop.f32.mrf.mxu0
        %v1264 = vadd.f32 0.0, %v1263
        %1265 = vdwg.mxu0
        %1266 = vmatpush.msra.mxu0 0.0
        %1267 = vmatpush.msra.mxu0 0.0
        %1268 = vmatpush.msra.mxu0 0.0
        %1269 = vmatpush.msra.mxu0 0.0
        %1270 = vmatpush.msra.mxu0 0.0
        %1271 = vmatpush.msra.mxu0 0.0
        %1272 = vmatpush.msra.mxu0 0.0
        %1273 = vmatpush.msra.mxu0 0.0
        %1274 = vmatpush.msra.mxu0 0.0
        %1275 = vmatpush.msra.mxu0 0.0
        %1276 = vmatpush.msra.mxu0 0.0
        %1277 = vmatpush.msra.mxu0 0.0
        %1278 = vmatpush.msra.mxu0 0.0
        %1279 = vmatpush.msra.mxu0 0.0
        %1280 = vmatpush.msra.mxu0 0.0
        %1281 = vmatpush.msra.mxu0 %v1242
        %1282 = vmatmul.f32.gmra.mxu0 %v1238
        %v1283 = vpop.f32.mrf.mxu0
        %v1284 = vadd.f32 0.0, %v1283
        %1285 = vdwg.mxu0
        %1286 = vmatpush.msra.mxu0 0.0
        %1287 = vmatpush.msra.mxu0 0.0
        %1288 = vmatpush.msra.mxu0 0.0
        %1289 = vmatpush.msra.mxu0 0.0
        %1290 = vmatpush.msra.mxu0 0.0
        %1291 = vmatpush.msra.mxu0 0.0
        %1292 = vmatpush.msra.mxu0 0.0
        %1293 = vmatpush.msra.mxu0 0.0
        %1294 = vmatpush.msra.mxu0 0.0
        %1295 = vmatpush.msra.mxu0 0.0
        %1296 = vmatpush.msra.mxu0 0.0
        %1297 = vmatpush.msra.mxu0 0.0
        %1298 = vmatpush.msra.mxu0 0.0
        %1299 = vmatpush.msra.mxu0 0.0
        %1300 = vmatpush.msra.mxu0 0.0
        %1301 = vmatpush.msra.mxu0 %v1244
        %1302 = vmatmul.f32.gmra.mxu0 %v1238
        %v1303 = vpop.f32.mrf.mxu0
        %v1304 = vadd.f32 0.0, %v1303
        %1305 = vdwg.mxu0
        %v1306 = vadd.f32 %v1217, %v1264
        %v1307 = vadd.f32 %v1218, %v1284
        %v1308 = vadd.f32 %v1219, %v1304
        %s1309 = scalar_lea.vmem %s1, 80
        %v1310 = vld [vmem:[%s1309] sm:$0xff]
        %1311 = vst [vmem:[#allocation1] ss:$2 sm:$0xff] %v429
        %s1312 = scalar_lea.vmem [#allocation1], 16
        %1313 = vst [vmem:[%s1312] ss:$2 sm:$0xff] %v430
        %v1314 = vld.sshfl [vmem:[#allocation1] sm:$0xff pattern:$0x75316420]
        %v1315 = vld.sshfl [vmem:[#allocation1 + $0x8] sm:$0xff pattern:$0x75316420]
        %v1316 = vld.sshfl [vmem:[#allocation1 + $0x10] sm:$0xff pattern:$0x75316420]
        %1317 = vrot.lane.b32.xlu0 %v1314, 88
        %v1318 = vpop.permute.xlu0 %1317
        %1319 = vrot.lane.b32.xlu0 %v1315, 88
        %v1320 = vpop.permute.xlu0 %1319
        %1321 = vrot.lane.b32.xlu0 %v1316, 88
        %v1322 = vpop.permute.xlu0 %1321
        %vm1323 = vcmask 719872
        %v1324 = vsel %vm1323, %v1318, %v1320
        %v1325 = vsel %vm1323, %v1320, %v1322
        %v1327 = vsel %vm451, %v1310, 0
        %v1329 = vsel %vm455, %v1324, 0
        %v1331 = vsel %vm455, %v1325, 0
        %v1333 = vsel %vm455, %v1322, 0
        %1335 = vmatpush.msra.mxu0 0.0
        %1336 = vmatpush.msra.mxu0 0.0
        %1337 = vmatpush.msra.mxu0 0.0
        %1338 = vmatpush.msra.mxu0 0.0
        %1339 = vmatpush.msra.mxu0 0.0
        %1340 = vmatpush.msra.mxu0 0.0
        %1341 = vmatpush.msra.mxu0 0.0
        %1342 = vmatpush.msra.mxu0 0.0
        %1343 = vmatpush.msra.mxu0 0.0
        %1344 = vmatpush.msra.mxu0 0.0
        %1345 = vmatpush.msra.mxu0 0.0
        %1346 = vmatpush.msra.mxu0 0.0
        %1347 = vmatpush.msra.mxu0 0.0
        %1348 = vmatpush.msra.mxu0 0.0
        %1349 = vmatpush.msra.mxu0 0.0
        %1350 = vmatpush.msra.mxu0 %v1329
        %1351 = vmatmul.f32.gmra.mxu0 %v1327
        %v1352 = vpop.f32.mrf.mxu0
        %v1353 = vadd.f32 0.0, %v1352
        %1354 = vdwg.mxu0
        %1355 = vmatpush.msra.mxu0 0.0
        %1356 = vmatpush.msra.mxu0 0.0
        %1357 = vmatpush.msra.mxu0 0.0
        %1358 = vmatpush.msra.mxu0 0.0
        %1359 = vmatpush.msra.mxu0 0.0
        %1360 = vmatpush.msra.mxu0 0.0
        %1361 = vmatpush.msra.mxu0 0.0
        %1362 = vmatpush.msra.mxu0 0.0
        %1363 = vmatpush.msra.mxu0 0.0
        %1364 = vmatpush.msra.mxu0 0.0
        %1365 = vmatpush.msra.mxu0 0.0
        %1366 = vmatpush.msra.mxu0 0.0
        %1367 = vmatpush.msra.mxu0 0.0
        %1368 = vmatpush.msra.mxu0 0.0
        %1369 = vmatpush.msra.mxu0 0.0
        %1370 = vmatpush.msra.mxu0 %v1331
        %1371 = vmatmul.f32.gmra.mxu0 %v1327
        %v1372 = vpop.f32.mrf.mxu0
        %v1373 = vadd.f32 0.0, %v1372
        %1374 = vdwg.mxu0
        %1375 = vmatpush.msra.mxu0 0.0
        %1376 = vmatpush.msra.mxu0 0.0
        %1377 = vmatpush.msra.mxu0 0.0
        %1378 = vmatpush.msra.mxu0 0.0
        %1379 = vmatpush.msra.mxu0 0.0
        %1380 = vmatpush.msra.mxu0 0.0
        %1381 = vmatpush.msra.mxu0 0.0
        %1382 = vmatpush.msra.mxu0 0.0
        %1383 = vmatpush.msra.mxu0 0.0
        %1384 = vmatpush.msra.mxu0 0.0
        %1385 = vmatpush.msra.mxu0 0.0
        %1386 = vmatpush.msra.mxu0 0.0
        %1387 = vmatpush.msra.mxu0 0.0
        %1388 = vmatpush.msra.mxu0 0.0
        %1389 = vmatpush.msra.mxu0 0.0
        %1390 = vmatpush.msra.mxu0 %v1333
        %1391 = vmatmul.f32.gmra.mxu0 %v1327
        %v1392 = vpop.f32.mrf.mxu0
        %v1393 = vadd.f32 0.0, %v1392
        %1394 = vdwg.mxu0
        %v1395 = vadd.f32 %v1306, %v1353
        %v1396 = vadd.f32 %v1307, %v1373
        %v1397 = vadd.f32 %v1308, %v1393
        %s1398 = scalar_lea.vmem %s1, 88
        %v1399 = vld [vmem:[%s1398] sm:$0xff]
        %1400 = vst [vmem:[#allocation1] ss:$2 sm:$0xff] %v429
        %s1401 = scalar_lea.vmem [#allocation1], 16
        %1402 = vst [vmem:[%s1401] ss:$2 sm:$0xff] %v430
        %v1403 = vld.sshfl [vmem:[#allocation1] sm:$0xff pattern:$0x75316420]
        %v1404 = vld.sshfl [vmem:[#allocation1 + $0x8] sm:$0xff pattern:$0x75316420]
        %v1405 = vld.sshfl [vmem:[#allocation1 + $0x10] sm:$0xff pattern:$0x75316420]
        %1406 = vrot.lane.b32.xlu0 %v1403, 87
        %v1407 = vpop.permute.xlu0 %1406
        %1408 = vrot.lane.b32.xlu0 %v1404, 87
        %v1409 = vpop.permute.xlu0 %1408
        %1410 = vrot.lane.b32.xlu0 %v1405, 87
        %v1411 = vpop.permute.xlu0 %1410
        %vm1412 = vcmask 711680
        %v1413 = vsel %vm1412, %v1407, %v1409
        %v1414 = vsel %vm1412, %v1409, %v1411
        %v1416 = vsel %vm451, %v1399, 0
        %v1418 = vsel %vm455, %v1413, 0
        %v1420 = vsel %vm455, %v1414, 0
        %v1422 = vsel %vm455, %v1411, 0
        %1424 = vmatpush.msra.mxu0 0.0
        %1425 = vmatpush.msra.mxu0 0.0
        %1426 = vmatpush.msra.mxu0 0.0
        %1427 = vmatpush.msra.mxu0 0.0
        %1428 = vmatpush.msra.mxu0 0.0
        %1429 = vmatpush.msra.mxu0 0.0
        %1430 = vmatpush.msra.mxu0 0.0
        %1431 = vmatpush.msra.mxu0 0.0
        %1432 = vmatpush.msra.mxu0 0.0
        %1433 = vmatpush.msra.mxu0 0.0
        %1434 = vmatpush.msra.mxu0 0.0
        %1435 = vmatpush.msra.mxu0 0.0
        %1436 = vmatpush.msra.mxu0 0.0
        %1437 = vmatpush.msra.mxu0 0.0
        %1438 = vmatpush.msra.mxu0 0.0
        %1439 = vmatpush.msra.mxu0 %v1418
        %1440 = vmatmul.f32.gmra.mxu0 %v1416
        %v1441 = vpop.f32.mrf.mxu0
        %v1442 = vadd.f32 0.0, %v1441
        %1443 = vdwg.mxu0
        %1444 = vmatpush.msra.mxu0 0.0
        %1445 = vmatpush.msra.mxu0 0.0
        %1446 = vmatpush.msra.mxu0 0.0
        %1447 = vmatpush.msra.mxu0 0.0
        %1448 = vmatpush.msra.mxu0 0.0
        %1449 = vmatpush.msra.mxu0 0.0
        %1450 = vmatpush.msra.mxu0 0.0
        %1451 = vmatpush.msra.mxu0 0.0
        %1452 = vmatpush.msra.mxu0 0.0
        %1453 = vmatpush.msra.mxu0 0.0
        %1454 = vmatpush.msra.mxu0 0.0
        %1455 = vmatpush.msra.mxu0 0.0
        %1456 = vmatpush.msra.mxu0 0.0
        %1457 = vmatpush.msra.mxu0 0.0
        %1458 = vmatpush.msra.mxu0 0.0
        %1459 = vmatpush.msra.mxu0 %v1420
        %1460 = vmatmul.f32.gmra.mxu0 %v1416
        %v1461 = vpop.f32.mrf.mxu0
        %v1462 = vadd.f32 0.0, %v1461
        %1463 = vdwg.mxu0
        %1464 = vmatpush.msra.mxu0 0.0
        %1465 = vmatpush.msra.mxu0 0.0
        %1466 = vmatpush.msra.mxu0 0.0
        %1467 = vmatpush.msra.mxu0 0.0
        %1468 = vmatpush.msra.mxu0 0.0
        %1469 = vmatpush.msra.mxu0 0.0
        %1470 = vmatpush.msra.mxu0 0.0
        %1471 = vmatpush.msra.mxu0 0.0
        %1472 = vmatpush.msra.mxu0 0.0
        %1473 = vmatpush.msra.mxu0 0.0
        %1474 = vmatpush.msra.mxu0 0.0
        %1475 = vmatpush.msra.mxu0 0.0
        %1476 = vmatpush.msra.mxu0 0.0
        %1477 = vmatpush.msra.mxu0 0.0
        %1478 = vmatpush.msra.mxu0 0.0
        %1479 = vmatpush.msra.mxu0 %v1422
        %1480 = vmatmul.f32.gmra.mxu0 %v1416
        %v1481 = vpop.f32.mrf.mxu0
        %v1482 = vadd.f32 0.0, %v1481
        %1483 = vdwg.mxu0
        %v1484 = vadd.f32 %v1395, %v1442
        %v1485 = vadd.f32 %v1396, %v1462
        %v1486 = vadd.f32 %v1397, %v1482
        %s1487 = scalar_lea.vmem %s1, 96
        %v1488 = vld [vmem:[%s1487] sm:$0xff]
        %1489 = vst [vmem:[#allocation1] ss:$2 sm:$0xff] %v429
        %s1490 = scalar_lea.vmem [#allocation1], 16
        %1491 = vst [vmem:[%s1490] ss:$2 sm:$0xff] %v430
        %v1492 = vld.sshfl [vmem:[#allocation1] sm:$0xff pattern:$0x75316420]
        %v1493 = vld.sshfl [vmem:[#allocation1 + $0x8] sm:$0xff pattern:$0x75316420]
        %v1494 = vld.sshfl [vmem:[#allocation1 + $0x10] sm:$0xff pattern:$0x75316420]
        %1495 = vrot.lane.b32.xlu0 %v1492, 86
        %v1496 = vpop.permute.xlu0 %1495
        %1497 = vrot.lane.b32.xlu0 %v1493, 86
        %v1498 = vpop.permute.xlu0 %1497
        %1499 = vrot.lane.b32.xlu0 %v1494, 86
        %v1500 = vpop.permute.xlu0 %1499
        %vm1501 = vcmask 703488
        %v1502 = vsel %vm1501, %v1496, %v1498
        %v1503 = vsel %vm1501, %v1498, %v1500
        %v1505 = vsel %vm451, %v1488, 0
        %v1507 = vsel %vm455, %v1502, 0
        %v1509 = vsel %vm455, %v1503, 0
        %v1511 = vsel %vm455, %v1500, 0
        %1513 = vmatpush.msra.mxu0 0.0
        %1514 = vmatpush.msra.mxu0 0.0
        %1515 = vmatpush.msra.mxu0 0.0
        %1516 = vmatpush.msra.mxu0 0.0
        %1517 = vmatpush.msra.mxu0 0.0
        %1518 = vmatpush.msra.mxu0 0.0
        %1519 = vmatpush.msra.mxu0 0.0
        %1520 = vmatpush.msra.mxu0 0.0
        %1521 = vmatpush.msra.mxu0 0.0
        %1522 = vmatpush.msra.mxu0 0.0
        %1523 = vmatpush.msra.mxu0 0.0
        %1524 = vmatpush.msra.mxu0 0.0
        %1525 = vmatpush.msra.mxu0 0.0
        %1526 = vmatpush.msra.mxu0 0.0
        %1527 = vmatpush.msra.mxu0 0.0
        %1528 = vmatpush.msra.mxu0 %v1507
        %1529 = vmatmul.f32.gmra.mxu0 %v1505
        %v1530 = vpop.f32.mrf.mxu0
        %v1531 = vadd.f32 0.0, %v1530
        %1532 = vdwg.mxu0
        %1533 = vmatpush.msra.mxu0 0.0
        %1534 = vmatpush.msra.mxu0 0.0
        %1535 = vmatpush.msra.mxu0 0.0
        %1536 = vmatpush.msra.mxu0 0.0
        %1537 = vmatpush.msra.mxu0 0.0
        %1538 = vmatpush.msra.mxu0 0.0
        %1539 = vmatpush.msra.mxu0 0.0
        %1540 = vmatpush.msra.mxu0 0.0
        %1541 = vmatpush.msra.mxu0 0.0
        %1542 = vmatpush.msra.mxu0 0.0
        %1543 = vmatpush.msra.mxu0 0.0
        %1544 = vmatpush.msra.mxu0 0.0
        %1545 = vmatpush.msra.mxu0 0.0
        %1546 = vmatpush.msra.mxu0 0.0
        %1547 = vmatpush.msra.mxu0 0.0
        %1548 = vmatpush.msra.mxu0 %v1509
        %1549 = vmatmul.f32.gmra.mxu0 %v1505
        %v1550 = vpop.f32.mrf.mxu0
        %v1551 = vadd.f32 0.0, %v1550
        %1552 = vdwg.mxu0
        %1553 = vmatpush.msra.mxu0 0.0
        %1554 = vmatpush.msra.mxu0 0.0
        %1555 = vmatpush.msra.mxu0 0.0
        %1556 = vmatpush.msra.mxu0 0.0
        %1557 = vmatpush.msra.mxu0 0.0
        %1558 = vmatpush.msra.mxu0 0.0
        %1559 = vmatpush.msra.mxu0 0.0
        %1560 = vmatpush.msra.mxu0 0.0
        %1561 = vmatpush.msra.mxu0 0.0
        %1562 = vmatpush.msra.mxu0 0.0
        %1563 = vmatpush.msra.mxu0 0.0
        %1564 = vmatpush.msra.mxu0 0.0
        %1565 = vmatpush.msra.mxu0 0.0
        %1566 = vmatpush.msra.mxu0 0.0
        %1567 = vmatpush.msra.mxu0 0.0
        %1568 = vmatpush.msra.mxu0 %v1511
        %1569 = vmatmul.f32.gmra.mxu0 %v1505
        %v1570 = vpop.f32.mrf.mxu0
        %v1571 = vadd.f32 0.0, %v1570
        %1572 = vdwg.mxu0
        %v1573 = vadd.f32 %v1484, %v1531
        %v1574 = vadd.f32 %v1485, %v1551
        %v1575 = vadd.f32 %v1486, %v1571
        %s1576 = scalar_lea.vmem %s1, 104
        %v1577 = vld [vmem:[%s1576] sm:$0xff]
        %1578 = vst [vmem:[#allocation1] ss:$2 sm:$0xff] %v429
        %s1579 = scalar_lea.vmem [#allocation1], 16
        %1580 = vst [vmem:[%s1579] ss:$2 sm:$0xff] %v430
        %v1581 = vld.sshfl [vmem:[#allocation1] sm:$0xff pattern:$0x75316420]
        %v1582 = vld.sshfl [vmem:[#allocation1 + $0x8] sm:$0xff pattern:$0x75316420]
        %v1583 = vld.sshfl [vmem:[#allocation1 + $0x10] sm:$0xff pattern:$0x75316420]
        %1584 = vrot.lane.b32.xlu0 %v1581, 85
        %v1585 = vpop.permute.xlu0 %1584
        %1586 = vrot.lane.b32.xlu0 %v1582, 85
        %v1587 = vpop.permute.xlu0 %1586
        %1588 = vrot.lane.b32.xlu0 %v1583, 85
        %v1589 = vpop.permute.xlu0 %1588
        %vm1590 = vcmask 695296
        %v1591 = vsel %vm1590, %v1585, %v1587
        %v1592 = vsel %vm1590, %v1587, %v1589
        %v1594 = vsel %vm451, %v1577, 0
        %v1596 = vsel %vm455, %v1591, 0
        %v1598 = vsel %vm455, %v1592, 0
        %v1600 = vsel %vm455, %v1589, 0
        %1602 = vmatpush.msra.mxu0 0.0
        %1603 = vmatpush.msra.mxu0 0.0
        %1604 = vmatpush.msra.mxu0 0.0
        %1605 = vmatpush.msra.mxu0 0.0
        %1606 = vmatpush.msra.mxu0 0.0
        %1607 = vmatpush.msra.mxu0 0.0
        %1608 = vmatpush.msra.mxu0 0.0
        %1609 = vmatpush.msra.mxu0 0.0
        %1610 = vmatpush.msra.mxu0 0.0
        %1611 = vmatpush.msra.mxu0 0.0
        %1612 = vmatpush.msra.mxu0 0.0
        %1613 = vmatpush.msra.mxu0 0.0
        %1614 = vmatpush.msra.mxu0 0.0
        %1615 = vmatpush.msra.mxu0 0.0
        %1616 = vmatpush.msra.mxu0 0.0
        %1617 = vmatpush.msra.mxu0 %v1596
        %1618 = vmatmul.f32.gmra.mxu0 %v1594
        %v1619 = vpop.f32.mrf.mxu0
        %v1620 = vadd.f32 0.0, %v1619
        %1621 = vdwg.mxu0
        %1622 = vmatpush.msra.mxu0 0.0
        %1623 = vmatpush.msra.mxu0 0.0
        %1624 = vmatpush.msra.mxu0 0.0
        %1625 = vmatpush.msra.mxu0 0.0
        %1626 = vmatpush.msra.mxu0 0.0
        %1627 = vmatpush.msra.mxu0 0.0
        %1628 = vmatpush.msra.mxu0 0.0
        %1629 = vmatpush.msra.mxu0 0.0
        %1630 = vmatpush.msra.mxu0 0.0
        %1631 = vmatpush.msra.mxu0 0.0
        %1632 = vmatpush.msra.mxu0 0.0
        %1633 = vmatpush.msra.mxu0 0.0
        %1634 = vmatpush.msra.mxu0 0.0
        %1635 = vmatpush.msra.mxu0 0.0
        %1636 = vmatpush.msra.mxu0 0.0
        %1637 = vmatpush.msra.mxu0 %v1598
        %1638 = vmatmul.f32.gmra.mxu0 %v1594
        %v1639 = vpop.f32.mrf.mxu0
        %v1640 = vadd.f32 0.0, %v1639
        %1641 = vdwg.mxu0
        %1642 = vmatpush.msra.mxu0 0.0
        %1643 = vmatpush.msra.mxu0 0.0
        %1644 = vmatpush.msra.mxu0 0.0
        %1645 = vmatpush.msra.mxu0 0.0
        %1646 = vmatpush.msra.mxu0 0.0
        %1647 = vmatpush.msra.mxu0 0.0
        %1648 = vmatpush.msra.mxu0 0.0
        %1649 = vmatpush.msra.mxu0 0.0
        %1650 = vmatpush.msra.mxu0 0.0
        %1651 = vmatpush.msra.mxu0 0.0
        %1652 = vmatpush.msra.mxu0 0.0
        %1653 = vmatpush.msra.mxu0 0.0
        %1654 = vmatpush.msra.mxu0 0.0
        %1655 = vmatpush.msra.mxu0 0.0
        %1656 = vmatpush.msra.mxu0 0.0
        %1657 = vmatpush.msra.mxu0 %v1600
        %1658 = vmatmul.f32.gmra.mxu0 %v1594
        %v1659 = vpop.f32.mrf.mxu0
        %v1660 = vadd.f32 0.0, %v1659
        %1661 = vdwg.mxu0
        %v1662 = vadd.f32 %v1573, %v1620
        %v1663 = vadd.f32 %v1574, %v1640
        %v1664 = vadd.f32 %v1575, %v1660
        %s1665 = scalar_lea.vmem %s1, 112
        %v1666 = vld [vmem:[%s1665] sm:$0xff]
        %1667 = vst [vmem:[#allocation1] ss:$2 sm:$0xff] %v429
        %s1668 = scalar_lea.vmem [#allocation1], 16
        %1669 = vst [vmem:[%s1668] ss:$2 sm:$0xff] %v430
        %v1670 = vld.sshfl [vmem:[#allocation1] sm:$0xff pattern:$0x75316420]
        %v1671 = vld.sshfl [vmem:[#allocation1 + $0x8] sm:$0xff pattern:$0x75316420]
        %v1672 = vld.sshfl [vmem:[#allocation1 + $0x10] sm:$0xff pattern:$0x75316420]
        %1673 = vrot.lane.b32.xlu0 %v1670, 84
        %v1674 = vpop.permute.xlu0 %1673
        %1675 = vrot.lane.b32.xlu0 %v1671, 84
        %v1676 = vpop.permute.xlu0 %1675
        %1677 = vrot.lane.b32.xlu0 %v1672, 84
        %v1678 = vpop.permute.xlu0 %1677
        %vm1679 = vcmask 687104
        %v1680 = vsel %vm1679, %v1674, %v1676
        %v1681 = vsel %vm1679, %v1676, %v1678
        %v1683 = vsel %vm451, %v1666, 0
        %v1685 = vsel %vm455, %v1680, 0
        %v1687 = vsel %vm455, %v1681, 0
        %v1689 = vsel %vm455, %v1678, 0
        %1691 = vmatpush.msra.mxu0 0.0
        %1692 = vmatpush.msra.mxu0 0.0
        %1693 = vmatpush.msra.mxu0 0.0
        %1694 = vmatpush.msra.mxu0 0.0
        %1695 = vmatpush.msra.mxu0 0.0
        %1696 = vmatpush.msra.mxu0 0.0
        %1697 = vmatpush.msra.mxu0 0.0
        %1698 = vmatpush.msra.mxu0 0.0
        %1699 = vmatpush.msra.mxu0 0.0
        %1700 = vmatpush.msra.mxu0 0.0
        %1701 = vmatpush.msra.mxu0 0.0
        %1702 = vmatpush.msra.mxu0 0.0
        %1703 = vmatpush.msra.mxu0 0.0
        %1704 = vmatpush.msra.mxu0 0.0
        %1705 = vmatpush.msra.mxu0 0.0
        %1706 = vmatpush.msra.mxu0 %v1685
        %1707 = vmatmul.f32.gmra.mxu0 %v1683
        %v1708 = vpop.f32.mrf.mxu0
        %v1709 = vadd.f32 0.0, %v1708
        %1710 = vdwg.mxu0
        %1711 = vmatpush.msra.mxu0 0.0
        %1712 = vmatpush.msra.mxu0 0.0
        %1713 = vmatpush.msra.mxu0 0.0
        %1714 = vmatpush.msra.mxu0 0.0
        %1715 = vmatpush.msra.mxu0 0.0
        %1716 = vmatpush.msra.mxu0 0.0
        %1717 = vmatpush.msra.mxu0 0.0
        %1718 = vmatpush.msra.mxu0 0.0
        %1719 = vmatpush.msra.mxu0 0.0
        %1720 = vmatpush.msra.mxu0 0.0
        %1721 = vmatpush.msra.mxu0 0.0
        %1722 = vmatpush.msra.mxu0 0.0
        %1723 = vmatpush.msra.mxu0 0.0
        %1724 = vmatpush.msra.mxu0 0.0
        %1725 = vmatpush.msra.mxu0 0.0
        %1726 = vmatpush.msra.mxu0 %v1687
        %1727 = vmatmul.f32.gmra.mxu0 %v1683
        %v1728 = vpop.f32.mrf.mxu0
        %v1729 = vadd.f32 0.0, %v1728
        %1730 = vdwg.mxu0
        %1731 = vmatpush.msra.mxu0 0.0
        %1732 = vmatpush.msra.mxu0 0.0
        %1733 = vmatpush.msra.mxu0 0.0
        %1734 = vmatpush.msra.mxu0 0.0
        %1735 = vmatpush.msra.mxu0 0.0
        %1736 = vmatpush.msra.mxu0 0.0
        %1737 = vmatpush.msra.mxu0 0.0
        %1738 = vmatpush.msra.mxu0 0.0
        %1739 = vmatpush.msra.mxu0 0.0
        %1740 = vmatpush.msra.mxu0 0.0
        %1741 = vmatpush.msra.mxu0 0.0
        %1742 = vmatpush.msra.mxu0 0.0
        %1743 = vmatpush.msra.mxu0 0.0
        %1744 = vmatpush.msra.mxu0 0.0
        %1745 = vmatpush.msra.mxu0 0.0
        %1746 = vmatpush.msra.mxu0 %v1689
        %1747 = vmatmul.f32.gmra.mxu0 %v1683
        %v1748 = vpop.f32.mrf.mxu0
        %v1749 = vadd.f32 0.0, %v1748
        %1750 = vdwg.mxu0
        %v1751 = vadd.f32 %v1662, %v1709
        %v1752 = vadd.f32 %v1663, %v1729
        %v1753 = vadd.f32 %v1664, %v1749
        %s1754 = scalar_lea.vmem %s1, 120
        %v1755 = vld [vmem:[%s1754] sm:$0xff]
        %1756 = vst [vmem:[#allocation1] ss:$2 sm:$0xff] %v429
        %s1757 = scalar_lea.vmem [#allocation1], 16
        %1758 = vst [vmem:[%s1757] ss:$2 sm:$0xff] %v430
        %v1759 = vld.sshfl [vmem:[#allocation1] sm:$0xff pattern:$0x75316420]
        %v1760 = vld.sshfl [vmem:[#allocation1 + $0x8] sm:$0xff pattern:$0x75316420]
        %v1761 = vld.sshfl [vmem:[#allocation1 + $0x10] sm:$0xff pattern:$0x75316420]
        %1762 = vrot.lane.b32.xlu0 %v1759, 68
        %v1763 = vpop.permute.xlu0 %1762
        %1764 = vrot.lane.b32.xlu0 %v1760, 68
        %v1765 = vpop.permute.xlu0 %1764
        %1766 = vrot.lane.b32.xlu0 %v1761, 68
        %v1767 = vpop.permute.xlu0 %1766
        %vm1768 = vcmask 556032
        %v1769 = vsel %vm1768, %v1763, %v1765
        %v1770 = vsel %vm1768, %v1765, %v1767
        %v1772 = vsel %vm451, %v1755, 0
        %v1774 = vsel %vm455, %v1769, 0
        %v1776 = vsel %vm455, %v1770, 0
        %v1778 = vsel %vm455, %v1767, 0
        %1780 = vmatpush.msra.mxu0 0.0
        %1781 = vmatpush.msra.mxu0 0.0
        %1782 = vmatpush.msra.mxu0 0.0
        %1783 = vmatpush.msra.mxu0 0.0
        %1784 = vmatpush.msra.mxu0 0.0
        %1785 = vmatpush.msra.mxu0 0.0
        %1786 = vmatpush.msra.mxu0 0.0
        %1787 = vmatpush.msra.mxu0 0.0
        %1788 = vmatpush.msra.mxu0 0.0
        %1789 = vmatpush.msra.mxu0 0.0
        %1790 = vmatpush.msra.mxu0 0.0
        %1791 = vmatpush.msra.mxu0 0.0
        %1792 = vmatpush.msra.mxu0 0.0
        %1793 = vmatpush.msra.mxu0 0.0
        %1794 = vmatpush.msra.mxu0 0.0
        %1795 = vmatpush.msra.mxu0 %v1774
        %1796 = vmatmul.f32.gmra.mxu0 %v1772
        %v1797 = vpop.f32.mrf.mxu0
        %v1798 = vadd.f32 0.0, %v1797
        %1799 = vdwg.mxu0
        %1800 = vmatpush.msra.mxu0 0.0
        %1801 = vmatpush.msra.mxu0 0.0
        %1802 = vmatpush.msra.mxu0 0.0
        %1803 = vmatpush.msra.mxu0 0.0
        %1804 = vmatpush.msra.mxu0 0.0
        %1805 = vmatpush.msra.mxu0 0.0
        %1806 = vmatpush.msra.mxu0 0.0
        %1807 = vmatpush.msra.mxu0 0.0
        %1808 = vmatpush.msra.mxu0 0.0
        %1809 = vmatpush.msra.mxu0 0.0
        %1810 = vmatpush.msra.mxu0 0.0
        %1811 = vmatpush.msra.mxu0 0.0
        %1812 = vmatpush.msra.mxu0 0.0
        %1813 = vmatpush.msra.mxu0 0.0
        %1814 = vmatpush.msra.mxu0 0.0
        %1815 = vmatpush.msra.mxu0 %v1776
        %1816 = vmatmul.f32.gmra.mxu0 %v1772
        %v1817 = vpop.f32.mrf.mxu0
        %v1818 = vadd.f32 0.0, %v1817
        %1819 = vdwg.mxu0
        %1820 = vmatpush.msra.mxu0 0.0
        %1821 = vmatpush.msra.mxu0 0.0
        %1822 = vmatpush.msra.mxu0 0.0
        %1823 = vmatpush.msra.mxu0 0.0
        %1824 = vmatpush.msra.mxu0 0.0
        %1825 = vmatpush.msra.mxu0 0.0
        %1826 = vmatpush.msra.mxu0 0.0
        %1827 = vmatpush.msra.mxu0 0.0
        %1828 = vmatpush.msra.mxu0 0.0
        %1829 = vmatpush.msra.mxu0 0.0
        %1830 = vmatpush.msra.mxu0 0.0
        %1831 = vmatpush.msra.mxu0 0.0
        %1832 = vmatpush.msra.mxu0 0.0
        %1833 = vmatpush.msra.mxu0 0.0
        %1834 = vmatpush.msra.mxu0 0.0
        %1835 = vmatpush.msra.mxu0 %v1778
        %1836 = vmatmul.f32.gmra.mxu0 %v1772
        %v1837 = vpop.f32.mrf.mxu0
        %v1838 = vadd.f32 0.0, %v1837
        %1839 = vdwg.mxu0
        %v1840 = vadd.f32 %v1751, %v1798
        %v1841 = vadd.f32 %v1752, %v1818
        %v1842 = vadd.f32 %v1753, %v1838
        %s1843 = scalar_lea.vmem %s1, 128
        %v1844 = vld [vmem:[%s1843] sm:$0xff]
        %1845 = vst [vmem:[#allocation1] ss:$2 sm:$0xff] %v429
        %s1846 = scalar_lea.vmem [#allocation1], 16
        %1847 = vst [vmem:[%s1846] ss:$2 sm:$0xff] %v430
        %v1848 = vld.sshfl [vmem:[#allocation1] sm:$0xff pattern:$0x75316420]
        %v1849 = vld.sshfl [vmem:[#allocation1 + $0x8] sm:$0xff pattern:$0x75316420]
        %v1850 = vld.sshfl [vmem:[#allocation1 + $0x10] sm:$0xff pattern:$0x75316420]
        %1851 = vrot.lane.b32.xlu0 %v1848, 67
        %v1852 = vpop.permute.xlu0 %1851
        %1853 = vrot.lane.b32.xlu0 %v1849, 67
        %v1854 = vpop.permute.xlu0 %1853
        %1855 = vrot.lane.b32.xlu0 %v1850, 67
        %v1856 = vpop.permute.xlu0 %1855
        %vm1857 = vcmask 547840
        %v1858 = vsel %vm1857, %v1852, %v1854
        %v1859 = vsel %vm1857, %v1854, %v1856
        %v1861 = vsel %vm451, %v1844, 0
        %v1863 = vsel %vm455, %v1858, 0
        %v1865 = vsel %vm455, %v1859, 0
        %v1867 = vsel %vm455, %v1856, 0
        %1869 = vmatpush.msra.mxu0 0.0
        %1870 = vmatpush.msra.mxu0 0.0
        %1871 = vmatpush.msra.mxu0 0.0
        %1872 = vmatpush.msra.mxu0 0.0
        %1873 = vmatpush.msra.mxu0 0.0
        %1874 = vmatpush.msra.mxu0 0.0
        %1875 = vmatpush.msra.mxu0 0.0
        %1876 = vmatpush.msra.mxu0 0.0
        %1877 = vmatpush.msra.mxu0 0.0
        %1878 = vmatpush.msra.mxu0 0.0
        %1879 = vmatpush.msra.mxu0 0.0
        %1880 = vmatpush.msra.mxu0 0.0
        %1881 = vmatpush.msra.mxu0 0.0
        %1882 = vmatpush.msra.mxu0 0.0
        %1883 = vmatpush.msra.mxu0 0.0
        %1884 = vmatpush.msra.mxu0 %v1863
        %1885 = vmatmul.f32.gmra.mxu0 %v1861
        %v1886 = vpop.f32.mrf.mxu0
        %v1887 = vadd.f32 0.0, %v1886
        %1888 = vdwg.mxu0
        %1889 = vmatpush.msra.mxu0 0.0
        %1890 = vmatpush.msra.mxu0 0.0
        %1891 = vmatpush.msra.mxu0 0.0
        %1892 = vmatpush.msra.mxu0 0.0
        %1893 = vmatpush.msra.mxu0 0.0
        %1894 = vmatpush.msra.mxu0 0.0
        %1895 = vmatpush.msra.mxu0 0.0
        %1896 = vmatpush.msra.mxu0 0.0
        %1897 = vmatpush.msra.mxu0 0.0
        %1898 = vmatpush.msra.mxu0 0.0
        %1899 = vmatpush.msra.mxu0 0.0
        %1900 = vmatpush.msra.mxu0 0.0
        %1901 = vmatpush.msra.mxu0 0.0
        %1902 = vmatpush.msra.mxu0 0.0
        %1903 = vmatpush.msra.mxu0 0.0
        %1904 = vmatpush.msra.mxu0 %v1865
        %1905 = vmatmul.f32.gmra.mxu0 %v1861
        %v1906 = vpop.f32.mrf.mxu0
        %v1907 = vadd.f32 0.0, %v1906
        %1908 = vdwg.mxu0
        %1909 = vmatpush.msra.mxu0 0.0
        %1910 = vmatpush.msra.mxu0 0.0
        %1911 = vmatpush.msra.mxu0 0.0
        %1912 = vmatpush.msra.mxu0 0.0
        %1913 = vmatpush.msra.mxu0 0.0
        %1914 = vmatpush.msra.mxu0 0.0
        %1915 = vmatpush.msra.mxu0 0.0
        %1916 = vmatpush.msra.mxu0 0.0
        %1917 = vmatpush.msra.mxu0 0.0
        %1918 = vmatpush.msra.mxu0 0.0
        %1919 = vmatpush.msra.mxu0 0.0
        %1920 = vmatpush.msra.mxu0 0.0
        %1921 = vmatpush.msra.mxu0 0.0
        %1922 = vmatpush.msra.mxu0 0.0
        %1923 = vmatpush.msra.mxu0 0.0
        %1924 = vmatpush.msra.mxu0 %v1867
        %1925 = vmatmul.f32.gmra.mxu0 %v1861
        %v1926 = vpop.f32.mrf.mxu0
        %v1927 = vadd.f32 0.0, %v1926
        %1928 = vdwg.mxu0
        %v1929 = vadd.f32 %v1840, %v1887
        %v1930 = vadd.f32 %v1841, %v1907
        %v1931 = vadd.f32 %v1842, %v1927
        %s1932 = scalar_lea.vmem %s1, 136
        %v1933 = vld [vmem:[%s1932] sm:$0xff]
        %1934 = vst [vmem:[#allocation1] ss:$2 sm:$0xff] %v429
        %s1935 = scalar_lea.vmem [#allocation1], 16
        %1936 = vst [vmem:[%s1935] ss:$2 sm:$0xff] %v430
        %v1937 = vld.sshfl [vmem:[#allocation1] sm:$0xff pattern:$0x75316420]
        %v1938 = vld.sshfl [vmem:[#allocation1 + $0x8] sm:$0xff pattern:$0x75316420]
        %v1939 = vld.sshfl [vmem:[#allocation1 + $0x10] sm:$0xff pattern:$0x75316420]
        %1940 = vrot.lane.b32.xlu0 %v1937, 66
        %v1941 = vpop.permute.xlu0 %1940
        %1942 = vrot.lane.b32.xlu0 %v1938, 66
        %v1943 = vpop.permute.xlu0 %1942
        %1944 = vrot.lane.b32.xlu0 %v1939, 66
        %v1945 = vpop.permute.xlu0 %1944
        %vm1946 = vcmask 539648
        %v1947 = vsel %vm1946, %v1941, %v1943
        %v1948 = vsel %vm1946, %v1943, %v1945
        %v1950 = vsel %vm451, %v1933, 0
        %v1952 = vsel %vm455, %v1947, 0
        %v1954 = vsel %vm455, %v1948, 0
        %v1956 = vsel %vm455, %v1945, 0
        %1958 = vmatpush.msra.mxu0 0.0
        %1959 = vmatpush.msra.mxu0 0.0
        %1960 = vmatpush.msra.mxu0 0.0
        %1961 = vmatpush.msra.mxu0 0.0
        %1962 = vmatpush.msra.mxu0 0.0
        %1963 = vmatpush.msra.mxu0 0.0
        %1964 = vmatpush.msra.mxu0 0.0
        %1965 = vmatpush.msra.mxu0 0.0
        %1966 = vmatpush.msra.mxu0 0.0
        %1967 = vmatpush.msra.mxu0 0.0
        %1968 = vmatpush.msra.mxu0 0.0
        %1969 = vmatpush.msra.mxu0 0.0
        %1970 = vmatpush.msra.mxu0 0.0
        %1971 = vmatpush.msra.mxu0 0.0
        %1972 = vmatpush.msra.mxu0 0.0
        %1973 = vmatpush.msra.mxu0 %v1952
        %1974 = vmatmul.f32.gmra.mxu0 %v1950
        %v1975 = vpop.f32.mrf.mxu0
        %v1976 = vadd.f32 0.0, %v1975
        %1977 = vdwg.mxu0
        %1978 = vmatpush.msra.mxu0 0.0
        %1979 = vmatpush.msra.mxu0 0.0
        %1980 = vmatpush.msra.mxu0 0.0
        %1981 = vmatpush.msra.mxu0 0.0
        %1982 = vmatpush.msra.mxu0 0.0
        %1983 = vmatpush.msra.mxu0 0.0
        %1984 = vmatpush.msra.mxu0 0.0
        %1985 = vmatpush.msra.mxu0 0.0
        %1986 = vmatpush.msra.mxu0 0.0
        %1987 = vmatpush.msra.mxu0 0.0
        %1988 = vmatpush.msra.mxu0 0.0
        %1989 = vmatpush.msra.mxu0 0.0
        %1990 = vmatpush.msra.mxu0 0.0
        %1991 = vmatpush.msra.mxu0 0.0
        %1992 = vmatpush.msra.mxu0 0.0
        %1993 = vmatpush.msra.mxu0 %v1954
        %1994 = vmatmul.f32.gmra.mxu0 %v1950
        %v1995 = vpop.f32.mrf.mxu0
        %v1996 = vadd.f32 0.0, %v1995
        %1997 = vdwg.mxu0
        %1998 = vmatpush.msra.mxu0 0.0
        %1999 = vmatpush.msra.mxu0 0.0
        %2000 = vmatpush.msra.mxu0 0.0
        %2001 = vmatpush.msra.mxu0 0.0
        %2002 = vmatpush.msra.mxu0 0.0
        %2003 = vmatpush.msra.mxu0 0.0
        %2004 = vmatpush.msra.mxu0 0.0
        %2005 = vmatpush.msra.mxu0 0.0
        %2006 = vmatpush.msra.mxu0 0.0
        %2007 = vmatpush.msra.mxu0 0.0
        %2008 = vmatpush.msra.mxu0 0.0
        %2009 = vmatpush.msra.mxu0 0.0
        %2010 = vmatpush.msra.mxu0 0.0
        %2011 = vmatpush.msra.mxu0 0.0
        %2012 = vmatpush.msra.mxu0 0.0
        %2013 = vmatpush.msra.mxu0 %v1956
        %2014 = vmatmul.f32.gmra.mxu0 %v1950
        %v2015 = vpop.f32.mrf.mxu0
        %v2016 = vadd.f32 0.0, %v2015
        %2017 = vdwg.mxu0
        %v2018 = vadd.f32 %v1929, %v1976
        %v2019 = vadd.f32 %v1930, %v1996
        %v2020 = vadd.f32 %v1931, %v2016
        %s2021 = scalar_lea.vmem %s1, 144
        %v2022 = vld [vmem:[%s2021] sm:$0xff]
        %2023 = vst [vmem:[#allocation1] ss:$2 sm:$0xff] %v429
        %s2024 = scalar_lea.vmem [#allocation1], 16
        %2025 = vst [vmem:[%s2024] ss:$2 sm:$0xff] %v430
        %v2026 = vld.sshfl [vmem:[#allocation1] sm:$0xff pattern:$0x75316420]
        %v2027 = vld.sshfl [vmem:[#allocation1 + $0x8] sm:$0xff pattern:$0x75316420]
        %v2028 = vld.sshfl [vmem:[#allocation1 + $0x10] sm:$0xff pattern:$0x75316420]
        %2029 = vrot.lane.b32.xlu0 %v2026, 65
        %v2030 = vpop.permute.xlu0 %2029
        %2031 = vrot.lane.b32.xlu0 %v2027, 65
        %v2032 = vpop.permute.xlu0 %2031
        %2033 = vrot.lane.b32.xlu0 %v2028, 65
        %v2034 = vpop.permute.xlu0 %2033
        %vm2035 = vcmask 531456
        %v2036 = vsel %vm2035, %v2030, %v2032
        %v2037 = vsel %vm2035, %v2032, %v2034
        %v2039 = vsel %vm451, %v2022, 0
        %v2041 = vsel %vm455, %v2036, 0
        %v2043 = vsel %vm455, %v2037, 0
        %v2045 = vsel %vm455, %v2034, 0
        %2047 = vmatpush.msra.mxu0 0.0
        %2048 = vmatpush.msra.mxu0 0.0
        %2049 = vmatpush.msra.mxu0 0.0
        %2050 = vmatpush.msra.mxu0 0.0
        %2051 = vmatpush.msra.mxu0 0.0
        %2052 = vmatpush.msra.mxu0 0.0
        %2053 = vmatpush.msra.mxu0 0.0
        %2054 = vmatpush.msra.mxu0 0.0
        %2055 = vmatpush.msra.mxu0 0.0
        %2056 = vmatpush.msra.mxu0 0.0
        %2057 = vmatpush.msra.mxu0 0.0
        %2058 = vmatpush.msra.mxu0 0.0
        %2059 = vmatpush.msra.mxu0 0.0
        %2060 = vmatpush.msra.mxu0 0.0
        %2061 = vmatpush.msra.mxu0 0.0
        %2062 = vmatpush.msra.mxu0 %v2041
        %2063 = vmatmul.f32.gmra.mxu0 %v2039
        %v2064 = vpop.f32.mrf.mxu0
        %v2065 = vadd.f32 0.0, %v2064
        %2066 = vdwg.mxu0
        %2067 = vmatpush.msra.mxu0 0.0
        %2068 = vmatpush.msra.mxu0 0.0
        %2069 = vmatpush.msra.mxu0 0.0
        %2070 = vmatpush.msra.mxu0 0.0
        %2071 = vmatpush.msra.mxu0 0.0
        %2072 = vmatpush.msra.mxu0 0.0
        %2073 = vmatpush.msra.mxu0 0.0
        %2074 = vmatpush.msra.mxu0 0.0
        %2075 = vmatpush.msra.mxu0 0.0
        %2076 = vmatpush.msra.mxu0 0.0
        %2077 = vmatpush.msra.mxu0 0.0
        %2078 = vmatpush.msra.mxu0 0.0
        %2079 = vmatpush.msra.mxu0 0.0
        %2080 = vmatpush.msra.mxu0 0.0
        %2081 = vmatpush.msra.mxu0 0.0
        %2082 = vmatpush.msra.mxu0 %v2043
        %2083 = vmatmul.f32.gmra.mxu0 %v2039
        %v2084 = vpop.f32.mrf.mxu0
        %v2085 = vadd.f32 0.0, %v2084
        %2086 = vdwg.mxu0
        %2087 = vmatpush.msra.mxu0 0.0
        %2088 = vmatpush.msra.mxu0 0.0
        %2089 = vmatpush.msra.mxu0 0.0
        %2090 = vmatpush.msra.mxu0 0.0
        %2091 = vmatpush.msra.mxu0 0.0
        %2092 = vmatpush.msra.mxu0 0.0
        %2093 = vmatpush.msra.mxu0 0.0
        %2094 = vmatpush.msra.mxu0 0.0
        %2095 = vmatpush.msra.mxu0 0.0
        %2096 = vmatpush.msra.mxu0 0.0
        %2097 = vmatpush.msra.mxu0 0.0
        %2098 = vmatpush.msra.mxu0 0.0
        %2099 = vmatpush.msra.mxu0 0.0
        %2100 = vmatpush.msra.mxu0 0.0
        %2101 = vmatpush.msra.mxu0 0.0
        %2102 = vmatpush.msra.mxu0 %v2045
        %2103 = vmatmul.f32.gmra.mxu0 %v2039
        %v2104 = vpop.f32.mrf.mxu0
        %v2105 = vadd.f32 0.0, %v2104
        %2106 = vdwg.mxu0
        %v2107 = vadd.f32 %v2018, %v2065
        %v2108 = vadd.f32 %v2019, %v2085
        %v2109 = vadd.f32 %v2020, %v2105
        %s2110 = scalar_lea.vmem %s1, 152
        %v2111 = vld [vmem:[%s2110] sm:$0xff]
        %2112 = vst [vmem:[#allocation1] ss:$2 sm:$0xff] %v429
        %s2113 = scalar_lea.vmem [#allocation1], 16
        %2114 = vst [vmem:[%s2113] ss:$2 sm:$0xff] %v430
        %v2115 = vld.sshfl [vmem:[#allocation1] sm:$0xff pattern:$0x75316420]
        %v2116 = vld.sshfl [vmem:[#allocation1 + $0x8] sm:$0xff pattern:$0x75316420]
        %v2117 = vld.sshfl [vmem:[#allocation1 + $0x10] sm:$0xff pattern:$0x75316420]
        %2118 = vrot.lane.b32.xlu0 %v2115, 64
        %v2119 = vpop.permute.xlu0 %2118
        %2120 = vrot.lane.b32.xlu0 %v2116, 64
        %v2121 = vpop.permute.xlu0 %2120
        %2122 = vrot.lane.b32.xlu0 %v2117, 64
        %v2123 = vpop.permute.xlu0 %2122
        %vm2124 = vcmask 523264
        %v2125 = vsel %vm2124, %v2119, %v2121
        %v2126 = vsel %vm2124, %v2121, %v2123
        %v2128 = vsel %vm451, %v2111, 0
        %v2130 = vsel %vm455, %v2125, 0
        %v2132 = vsel %vm455, %v2126, 0
        %v2134 = vsel %vm455, %v2123, 0
        %2136 = vmatpush.msra.mxu0 0.0
        %2137 = vmatpush.msra.mxu0 0.0
        %2138 = vmatpush.msra.mxu0 0.0
        %2139 = vmatpush.msra.mxu0 0.0
        %2140 = vmatpush.msra.mxu0 0.0
        %2141 = vmatpush.msra.mxu0 0.0
        %2142 = vmatpush.msra.mxu0 0.0
        %2143 = vmatpush.msra.mxu0 0.0
        %2144 = vmatpush.msra.mxu0 0.0
        %2145 = vmatpush.msra.mxu0 0.0
        %2146 = vmatpush.msra.mxu0 0.0
        %2147 = vmatpush.msra.mxu0 0.0
        %2148 = vmatpush.msra.mxu0 0.0
        %2149 = vmatpush.msra.mxu0 0.0
        %2150 = vmatpush.msra.mxu0 0.0
        %2151 = vmatpush.msra.mxu0 %v2130
        %2152 = vmatmul.f32.gmra.mxu0 %v2128
        %v2153 = vpop.f32.mrf.mxu0
        %v2154 = vadd.f32 0.0, %v2153
        %2155 = vdwg.mxu0
        %2156 = vmatpush.msra.mxu0 0.0
        %2157 = vmatpush.msra.mxu0 0.0
        %2158 = vmatpush.msra.mxu0 0.0
        %2159 = vmatpush.msra.mxu0 0.0
        %2160 = vmatpush.msra.mxu0 0.0
        %2161 = vmatpush.msra.mxu0 0.0
        %2162 = vmatpush.msra.mxu0 0.0
        %2163 = vmatpush.msra.mxu0 0.0
        %2164 = vmatpush.msra.mxu0 0.0
        %2165 = vmatpush.msra.mxu0 0.0
        %2166 = vmatpush.msra.mxu0 0.0
        %2167 = vmatpush.msra.mxu0 0.0
        %2168 = vmatpush.msra.mxu0 0.0
        %2169 = vmatpush.msra.mxu0 0.0
        %2170 = vmatpush.msra.mxu0 0.0
        %2171 = vmatpush.msra.mxu0 %v2132
        %2172 = vmatmul.f32.gmra.mxu0 %v2128
        %v2173 = vpop.f32.mrf.mxu0
        %v2174 = vadd.f32 0.0, %v2173
        %2175 = vdwg.mxu0
        %2176 = vmatpush.msra.mxu0 0.0
        %2177 = vmatpush.msra.mxu0 0.0
        %2178 = vmatpush.msra.mxu0 0.0
        %2179 = vmatpush.msra.mxu0 0.0
        %2180 = vmatpush.msra.mxu0 0.0
        %2181 = vmatpush.msra.mxu0 0.0
        %2182 = vmatpush.msra.mxu0 0.0
        %2183 = vmatpush.msra.mxu0 0.0
        %2184 = vmatpush.msra.mxu0 0.0
        %2185 = vmatpush.msra.mxu0 0.0
        %2186 = vmatpush.msra.mxu0 0.0
        %2187 = vmatpush.msra.mxu0 0.0
        %2188 = vmatpush.msra.mxu0 0.0
        %2189 = vmatpush.msra.mxu0 0.0
        %2190 = vmatpush.msra.mxu0 0.0
        %2191 = vmatpush.msra.mxu0 %v2134
        %2192 = vmatmul.f32.gmra.mxu0 %v2128
        %v2193 = vpop.f32.mrf.mxu0
        %v2194 = vadd.f32 0.0, %v2193
        %2195 = vdwg.mxu0
        %v2196 = vadd.f32 %v2107, %v2154
        %v2197 = vadd.f32 %v2108, %v2174
        %v2198 = vadd.f32 %v2109, %v2194
        %s2199 = scalar_lea.vmem %s1, 160
        %v2200 = vld [vmem:[%s2199] sm:$0xff]
        %2201 = vst [vmem:[#allocation1] ss:$2 sm:$0xff] %v429
        %s2202 = scalar_lea.vmem [#allocation1], 16
        %2203 = vst [vmem:[%s2202] ss:$2 sm:$0xff] %v430
        %v2204 = vld.sshfl [vmem:[#allocation1] sm:$0xff pattern:$0x75316420]
        %v2205 = vld.sshfl [vmem:[#allocation1 + $0x8] sm:$0xff pattern:$0x75316420]
        %v2206 = vld.sshfl [vmem:[#allocation1 + $0x10] sm:$0xff pattern:$0x75316420]
        %v2207 = vld.sshfl [vmem:[#allocation1 + $0x18] sm:$0xff pattern:$0x75316420]
        %2208 = vrot.lane.b32.xlu0 %v2204, 48
        %v2209 = vpop.permute.xlu0 %2208
        %2210 = vrot.lane.b32.xlu0 %v2205, 48
        %v2211 = vpop.permute.xlu0 %2210
        %2212 = vrot.lane.b32.xlu0 %v2206, 48
        %v2213 = vpop.permute.xlu0 %2212
        %2214 = vrot.lane.b32.xlu0 %v2207, 48
        %v2215 = vpop.permute.xlu0 %2214
        %vm2216 = vcmask 392192
        %v2217 = vsel %vm2216, %v2209, %v2211
        %v2218 = vsel %vm2216, %v2211, %v2213
        %v2219 = vsel %vm2216, %v2213, %v2215
        %v2221 = vsel %vm451, %v2200, 0
        %v2223 = vsel %vm455, %v2217, 0
        %v2225 = vsel %vm455, %v2218, 0
        %v2227 = vsel %vm455, %v2219, 0
        %2229 = vmatpush.msra.mxu0 0.0
        %2230 = vmatpush.msra.mxu0 0.0
        %2231 = vmatpush.msra.mxu0 0.0
        %2232 = vmatpush.msra.mxu0 0.0
        %2233 = vmatpush.msra.mxu0 0.0
        %2234 = vmatpush.msra.mxu0 0.0
        %2235 = vmatpush.msra.mxu0 0.0
        %2236 = vmatpush.msra.mxu0 0.0
        %2237 = vmatpush.msra.mxu0 0.0
        %2238 = vmatpush.msra.mxu0 0.0
        %2239 = vmatpush.msra.mxu0 0.0
        %2240 = vmatpush.msra.mxu0 0.0
        %2241 = vmatpush.msra.mxu0 0.0
        %2242 = vmatpush.msra.mxu0 0.0
        %2243 = vmatpush.msra.mxu0 0.0
        %2244 = vmatpush.msra.mxu0 %v2223
        %2245 = vmatmul.f32.gmra.mxu0 %v2221
        %v2246 = vpop.f32.mrf.mxu0
        %v2247 = vadd.f32 0.0, %v2246
        %2248 = vdwg.mxu0
        %2249 = vmatpush.msra.mxu0 0.0
        %2250 = vmatpush.msra.mxu0 0.0
        %2251 = vmatpush.msra.mxu0 0.0
        %2252 = vmatpush.msra.mxu0 0.0
        %2253 = vmatpush.msra.mxu0 0.0
        %2254 = vmatpush.msra.mxu0 0.0
        %2255 = vmatpush.msra.mxu0 0.0
        %2256 = vmatpush.msra.mxu0 0.0
        %2257 = vmatpush.msra.mxu0 0.0
        %2258 = vmatpush.msra.mxu0 0.0
        %2259 = vmatpush.msra.mxu0 0.0
        %2260 = vmatpush.msra.mxu0 0.0
        %2261 = vmatpush.msra.mxu0 0.0
        %2262 = vmatpush.msra.mxu0 0.0
        %2263 = vmatpush.msra.mxu0 0.0
        %2264 = vmatpush.msra.mxu0 %v2225
        %2265 = vmatmul.f32.gmra.mxu0 %v2221
        %v2266 = vpop.f32.mrf.mxu0
        %v2267 = vadd.f32 0.0, %v2266
        %2268 = vdwg.mxu0
        %2269 = vmatpush.msra.mxu0 0.0
        %2270 = vmatpush.msra.mxu0 0.0
        %2271 = vmatpush.msra.mxu0 0.0
        %2272 = vmatpush.msra.mxu0 0.0
        %2273 = vmatpush.msra.mxu0 0.0
        %2274 = vmatpush.msra.mxu0 0.0
        %2275 = vmatpush.msra.mxu0 0.0
        %2276 = vmatpush.msra.mxu0 0.0
        %2277 = vmatpush.msra.mxu0 0.0
        %2278 = vmatpush.msra.mxu0 0.0
        %2279 = vmatpush.msra.mxu0 0.0
        %2280 = vmatpush.msra.mxu0 0.0
        %2281 = vmatpush.msra.mxu0 0.0
        %2282 = vmatpush.msra.mxu0 0.0
        %2283 = vmatpush.msra.mxu0 0.0
        %2284 = vmatpush.msra.mxu0 %v2227
        %2285 = vmatmul.f32.gmra.mxu0 %v2221
        %v2286 = vpop.f32.mrf.mxu0
        %v2287 = vadd.f32 0.0, %v2286
        %2288 = vdwg.mxu0
        %v2289 = vadd.f32 %v2196, %v2247
        %v2290 = vadd.f32 %v2197, %v2267
        %v2291 = vadd.f32 %v2198, %v2287
        %s2292 = scalar_lea.vmem %s1, 168
        %v2293 = vld [vmem:[%s2292] sm:$0xff]
        %2294 = vst [vmem:[#allocation1] ss:$2 sm:$0xff] %v429
        %s2295 = scalar_lea.vmem [#allocation1], 16
        %2296 = vst [vmem:[%s2295] ss:$2 sm:$0xff] %v430
        %v2297 = vld.sshfl [vmem:[#allocation1] sm:$0xff pattern:$0x75316420]
        %v2298 = vld.sshfl [vmem:[#allocation1 + $0x8] sm:$0xff pattern:$0x75316420]
        %v2299 = vld.sshfl [vmem:[#allocation1 + $0x10] sm:$0xff pattern:$0x75316420]
        %v2300 = vld.sshfl [vmem:[#allocation1 + $0x18] sm:$0xff pattern:$0x75316420]
        %2301 = vrot.lane.b32.xlu0 %v2297, 47
        %v2302 = vpop.permute.xlu0 %2301
        %2303 = vrot.lane.b32.xlu0 %v2298, 47
        %v2304 = vpop.permute.xlu0 %2303
        %2305 = vrot.lane.b32.xlu0 %v2299, 47
        %v2306 = vpop.permute.xlu0 %2305
        %2307 = vrot.lane.b32.xlu0 %v2300, 47
        %v2308 = vpop.permute.xlu0 %2307
        %vm2309 = vcmask 384000
        %v2310 = vsel %vm2309, %v2302, %v2304
        %v2311 = vsel %vm2309, %v2304, %v2306
        %v2312 = vsel %vm2309, %v2306, %v2308
        %v2314 = vsel %vm451, %v2293, 0
        %v2316 = vsel %vm455, %v2310, 0
        %v2318 = vsel %vm455, %v2311, 0
        %v2320 = vsel %vm455, %v2312, 0
        %2322 = vmatpush.msra.mxu0 0.0
        %2323 = vmatpush.msra.mxu0 0.0
        %2324 = vmatpush.msra.mxu0 0.0
        %2325 = vmatpush.msra.mxu0 0.0
        %2326 = vmatpush.msra.mxu0 0.0
        %2327 = vmatpush.msra.mxu0 0.0
        %2328 = vmatpush.msra.mxu0 0.0
        %2329 = vmatpush.msra.mxu0 0.0
        %2330 = vmatpush.msra.mxu0 0.0
        %2331 = vmatpush.msra.mxu0 0.0
        %2332 = vmatpush.msra.mxu0 0.0
        %2333 = vmatpush.msra.mxu0 0.0
        %2334 = vmatpush.msra.mxu0 0.0
        %2335 = vmatpush.msra.mxu0 0.0
        %2336 = vmatpush.msra.mxu0 0.0
        %2337 = vmatpush.msra.mxu0 %v2316
        %2338 = vmatmul.f32.gmra.mxu0 %v2314
        %v2339 = vpop.f32.mrf.mxu0
        %v2340 = vadd.f32 0.0, %v2339
        %2341 = vdwg.mxu0
        %2342 = vmatpush.msra.mxu0 0.0
        %2343 = vmatpush.msra.mxu0 0.0
        %2344 = vmatpush.msra.mxu0 0.0
        %2345 = vmatpush.msra.mxu0 0.0
        %2346 = vmatpush.msra.mxu0 0.0
        %2347 = vmatpush.msra.mxu0 0.0
        %2348 = vmatpush.msra.mxu0 0.0
        %2349 = vmatpush.msra.mxu0 0.0
        %2350 = vmatpush.msra.mxu0 0.0
        %2351 = vmatpush.msra.mxu0 0.0
        %2352 = vmatpush.msra.mxu0 0.0
        %2353 = vmatpush.msra.mxu0 0.0
        %2354 = vmatpush.msra.mxu0 0.0
        %2355 = vmatpush.msra.mxu0 0.0
        %2356 = vmatpush.msra.mxu0 0.0
        %2357 = vmatpush.msra.mxu0 %v2318
        %2358 = vmatmul.f32.gmra.mxu0 %v2314
        %v2359 = vpop.f32.mrf.mxu0
        %v2360 = vadd.f32 0.0, %v2359
        %2361 = vdwg.mxu0
        %2362 = vmatpush.msra.mxu0 0.0
        %2363 = vmatpush.msra.mxu0 0.0
        %2364 = vmatpush.msra.mxu0 0.0
        %2365 = vmatpush.msra.mxu0 0.0
        %2366 = vmatpush.msra.mxu0 0.0
        %2367 = vmatpush.msra.mxu0 0.0
        %2368 = vmatpush.msra.mxu0 0.0
        %2369 = vmatpush.msra.mxu0 0.0
        %2370 = vmatpush.msra.mxu0 0.0
        %2371 = vmatpush.msra.mxu0 0.0
        %2372 = vmatpush.msra.mxu0 0.0
        %2373 = vmatpush.msra.mxu0 0.0
        %2374 = vmatpush.msra.mxu0 0.0
        %2375 = vmatpush.msra.mxu0 0.0
        %2376 = vmatpush.msra.mxu0 0.0
        %2377 = vmatpush.msra.mxu0 %v2320
        %2378 = vmatmul.f32.gmra.mxu0 %v2314
        %v2379 = vpop.f32.mrf.mxu0
        %v2380 = vadd.f32 0.0, %v2379
        %2381 = vdwg.mxu0
        %v2382 = vadd.f32 %v2289, %v2340
        %v2383 = vadd.f32 %v2290, %v2360
        %v2384 = vadd.f32 %v2291, %v2380
        %s2385 = scalar_lea.vmem %s1, 176
        %v2386 = vld [vmem:[%s2385] sm:$0xff]
        %2387 = vst [vmem:[#allocation1] ss:$2 sm:$0xff] %v429
        %s2388 = scalar_lea.vmem [#allocation1], 16
        %2389 = vst [vmem:[%s2388] ss:$2 sm:$0xff] %v430
        %v2390 = vld.sshfl [vmem:[#allocation1] sm:$0xff pattern:$0x75316420]
        %v2391 = vld.sshfl [vmem:[#allocation1 + $0x8] sm:$0xff pattern:$0x75316420]
        %v2392 = vld.sshfl [vmem:[#allocation1 + $0x10] sm:$0xff pattern:$0x75316420]
        %v2393 = vld.sshfl [vmem:[#allocation1 + $0x18] sm:$0xff pattern:$0x75316420]
        %2394 = vrot.lane.b32.xlu0 %v2390, 46
        %v2395 = vpop.permute.xlu0 %2394
        %2396 = vrot.lane.b32.xlu0 %v2391, 46
        %v2397 = vpop.permute.xlu0 %2396
        %2398 = vrot.lane.b32.xlu0 %v2392, 46
        %v2399 = vpop.permute.xlu0 %2398
        %2400 = vrot.lane.b32.xlu0 %v2393, 46
        %v2401 = vpop.permute.xlu0 %2400
        %vm2402 = vcmask 375808
        %v2403 = vsel %vm2402, %v2395, %v2397
        %v2404 = vsel %vm2402, %v2397, %v2399
        %v2405 = vsel %vm2402, %v2399, %v2401
        %v2407 = vsel %vm451, %v2386, 0
        %v2409 = vsel %vm455, %v2403, 0
        %v2411 = vsel %vm455, %v2404, 0
        %v2413 = vsel %vm455, %v2405, 0
        %2415 = vmatpush.msra.mxu0 0.0
        %2416 = vmatpush.msra.mxu0 0.0
        %2417 = vmatpush.msra.mxu0 0.0
        %2418 = vmatpush.msra.mxu0 0.0
        %2419 = vmatpush.msra.mxu0 0.0
        %2420 = vmatpush.msra.mxu0 0.0
        %2421 = vmatpush.msra.mxu0 0.0
        %2422 = vmatpush.msra.mxu0 0.0
        %2423 = vmatpush.msra.mxu0 0.0
        %2424 = vmatpush.msra.mxu0 0.0
        %2425 = vmatpush.msra.mxu0 0.0
        %2426 = vmatpush.msra.mxu0 0.0
        %2427 = vmatpush.msra.mxu0 0.0
        %2428 = vmatpush.msra.mxu0 0.0
        %2429 = vmatpush.msra.mxu0 0.0
        %2430 = vmatpush.msra.mxu0 %v2409
        %2431 = vmatmul.f32.gmra.mxu0 %v2407
        %v2432 = vpop.f32.mrf.mxu0
        %v2433 = vadd.f32 0.0, %v2432
        %2434 = vdwg.mxu0
        %2435 = vmatpush.msra.mxu0 0.0
        %2436 = vmatpush.msra.mxu0 0.0
        %2437 = vmatpush.msra.mxu0 0.0
        %2438 = vmatpush.msra.mxu0 0.0
        %2439 = vmatpush.msra.mxu0 0.0
        %2440 = vmatpush.msra.mxu0 0.0
        %2441 = vmatpush.msra.mxu0 0.0
        %2442 = vmatpush.msra.mxu0 0.0
        %2443 = vmatpush.msra.mxu0 0.0
        %2444 = vmatpush.msra.mxu0 0.0
        %2445 = vmatpush.msra.mxu0 0.0
        %2446 = vmatpush.msra.mxu0 0.0
        %2447 = vmatpush.msra.mxu0 0.0
        %2448 = vmatpush.msra.mxu0 0.0
        %2449 = vmatpush.msra.mxu0 0.0
        %2450 = vmatpush.msra.mxu0 %v2411
        %2451 = vmatmul.f32.gmra.mxu0 %v2407
        %v2452 = vpop.f32.mrf.mxu0
        %v2453 = vadd.f32 0.0, %v2452
        %2454 = vdwg.mxu0
        %2455 = vmatpush.msra.mxu0 0.0
        %2456 = vmatpush.msra.mxu0 0.0
        %2457 = vmatpush.msra.mxu0 0.0
        %2458 = vmatpush.msra.mxu0 0.0
        %2459 = vmatpush.msra.mxu0 0.0
        %2460 = vmatpush.msra.mxu0 0.0
        %2461 = vmatpush.msra.mxu0 0.0
        %2462 = vmatpush.msra.mxu0 0.0
        %2463 = vmatpush.msra.mxu0 0.0
        %2464 = vmatpush.msra.mxu0 0.0
        %2465 = vmatpush.msra.mxu0 0.0
        %2466 = vmatpush.msra.mxu0 0.0
        %2467 = vmatpush.msra.mxu0 0.0
        %2468 = vmatpush.msra.mxu0 0.0
        %2469 = vmatpush.msra.mxu0 0.0
        %2470 = vmatpush.msra.mxu0 %v2413
        %2471 = vmatmul.f32.gmra.mxu0 %v2407
        %v2472 = vpop.f32.mrf.mxu0
        %v2473 = vadd.f32 0.0, %v2472
        %2474 = vdwg.mxu0
        %v2475 = vadd.f32 %v2382, %v2433
        %v2476 = vadd.f32 %v2383, %v2453
        %v2477 = vadd.f32 %v2384, %v2473
        %s2478 = scalar_lea.vmem %s1, 184
        %v2479 = vld [vmem:[%s2478] sm:$0xff]
        %2480 = vst [vmem:[#allocation1] ss:$2 sm:$0xff] %v429
        %s2481 = scalar_lea.vmem [#allocation1], 16
        %2482 = vst [vmem:[%s2481] ss:$2 sm:$0xff] %v430
        %v2483 = vld.sshfl [vmem:[#allocation1] sm:$0xff pattern:$0x75316420]
        %v2484 = vld.sshfl [vmem:[#allocation1 + $0x8] sm:$0xff pattern:$0x75316420]
        %v2485 = vld.sshfl [vmem:[#allocation1 + $0x10] sm:$0xff pattern:$0x75316420]
        %v2486 = vld.sshfl [vmem:[#allocation1 + $0x18] sm:$0xff pattern:$0x75316420]
        %2487 = vrot.lane.b32.xlu0 %v2483, 45
        %v2488 = vpop.permute.xlu0 %2487
        %2489 = vrot.lane.b32.xlu0 %v2484, 45
        %v2490 = vpop.permute.xlu0 %2489
        %2491 = vrot.lane.b32.xlu0 %v2485, 45
        %v2492 = vpop.permute.xlu0 %2491
        %2493 = vrot.lane.b32.xlu0 %v2486, 45
        %v2494 = vpop.permute.xlu0 %2493
        %vm2495 = vcmask 367616
        %v2496 = vsel %vm2495, %v2488, %v2490
        %v2497 = vsel %vm2495, %v2490, %v2492
        %v2498 = vsel %vm2495, %v2492, %v2494
        %v2500 = vsel %vm451, %v2479, 0
        %v2502 = vsel %vm455, %v2496, 0
        %v2504 = vsel %vm455, %v2497, 0
        %v2506 = vsel %vm455, %v2498, 0
        %2508 = vmatpush.msra.mxu0 0.0
        %2509 = vmatpush.msra.mxu0 0.0
        %2510 = vmatpush.msra.mxu0 0.0
        %2511 = vmatpush.msra.mxu0 0.0
        %2512 = vmatpush.msra.mxu0 0.0
        %2513 = vmatpush.msra.mxu0 0.0
        %2514 = vmatpush.msra.mxu0 0.0
        %2515 = vmatpush.msra.mxu0 0.0
        %2516 = vmatpush.msra.mxu0 0.0
        %2517 = vmatpush.msra.mxu0 0.0
        %2518 = vmatpush.msra.mxu0 0.0
        %2519 = vmatpush.msra.mxu0 0.0
        %2520 = vmatpush.msra.mxu0 0.0
        %2521 = vmatpush.msra.mxu0 0.0
        %2522 = vmatpush.msra.mxu0 0.0
        %2523 = vmatpush.msra.mxu0 %v2502
        %2524 = vmatmul.f32.gmra.mxu0 %v2500
        %v2525 = vpop.f32.mrf.mxu0
        %v2526 = vadd.f32 0.0, %v2525
        %2527 = vdwg.mxu0
        %2528 = vmatpush.msra.mxu0 0.0
        %2529 = vmatpush.msra.mxu0 0.0
        %2530 = vmatpush.msra.mxu0 0.0
        %2531 = vmatpush.msra.mxu0 0.0
        %2532 = vmatpush.msra.mxu0 0.0
        %2533 = vmatpush.msra.mxu0 0.0
        %2534 = vmatpush.msra.mxu0 0.0
        %2535 = vmatpush.msra.mxu0 0.0
        %2536 = vmatpush.msra.mxu0 0.0
        %2537 = vmatpush.msra.mxu0 0.0
        %2538 = vmatpush.msra.mxu0 0.0
        %2539 = vmatpush.msra.mxu0 0.0
        %2540 = vmatpush.msra.mxu0 0.0
        %2541 = vmatpush.msra.mxu0 0.0
        %2542 = vmatpush.msra.mxu0 0.0
        %2543 = vmatpush.msra.mxu0 %v2504
        %2544 = vmatmul.f32.gmra.mxu0 %v2500
        %v2545 = vpop.f32.mrf.mxu0
        %v2546 = vadd.f32 0.0, %v2545
        %2547 = vdwg.mxu0
        %2548 = vmatpush.msra.mxu0 0.0
        %2549 = vmatpush.msra.mxu0 0.0
        %2550 = vmatpush.msra.mxu0 0.0
        %2551 = vmatpush.msra.mxu0 0.0
        %2552 = vmatpush.msra.mxu0 0.0
        %2553 = vmatpush.msra.mxu0 0.0
        %2554 = vmatpush.msra.mxu0 0.0
        %2555 = vmatpush.msra.mxu0 0.0
        %2556 = vmatpush.msra.mxu0 0.0
        %2557 = vmatpush.msra.mxu0 0.0
        %2558 = vmatpush.msra.mxu0 0.0
        %2559 = vmatpush.msra.mxu0 0.0
        %2560 = vmatpush.msra.mxu0 0.0
        %2561 = vmatpush.msra.mxu0 0.0
        %2562 = vmatpush.msra.mxu0 0.0
        %2563 = vmatpush.msra.mxu0 %v2506
        %2564 = vmatmul.f32.gmra.mxu0 %v2500
        %v2565 = vpop.f32.mrf.mxu0
        %v2566 = vadd.f32 0.0, %v2565
        %2567 = vdwg.mxu0
        %v2568 = vadd.f32 %v2475, %v2526
        %v2569 = vadd.f32 %v2476, %v2546
        %v2570 = vadd.f32 %v2477, %v2566
        %s2571 = scalar_lea.vmem %s1, 192
        %v2572 = vld [vmem:[%s2571] sm:$0xff]
        %2573 = vst [vmem:[#allocation1] ss:$2 sm:$0xff] %v429
        %s2574 = scalar_lea.vmem [#allocation1], 16
        %2575 = vst [vmem:[%s2574] ss:$2 sm:$0xff] %v430
        %v2576 = vld.sshfl [vmem:[#allocation1] sm:$0xff pattern:$0x75316420]
        %v2577 = vld.sshfl [vmem:[#allocation1 + $0x8] sm:$0xff pattern:$0x75316420]
        %v2578 = vld.sshfl [vmem:[#allocation1 + $0x10] sm:$0xff pattern:$0x75316420]
        %v2579 = vld.sshfl [vmem:[#allocation1 + $0x18] sm:$0xff pattern:$0x75316420]
        %2580 = vrot.lane.b32.xlu0 %v2576, 44
        %v2581 = vpop.permute.xlu0 %2580
        %2582 = vrot.lane.b32.xlu0 %v2577, 44
        %v2583 = vpop.permute.xlu0 %2582
        %2584 = vrot.lane.b32.xlu0 %v2578, 44
        %v2585 = vpop.permute.xlu0 %2584
        %2586 = vrot.lane.b32.xlu0 %v2579, 44
        %v2587 = vpop.permute.xlu0 %2586
        %vm2588 = vcmask 359424
        %v2589 = vsel %vm2588, %v2581, %v2583
        %v2590 = vsel %vm2588, %v2583, %v2585
        %v2591 = vsel %vm2588, %v2585, %v2587
        %v2593 = vsel %vm451, %v2572, 0
        %v2595 = vsel %vm455, %v2589, 0
        %v2597 = vsel %vm455, %v2590, 0
        %v2599 = vsel %vm455, %v2591, 0
        %2601 = vmatpush.msra.mxu0 0.0
        %2602 = vmatpush.msra.mxu0 0.0
        %2603 = vmatpush.msra.mxu0 0.0
        %2604 = vmatpush.msra.mxu0 0.0
        %2605 = vmatpush.msra.mxu0 0.0
        %2606 = vmatpush.msra.mxu0 0.0
        %2607 = vmatpush.msra.mxu0 0.0
        %2608 = vmatpush.msra.mxu0 0.0
        %2609 = vmatpush.msra.mxu0 0.0
        %2610 = vmatpush.msra.mxu0 0.0
        %2611 = vmatpush.msra.mxu0 0.0
        %2612 = vmatpush.msra.mxu0 0.0
        %2613 = vmatpush.msra.mxu0 0.0
        %2614 = vmatpush.msra.mxu0 0.0
        %2615 = vmatpush.msra.mxu0 0.0
        %2616 = vmatpush.msra.mxu0 %v2595
        %2617 = vmatmul.f32.gmra.mxu0 %v2593
        %v2618 = vpop.f32.mrf.mxu0
        %v2619 = vadd.f32 0.0, %v2618
        %2620 = vdwg.mxu0
        %2621 = vmatpush.msra.mxu0 0.0
        %2622 = vmatpush.msra.mxu0 0.0
        %2623 = vmatpush.msra.mxu0 0.0
        %2624 = vmatpush.msra.mxu0 0.0
        %2625 = vmatpush.msra.mxu0 0.0
        %2626 = vmatpush.msra.mxu0 0.0
        %2627 = vmatpush.msra.mxu0 0.0
        %2628 = vmatpush.msra.mxu0 0.0
        %2629 = vmatpush.msra.mxu0 0.0
        %2630 = vmatpush.msra.mxu0 0.0
        %2631 = vmatpush.msra.mxu0 0.0
        %2632 = vmatpush.msra.mxu0 0.0
        %2633 = vmatpush.msra.mxu0 0.0
        %2634 = vmatpush.msra.mxu0 0.0
        %2635 = vmatpush.msra.mxu0 0.0
        %2636 = vmatpush.msra.mxu0 %v2597
        %2637 = vmatmul.f32.gmra.mxu0 %v2593
        %v2638 = vpop.f32.mrf.mxu0
        %v2639 = vadd.f32 0.0, %v2638
        %2640 = vdwg.mxu0
        %2641 = vmatpush.msra.mxu0 0.0
        %2642 = vmatpush.msra.mxu0 0.0
        %2643 = vmatpush.msra.mxu0 0.0
        %2644 = vmatpush.msra.mxu0 0.0
        %2645 = vmatpush.msra.mxu0 0.0
        %2646 = vmatpush.msra.mxu0 0.0
        %2647 = vmatpush.msra.mxu0 0.0
        %2648 = vmatpush.msra.mxu0 0.0
        %2649 = vmatpush.msra.mxu0 0.0
        %2650 = vmatpush.msra.mxu0 0.0
        %2651 = vmatpush.msra.mxu0 0.0
        %2652 = vmatpush.msra.mxu0 0.0
        %2653 = vmatpush.msra.mxu0 0.0
        %2654 = vmatpush.msra.mxu0 0.0
        %2655 = vmatpush.msra.mxu0 0.0
        %2656 = vmatpush.msra.mxu0 %v2599
        %2657 = vmatmul.f32.gmra.mxu0 %v2593
        %v2658 = vpop.f32.mrf.mxu0
        %v2659 = vadd.f32 0.0, %v2658
        %2660 = vdwg.mxu0
        %v2661 = vadd.f32 %v2568, %v2619
        %v2662 = vadd.f32 %v2569, %v2639
        %v2663 = vadd.f32 %v2570, %v2659
        %v2664 = vld [vmem:[%s2] sm:$0xff]
        %2666 = vset.pattern.permute.xlu0 0
        %2667 = vperm.xlu0 %2666, %v2664
        %v2668 = vpop.permute.xlu0 %2667
        %v2670 = vadd.f32 %v2661, %v2668
        %v2671 = vadd.f32 %v2662, %v2668
        %v2672 = vadd.f32 %v2663, %v2668
        %v2673 = vld [vmem:[%s5] sm:$0x7]
        %v2675 = vperm.slane %v2673, 0
        %v2676 = vperm.slane %v2673, 1
        %v2677 = vperm.slane %v2673, 2
        %v2681 = vmul.f32 %v2670, %v2675
        %v2682 = vmul.f32 %v2671, %v2676
        %v2683 = vmul.f32 %v2672, %v2677
        %v2684 = vadd.f32 %v2681, %v2682
        %vm2685 = vcmask 490496
        %v2686 = vsel %vm2685, %v2683, 0.0
        %v2687 = vadd.f32 %v2684, %v2686
        %2688 = vadd.xlane.f32.xlu0 %v2687
        %v2689 = vpop.xlane.xlu0 %2688
        %v2690 = vrot.slane %v2689, 4
        %v2691 = vadd.f32 %v2689, %v2690
        %v2692 = vrot.slane %v2691, 2
        %v2693 = vadd.f32 %v2691, %v2692
        %v2694 = vrot.slane %v2693, 1
        %v2695 = vadd.f32 %v2693, %v2694
        %s2696 = vtos %v2695
        %s2697 = smul.f32 %s2696, 0.00048828125
        %v2698 = vmul.f32 %v2681, %v2670
        %v2699 = vmul.f32 %v2682, %v2671
        %v2700 = vmul.f32 %v2683, %v2672
        %v2701 = vadd.f32 %v2698, %v2699
        %v2702 = vsel %vm2685, %v2700, 0.0
        %v2703 = vadd.f32 %v2701, %v2702
        %2704 = vadd.xlane.f32.xlu0 %v2703
        %v2705 = vpop.xlane.xlu0 %2704
        %v2706 = vrot.slane %v2705, 4
        %v2707 = vadd.f32 %v2705, %v2706
        %v2708 = vrot.slane %v2707, 2
        %v2709 = vadd.f32 %v2707, %v2708
        %v2710 = vrot.slane %v2709, 1
        %v2711 = vadd.f32 %v2709, %v2710
        %s2712 = vtos %v2711
        %s2713 = smul.f32 %s2712, 0.00048828125
        %s2714 = smul.f32 %s2697, %s2697
        %s2715 = ssub.f32 %s2713, %s2714
        %v2716 = vstv %s2697
        %v2717 = vsub.f32 %v2670, %v2716
        %v2718 = vsub.f32 %v2671, %v2716
        %v2719 = vsub.f32 %v2672, %v2716
        %s2720 = sadd.f32 %s2715, 1e-05
        %v2721 = vstv %s2720
        %v2722 = vrsqrt.pop %v2721
        %v2723 = vmul.f32 %v2722, %v2721
        %v2724 = vmul.f32 %v2723, %v2722
        %v2725 = vmul.f32 0.5, %v2724
        %v2726 = vsub.f32 1.5, %v2725
        %v2727 = vmul.f32 %v2722, %v2726
        %vm2728 = vweird.f32 %v2721
        %vm2729 = vweird.f32 %v2722
        %vm2730 = vmor %vm2728, %vm2729
        %v2731 = vsel %vm2730, %v2722, %v2727
        %s2732 = vtos %v2731
        %v2733 = vstv %s2732
        %v2734 = vmul.f32 %v2717, %v2733
        %v2735 = vmul.f32 %v2718, %v2733
        %v2736 = vmul.f32 %v2719, %v2733
        %v2737 = vld [vmem:[%s3] sm:$0xff]
        %v2738 = vld [vmem:[%s3 + $0x8] sm:$0xff]
        %v2739 = vld [vmem:[%s3 + $0x10] sm:$0xff]
        %v2740 = vmul.f32 %v2734, %v2737
        %v2741 = vmul.f32 %v2735, %v2738
        %v2742 = vmul.f32 %v2736, %v2739
        %v2743 = vld [vmem:[%s4] sm:$0xff]
        %v2744 = vld [vmem:[%s4 + $0x8] sm:$0xff]
        %v2745 = vld [vmem:[%s4 + $0x10] sm:$0xff]
        %v2746 = vadd.f32 %v2740, %v2743
        %v2747 = vadd.f32 %v2741, %v2744
        %v2748 = vadd.f32 %v2742, %v2745
        %v2749 = vmax.f32 %v2746, 0.0
        %v2750 = vmax.f32 %v2747, 0.0
        %v2751 = vmax.f32 %v2748, 0.0
        %v2752 = vld [vmem:[#allocation2] sm:$0xff]
        %v2753 = vld [vmem:[#allocation2 + $0x8] sm:$0xff]
        %v2754 = vld [vmem:[#allocation2 + $0x10] sm:$0xff]
        %v2755 = vld [vmem:[#allocation2 + $0x18] sm:$0xff]
        %v2756 = vld [vmem:[#allocation2 + $0x20] sm:$0xff]
        %v2757 = vld [vmem:[#allocation2 + $0x28] sm:$0xff]
        %v2758 = vld [vmem:[#allocation2 + $0x30] sm:$0xff]
        %v2759 = vld [vmem:[#allocation2 + $0x38] sm:$0xff]
        %v2760 = vld [vmem:[#allocation2 + $0x40] sm:$0xff]
        %v2761 = vld [vmem:[#allocation2 + $0x48] sm:$0xff]
        %v2762 = vld [vmem:[#allocation2 + $0x50] sm:$0xff]
        %v2763 = vld [vmem:[#allocation2 + $0x58] sm:$0xff]
        %v2764 = vld [vmem:[#allocation2 + $0x60] sm:$0xff]
        %v2765 = vld [vmem:[#allocation2 + $0x68] sm:$0xff]
        %v2766 = vld [vmem:[#allocation2 + $0x70] sm:$0xff]
        %v2767 = vld [vmem:[#allocation2 + $0x78] sm:$0xff]
        %v2768 = vld [vmem:[#allocation2 + $0x80] sm:$0xff]
        %v2769 = vld [vmem:[#allocation2 + $0x88] sm:$0xff]
        %v2770 = vld [vmem:[#allocation2 + $0x90] sm:$0xff]
        %v2771 = vld [vmem:[#allocation2 + $0x98] sm:$0xff]
        %v2772 = vld [vmem:[#allocation2 + $0xa0] sm:$0xff]
        %v2773 = vld [vmem:[#allocation2 + $0xa8] sm:$0xff]
        %v2774 = vld [vmem:[#allocation2 + $0xb0] sm:$0xff]
        %v2775 = vld [vmem:[#allocation2 + $0xb8] sm:$0xff]
        %v2776 = vld [vmem:[#allocation2 + $0xc0] sm:$0xff]
        %v2777 = vld [vmem:[#allocation2 + $0xc8] sm:$0xff]
        %v2778 = vld [vmem:[#allocation2 + $0xd0] sm:$0xff]
        %v2779 = vld [vmem:[#allocation2 + $0xd8] sm:$0xff]
        %v2780 = vld [vmem:[#allocation2 + $0xe0] sm:$0xff]
        %v2781 = vld [vmem:[#allocation2 + $0xe8] sm:$0xff]
        %v2782 = vld [vmem:[#allocation2 + $0xf0] sm:$0xff]
        %v2783 = vld [vmem:[#allocation2 + $0xf8] sm:$0xff]
        %v2784 = vld [vmem:[#allocation2 + $0x100] sm:$0xff]
        %v2785 = vld [vmem:[#allocation2 + $0x108] sm:$0xff]
        %v2786 = vld [vmem:[#allocation2 + $0x110] sm:$0xff]
        %v2787 = vld [vmem:[#allocation2 + $0x118] sm:$0xff]
        %v2788 = vld [vmem:[#allocation2 + $0x120] sm:$0xff]
        %v2789 = vld [vmem:[#allocation2 + $0x128] sm:$0xff]
        %v2790 = vld [vmem:[#allocation2 + $0x130] sm:$0xff]
        %v2791 = vld [vmem:[#allocation2 + $0x138] sm:$0xff]
        %v2792 = vld [vmem:[#allocation2 + $0x140] sm:$0xff]
        %v2793 = vld [vmem:[#allocation2 + $0x148] sm:$0xff]
        %v2794 = vld [vmem:[#allocation2 + $0x150] sm:$0xff]
        %v2795 = vld [vmem:[#allocation2 + $0x158] sm:$0xff]
        %v2796 = vld [vmem:[#allocation2 + $0x160] sm:$0xff]
        %v2797 = vld [vmem:[#allocation2 + $0x168] sm:$0xff]
        %v2798 = vld [vmem:[#allocation2 + $0x170] sm:$0xff]
        %v2799 = vld [vmem:[#allocation2 + $0x178] sm:$0xff]
        %v2800 = vld [vmem:[#allocation2 + $0x180] sm:$0xff]
        %v2801 = vld [vmem:[#allocation2 + $0x188] sm:$0xff]
        %v2802 = vld [vmem:[#allocation2 + $0x190] sm:$0xff]
        %v2803 = vld [vmem:[#allocation2 + $0x198] sm:$0xff]
        %v2804 = vld [vmem:[#allocation2 + $0x1a0] sm:$0xff]
        %v2805 = vld [vmem:[#allocation2 + $0x1a8] sm:$0xff]
        %v2806 = vld [vmem:[#allocation2 + $0x1b0] sm:$0xff]
        %v2807 = vld [vmem:[#allocation2 + $0x1b8] sm:$0xff]
        %v2808 = vld [vmem:[#allocation2 + $0x1c0] sm:$0xff]
        %v2809 = vld [vmem:[#allocation2 + $0x1c8] sm:$0xff]
        %v2810 = vld [vmem:[#allocation2 + $0x1d0] sm:$0xff]
        %v2811 = vld [vmem:[#allocation2 + $0x1d8] sm:$0xff]
        %v2812 = vld [vmem:[#allocation2 + $0x1e0] sm:$0xff]
        %v2813 = vld [vmem:[#allocation2 + $0x1e8] sm:$0xff]
        %v2814 = vld [vmem:[#allocation2 + $0x1f0] sm:$0xff]
        %v2815 = vld [vmem:[#allocation2 + $0x1f8] sm:$0xff]
        %v2816 = vld [vmem:[#allocation2 + $0x200] sm:$0xff]
        %v2817 = vld [vmem:[#allocation2 + $0x208] sm:$0xff]
        %v2818 = vld [vmem:[#allocation2 + $0x210] sm:$0xff]
        %v2819 = vld [vmem:[#allocation2 + $0x218] sm:$0xff]
        %v2820 = vld [vmem:[#allocation2 + $0x220] sm:$0xff]
        %v2821 = vld [vmem:[#allocation2 + $0x228] sm:$0xff]
        %v2822 = vld [vmem:[#allocation2 + $0x230] sm:$0xff]
        %v2823 = vld [vmem:[#allocation2 + $0x238] sm:$0xff]
        %v2824 = vld [vmem:[#allocation2 + $0x240] sm:$0xff]
        %v2825 = vld [vmem:[#allocation2 + $0x248] sm:$0xff]
        %v2826 = vld [vmem:[#allocation2 + $0x250] sm:$0xff]
        %v2827 = vld [vmem:[#allocation2 + $0x258] sm:$0xff]
        %v2828 = vld [vmem:[#allocation2 + $0x260] sm:$0xff]
        %v2829 = vld [vmem:[#allocation2 + $0x268] sm:$0xff]
        %v2830 = vld [vmem:[#allocation2 + $0x270] sm:$0xff]
        %v2831 = vld [vmem:[#allocation2 + $0x278] sm:$0xff]
        %v2832 = vld [vmem:[#allocation2 + $0x280] sm:$0xff]
        %v2833 = vld [vmem:[#allocation2 + $0x288] sm:$0xff]
        %v2834 = vld [vmem:[#allocation2 + $0x290] sm:$0xff]
        %v2835 = vld [vmem:[#allocation2 + $0x298] sm:$0xff]
        %v2836 = vld [vmem:[#allocation2 + $0x2a0] sm:$0xff]
        %v2837 = vld [vmem:[#allocation2 + $0x2a8] sm:$0xff]
        %v2838 = vld [vmem:[#allocation2 + $0x2b0] sm:$0xff]
        %v2839 = vld [vmem:[#allocation2 + $0x2b8] sm:$0xff]
        %v2840 = vld [vmem:[#allocation2 + $0x2c0] sm:$0xff]
        %v2841 = vld [vmem:[#allocation2 + $0x2c8] sm:$0xff]
        %v2842 = vld [vmem:[#allocation2 + $0x2d0] sm:$0xff]
        %v2843 = vld [vmem:[#allocation2 + $0x2d8] sm:$0xff]
        %v2844 = vld [vmem:[#allocation2 + $0x2e0] sm:$0xff]
        %v2845 = vld [vmem:[#allocation2 + $0x2e8] sm:$0xff]
        %v2846 = vld [vmem:[#allocation2 + $0x2f0] sm:$0xff]
        %v2847 = vld [vmem:[#allocation2 + $0x2f8] sm:$0xff]
        %v2848 = vld [vmem:[#allocation2 + $0x300] sm:$0xff]
        %v2849 = vld [vmem:[#allocation2 + $0x308] sm:$0xff]
        %v2850 = vld [vmem:[#allocation2 + $0x310] sm:$0xff]
        %v2851 = vld [vmem:[#allocation2 + $0x318] sm:$0xff]
        %v2852 = vld [vmem:[#allocation2 + $0x320] sm:$0xff]
        %v2853 = vld [vmem:[#allocation2 + $0x328] sm:$0xff]
        %v2854 = vld [vmem:[#allocation2 + $0x330] sm:$0xff]
        %v2855 = vld [vmem:[#allocation2 + $0x338] sm:$0xff]
        %v2856 = vld [vmem:[#allocation2 + $0x340] sm:$0xff]
        %v2857 = vld [vmem:[#allocation2 + $0x348] sm:$0xff]
        %v2858 = vld [vmem:[#allocation2 + $0x350] sm:$0xff]
        %v2859 = vld [vmem:[#allocation2 + $0x358] sm:$0xff]
        %v2860 = vld [vmem:[#allocation2 + $0x360] sm:$0xff]
        %v2861 = vld [vmem:[#allocation2 + $0x368] sm:$0xff]
        %v2862 = vld [vmem:[#allocation2 + $0x370] sm:$0xff]
        %v2863 = vld [vmem:[#allocation2 + $0x378] sm:$0xff]
        %v2864 = vld [vmem:[#allocation2 + $0x380] sm:$0xff]
        %v2865 = vld [vmem:[#allocation2 + $0x388] sm:$0xff]
        %v2866 = vld [vmem:[#allocation2 + $0x390] sm:$0xff]
        %v2867 = vld [vmem:[#allocation2 + $0x398] sm:$0xff]
        %v2868 = vld [vmem:[#allocation2 + $0x3a0] sm:$0xff]
        %v2869 = vld [vmem:[#allocation2 + $0x3a8] sm:$0xff]
        %v2870 = vld [vmem:[#allocation2 + $0x3b0] sm:$0xff]
        %v2871 = vld [vmem:[#allocation2 + $0x3b8] sm:$0xff]
        %v2872 = vld [vmem:[#allocation2 + $0x3c0] sm:$0xff]
        %v2873 = vld [vmem:[#allocation2 + $0x3c8] sm:$0xff]
        %v2874 = vld [vmem:[#allocation2 + $0x3d0] sm:$0xff]
        %v2875 = vld [vmem:[#allocation2 + $0x3d8] sm:$0xff]
        %v2876 = vld [vmem:[#allocation2 + $0x3e0] sm:$0xff]
        %v2877 = vld [vmem:[#allocation2 + $0x3e8] sm:$0xff]
        %v2878 = vld [vmem:[#allocation2 + $0x3f0] sm:$0xff]
        %v2879 = vld [vmem:[#allocation2 + $0x3f8] sm:$0xff]
        %v2880 = vld [vmem:[#allocation2 + $0x400] sm:$0xff]
        %v2881 = vld [vmem:[#allocation2 + $0x408] sm:$0xff]
        %v2882 = vld [vmem:[#allocation2 + $0x410] sm:$0xff]
        %v2883 = vld [vmem:[#allocation2 + $0x418] sm:$0xff]
        %v2884 = vld [vmem:[#allocation2 + $0x420] sm:$0xff]
        %v2885 = vld [vmem:[#allocation2 + $0x428] sm:$0xff]
        %v2886 = vld [vmem:[#allocation2 + $0x430] sm:$0xff]
        %v2887 = vld [vmem:[#allocation2 + $0x438] sm:$0xff]
        %v2888 = vld [vmem:[#allocation2 + $0x440] sm:$0xff]
        %v2889 = vld [vmem:[#allocation2 + $0x448] sm:$0xff]
        %v2890 = vld [vmem:[#allocation2 + $0x450] sm:$0xff]
        %v2891 = vld [vmem:[#allocation2 + $0x458] sm:$0xff]
        %v2892 = vld [vmem:[#allocation2 + $0x460] sm:$0xff]
        %v2893 = vld [vmem:[#allocation2 + $0x468] sm:$0xff]
        %v2894 = vld [vmem:[#allocation2 + $0x470] sm:$0xff]
        %v2895 = vld [vmem:[#allocation2 + $0x478] sm:$0xff]
        %v2896 = vld [vmem:[#allocation2 + $0x480] sm:$0xff]
        %v2897 = vld [vmem:[#allocation2 + $0x488] sm:$0xff]
        %v2898 = vld [vmem:[#allocation2 + $0x490] sm:$0xff]
        %v2899 = vld [vmem:[#allocation2 + $0x498] sm:$0xff]
        %v2900 = vld [vmem:[#allocation2 + $0x4a0] sm:$0xff]
        %v2901 = vld [vmem:[#allocation2 + $0x4a8] sm:$0xff]
        %v2902 = vld [vmem:[#allocation2 + $0x4b0] sm:$0xff]
        %v2903 = vld [vmem:[#allocation2 + $0x4b8] sm:$0xff]
        %v2904 = vld [vmem:[#allocation2 + $0x4c0] sm:$0xff]
        %v2905 = vld [vmem:[#allocation2 + $0x4c8] sm:$0xff]
        %v2906 = vld [vmem:[#allocation2 + $0x4d0] sm:$0xff]
        %v2907 = vld [vmem:[#allocation2 + $0x4d8] sm:$0xff]
        %v2908 = vld [vmem:[#allocation2 + $0x4e0] sm:$0xf]
        %v2909 = vld [vmem:[#allocation2 + $0x4e8] sm:$0xf]
        %v2910 = vld [vmem:[#allocation2 + $0x4f0] sm:$0xf]
        %v2911 = vld [vmem:[#allocation2 + $0x4f8] sm:$0xf]
        %v2913 = vsel %vm2685, %v2751, 0
        %v2916 = vsel %vm455, %v2908, 0
        %v2919 = vsel %vm455, %v2909, 0
        %v2922 = vsel %vm455, %v2910, 0
        %v2925 = vsel %vm455, %v2911, 0
        %2927 = vmatpush.msra.mxu0 %v2812
        %2928 = vmatpush.msra.mxu0 %v2808
        %2929 = vmatpush.msra.mxu0 %v2804
        %2930 = vmatpush.msra.mxu0 %v2800
        %2931 = vmatpush.msra.mxu0 %v2796
        %2932 = vmatpush.msra.mxu0 %v2792
        %2933 = vmatpush.msra.mxu0 %v2788
        %2934 = vmatpush.msra.mxu0 %v2784
        %2935 = vmatpush.msra.mxu0 %v2780
        %2936 = vmatpush.msra.mxu0 %v2776
        %2937 = vmatpush.msra.mxu0 %v2772
        %2938 = vmatpush.msra.mxu0 %v2768
        %2939 = vmatpush.msra.mxu0 %v2764
        %2940 = vmatpush.msra.mxu0 %v2760
        %2941 = vmatpush.msra.mxu0 %v2756
        %2942 = vmatpush.msra.mxu0 %v2752
        %2943 = vmatmul.f32.gmra.mxu0 %v2749
        %v2944 = vpop.f32.mrf.mxu0
        %v2945 = vadd.f32 0.0, %v2944
        %2946 = vdwg.mxu0
        %2947 = vmatpush.msra.mxu0 %v2876
        %2948 = vmatpush.msra.mxu0 %v2872
        %2949 = vmatpush.msra.mxu0 %v2868
        %2950 = vmatpush.msra.mxu0 %v2864
        %2951 = vmatpush.msra.mxu0 %v2860
        %2952 = vmatpush.msra.mxu0 %v2856
        %2953 = vmatpush.msra.mxu0 %v2852
        %2954 = vmatpush.msra.mxu0 %v2848
        %2955 = vmatpush.msra.mxu0 %v2844
        %2956 = vmatpush.msra.mxu0 %v2840
        %2957 = vmatpush.msra.mxu0 %v2836
        %2958 = vmatpush.msra.mxu0 %v2832
        %2959 = vmatpush.msra.mxu0 %v2828
        %2960 = vmatpush.msra.mxu0 %v2824
        %2961 = vmatpush.msra.mxu0 %v2820
        %2962 = vmatpush.msra.mxu0 %v2816
        %2963 = vmatmul.f32.gmra.mxu0 %v2750
        %v2964 = vpop.f32.mrf.mxu0
        %v2965 = vadd.f32 %v2945, %v2964
        %2966 = vdwg.mxu0
        %2967 = vmatpush.msra.mxu0 0.0
        %2968 = vmatpush.msra.mxu0 0.0
        %2969 = vmatpush.msra.mxu0 0.0
        %2970 = vmatpush.msra.mxu0 0.0
        %2971 = vmatpush.msra.mxu0 0.0
        %2972 = vmatpush.msra.mxu0 0.0
        %2973 = vmatpush.msra.mxu0 0.0
        %2974 = vmatpush.msra.mxu0 0.0
        %2975 = vmatpush.msra.mxu0 %v2916
        %2976 = vmatpush.msra.mxu0 %v2904
        %2977 = vmatpush.msra.mxu0 %v2900
        %2978 = vmatpush.msra.mxu0 %v2896
        %2979 = vmatpush.msra.mxu0 %v2892
        %2980 = vmatpush.msra.mxu0 %v2888
        %2981 = vmatpush.msra.mxu0 %v2884
        %2982 = vmatpush.msra.mxu0 %v2880
        %2983 = vmatmul.f32.gmra.mxu0 %v2913
        %v2984 = vpop.f32.mrf.mxu0
        %v2985 = vadd.f32 %v2965, %v2984
        %2986 = vdwg.mxu0
        %2987 = vmatpush.msra.mxu0 %v2813
        %2988 = vmatpush.msra.mxu0 %v2809
        %2989 = vmatpush.msra.mxu0 %v2805
        %2990 = vmatpush.msra.mxu0 %v2801
        %2991 = vmatpush.msra.mxu0 %v2797
        %2992 = vmatpush.msra.mxu0 %v2793
        %2993 = vmatpush.msra.mxu0 %v2789
        %2994 = vmatpush.msra.mxu0 %v2785
        %2995 = vmatpush.msra.mxu0 %v2781
        %2996 = vmatpush.msra.mxu0 %v2777
        %2997 = vmatpush.msra.mxu0 %v2773
        %2998 = vmatpush.msra.mxu0 %v2769
        %2999 = vmatpush.msra.mxu0 %v2765
        %3000 = vmatpush.msra.mxu0 %v2761
        %3001 = vmatpush.msra.mxu0 %v2757
        %3002 = vmatpush.msra.mxu0 %v2753
        %3003 = vmatmul.f32.gmra.mxu0 %v2749
        %v3004 = vpop.f32.mrf.mxu0
        %v3005 = vadd.f32 0.0, %v3004
        %3006 = vdwg.mxu0
        %3007 = vmatpush.msra.mxu0 %v2877
        %3008 = vmatpush.msra.mxu0 %v2873
        %3009 = vmatpush.msra.mxu0 %v2869
        %3010 = vmatpush.msra.mxu0 %v2865
        %3011 = vmatpush.msra.mxu0 %v2861
        %3012 = vmatpush.msra.mxu0 %v2857
        %3013 = vmatpush.msra.mxu0 %v2853
        %3014 = vmatpush.msra.mxu0 %v2849
        %3015 = vmatpush.msra.mxu0 %v2845
        %3016 = vmatpush.msra.mxu0 %v2841
        %3017 = vmatpush.msra.mxu0 %v2837
        %3018 = vmatpush.msra.mxu0 %v2833
        %3019 = vmatpush.msra.mxu0 %v2829
        %3020 = vmatpush.msra.mxu0 %v2825
        %3021 = vmatpush.msra.mxu0 %v2821
        %3022 = vmatpush.msra.mxu0 %v2817
        %3023 = vmatmul.f32.gmra.mxu0 %v2750
        %v3024 = vpop.f32.mrf.mxu0
        %v3025 = vadd.f32 %v3005, %v3024
        %3026 = vdwg.mxu0
        %3027 = vmatpush.msra.mxu0 0.0
        %3028 = vmatpush.msra.mxu0 0.0
        %3029 = vmatpush.msra.mxu0 0.0
        %3030 = vmatpush.msra.mxu0 0.0
        %3031 = vmatpush.msra.mxu0 0.0
        %3032 = vmatpush.msra.mxu0 0.0
        %3033 = vmatpush.msra.mxu0 0.0
        %3034 = vmatpush.msra.mxu0 0.0
        %3035 = vmatpush.msra.mxu0 %v2919
        %3036 = vmatpush.msra.mxu0 %v2905
        %3037 = vmatpush.msra.mxu0 %v2901
        %3038 = vmatpush.msra.mxu0 %v2897
        %3039 = vmatpush.msra.mxu0 %v2893
        %3040 = vmatpush.msra.mxu0 %v2889
        %3041 = vmatpush.msra.mxu0 %v2885
        %3042 = vmatpush.msra.mxu0 %v2881
        %3043 = vmatmul.f32.gmra.mxu0 %v2913
        %v3044 = vpop.f32.mrf.mxu0
        %v3045 = vadd.f32 %v3025, %v3044
        %3046 = vdwg.mxu0
        %3047 = vmatpush.msra.mxu0 %v2814
        %3048 = vmatpush.msra.mxu0 %v2810
        %3049 = vmatpush.msra.mxu0 %v2806
        %3050 = vmatpush.msra.mxu0 %v2802
        %3051 = vmatpush.msra.mxu0 %v2798
        %3052 = vmatpush.msra.mxu0 %v2794
        %3053 = vmatpush.msra.mxu0 %v2790
        %3054 = vmatpush.msra.mxu0 %v2786
        %3055 = vmatpush.msra.mxu0 %v2782
        %3056 = vmatpush.msra.mxu0 %v2778
        %3057 = vmatpush.msra.mxu0 %v2774
        %3058 = vmatpush.msra.mxu0 %v2770
        %3059 = vmatpush.msra.mxu0 %v2766
        %3060 = vmatpush.msra.mxu0 %v2762
        %3061 = vmatpush.msra.mxu0 %v2758
        %3062 = vmatpush.msra.mxu0 %v2754
        %3063 = vmatmul.f32.gmra.mxu0 %v2749
        %v3064 = vpop.f32.mrf.mxu0
        %v3065 = vadd.f32 0.0, %v3064
        %3066 = vdwg.mxu0
        %3067 = vmatpush.msra.mxu0 %v2878
        %3068 = vmatpush.msra.mxu0 %v2874
        %3069 = vmatpush.msra.mxu0 %v2870
        %3070 = vmatpush.msra.mxu0 %v2866
        %3071 = vmatpush.msra.mxu0 %v2862
        %3072 = vmatpush.msra.mxu0 %v2858
        %3073 = vmatpush.msra.mxu0 %v2854
        %3074 = vmatpush.msra.mxu0 %v2850
        %3075 = vmatpush.msra.mxu0 %v2846
        %3076 = vmatpush.msra.mxu0 %v2842
        %3077 = vmatpush.msra.mxu0 %v2838
        %3078 = vmatpush.msra.mxu0 %v2834
        %3079 = vmatpush.msra.mxu0 %v2830
        %3080 = vmatpush.msra.mxu0 %v2826
        %3081 = vmatpush.msra.mxu0 %v2822
        %3082 = vmatpush.msra.mxu0 %v2818
        %3083 = vmatmul.f32.gmra.mxu0 %v2750
        %v3084 = vpop.f32.mrf.mxu0
        %v3085 = vadd.f32 %v3065, %v3084
        %3086 = vdwg.mxu0
        %3087 = vmatpush.msra.mxu0 0.0
        %3088 = vmatpush.msra.mxu0 0.0
        %3089 = vmatpush.msra.mxu0 0.0
        %3090 = vmatpush.msra.mxu0 0.0
        %3091 = vmatpush.msra.mxu0 0.0
        %3092 = vmatpush.msra.mxu0 0.0
        %3093 = vmatpush.msra.mxu0 0.0
        %3094 = vmatpush.msra.mxu0 0.0
        %3095 = vmatpush.msra.mxu0 %v2922
        %3096 = vmatpush.msra.mxu0 %v2906
        %3097 = vmatpush.msra.mxu0 %v2902
        %3098 = vmatpush.msra.mxu0 %v2898
        %3099 = vmatpush.msra.mxu0 %v2894
        %3100 = vmatpush.msra.mxu0 %v2890
        %3101 = vmatpush.msra.mxu0 %v2886
        %3102 = vmatpush.msra.mxu0 %v2882
        %3103 = vmatmul.f32.gmra.mxu0 %v2913
        %v3104 = vpop.f32.mrf.mxu0
        %v3105 = vadd.f32 %v3085, %v3104
        %3106 = vdwg.mxu0
        %3107 = vmatpush.msra.mxu0 %v2815
        %3108 = vmatpush.msra.mxu0 %v2811
        %3109 = vmatpush.msra.mxu0 %v2807
        %3110 = vmatpush.msra.mxu0 %v2803
        %3111 = vmatpush.msra.mxu0 %v2799
        %3112 = vmatpush.msra.mxu0 %v2795
        %3113 = vmatpush.msra.mxu0 %v2791
        %3114 = vmatpush.msra.mxu0 %v2787
        %3115 = vmatpush.msra.mxu0 %v2783
        %3116 = vmatpush.msra.mxu0 %v2779
        %3117 = vmatpush.msra.mxu0 %v2775
        %3118 = vmatpush.msra.mxu0 %v2771
        %3119 = vmatpush.msra.mxu0 %v2767
        %3120 = vmatpush.msra.mxu0 %v2763
        %3121 = vmatpush.msra.mxu0 %v2759
        %3122 = vmatpush.msra.mxu0 %v2755
        %3123 = vmatmul.f32.gmra.mxu0 %v2749
        %v3124 = vpop.f32.mrf.mxu0
        %v3125 = vadd.f32 0.0, %v3124
        %3126 = vdwg.mxu0
        %3127 = vmatpush.msra.mxu0 %v2879
        %3128 = vmatpush.msra.mxu0 %v2875
        %3129 = vmatpush.msra.mxu0 %v2871
        %3130 = vmatpush.msra.mxu0 %v2867
        %3131 = vmatpush.msra.mxu0 %v2863
        %3132 = vmatpush.msra.mxu0 %v2859
        %3133 = vmatpush.msra.mxu0 %v2855
        %3134 = vmatpush.msra.mxu0 %v2851
        %3135 = vmatpush.msra.mxu0 %v2847
        %3136 = vmatpush.msra.mxu0 %v2843
        %3137 = vmatpush.msra.mxu0 %v2839
        %3138 = vmatpush.msra.mxu0 %v2835
        %3139 = vmatpush.msra.mxu0 %v2831
        %3140 = vmatpush.msra.mxu0 %v2827
        %3141 = vmatpush.msra.mxu0 %v2823
        %3142 = vmatpush.msra.mxu0 %v2819
        %3143 = vmatmul.f32.gmra.mxu0 %v2750
        %v3144 = vpop.f32.mrf.mxu0
        %v3145 = vadd.f32 %v3125, %v3144
        %3146 = vdwg.mxu0
        %3147 = vmatpush.msra.mxu0 0.0
        %3148 = vmatpush.msra.mxu0 0.0
        %3149 = vmatpush.msra.mxu0 0.0
        %3150 = vmatpush.msra.mxu0 0.0
        %3151 = vmatpush.msra.mxu0 0.0
        %3152 = vmatpush.msra.mxu0 0.0
        %3153 = vmatpush.msra.mxu0 0.0
        %3154 = vmatpush.msra.mxu0 0.0
        %3155 = vmatpush.msra.mxu0 %v2925
        %3156 = vmatpush.msra.mxu0 %v2907
        %3157 = vmatpush.msra.mxu0 %v2903
        %3158 = vmatpush.msra.mxu0 %v2899
        %3159 = vmatpush.msra.mxu0 %v2895
        %3160 = vmatpush.msra.mxu0 %v2891
        %3161 = vmatpush.msra.mxu0 %v2887
        %3162 = vmatpush.msra.mxu0 %v2883
        %3163 = vmatmul.f32.gmra.mxu0 %v2913
        %v3164 = vpop.f32.mrf.mxu0
        %v3165 = vadd.f32 %v3145, %v3164
        %3166 = vdwg.mxu0
        %v3167 = vld [vmem:[%s7] sm:$0xff]
        %s3168 = scalar_lea.vmem %s7, 8
        %v3169 = vld [vmem:[%s3168] sm:$0xff]
        %3173 = vrot.lane.b32.xlu0 %v2985, 127
        %v3174 = vpop.permute.xlu0 %3173
        %3175 = vrot.lane.b32.xlu0 %v3045, 127
        %v3176 = vpop.permute.xlu0 %3175
        %3177 = vrot.lane.b32.xlu0 %v3105, 127
        %v3178 = vpop.permute.xlu0 %3177
        %v3179 = vsel %vm448, %v3174, %v3176
        %v3180 = vsel %vm448, %v3176, %v3178
        %vm3184 = vcmask 64512
        %v3186 = vsel %vm3184, %v3169, 0
        %3188 = vmatpush.msra.mxu0 0.0
        %3189 = vmatpush.msra.mxu0 0.0
        %3190 = vmatpush.msra.mxu0 0.0
        %3191 = vmatpush.msra.mxu0 0.0
        %3192 = vmatpush.msra.mxu0 0.0
        %3193 = vmatpush.msra.mxu0 0.0
        %3194 = vmatpush.msra.mxu0 0.0
        %3195 = vmatpush.msra.mxu0 0.0
        %3196 = vmatpush.msra.mxu0 0.0
        %3197 = vmatpush.msra.mxu0 0.0
        %3198 = vmatpush.msra.mxu0 0.0
        %3199 = vmatpush.msra.mxu0 0.0
        %3200 = vmatpush.msra.mxu0 0.0
        %3201 = vmatpush.msra.mxu0 0.0
        %3202 = vmatpush.msra.mxu0 0.0
        %3203 = vmatpush.msra.mxu0 %v3179
        %3204 = vmatmul.f32.gmra.mxu0 %v3186
        %v3205 = vpop.f32.mrf.mxu0
        %v3206 = vadd.f32 0.0, %v3205
        %3207 = vdwg.mxu0
        %3208 = vmatpush.msra.mxu0 0.0
        %3209 = vmatpush.msra.mxu0 0.0
        %3210 = vmatpush.msra.mxu0 0.0
        %3211 = vmatpush.msra.mxu0 0.0
        %3212 = vmatpush.msra.mxu0 0.0
        %3213 = vmatpush.msra.mxu0 0.0
        %3214 = vmatpush.msra.mxu0 0.0
        %3215 = vmatpush.msra.mxu0 0.0
        %3216 = vmatpush.msra.mxu0 0.0
        %3217 = vmatpush.msra.mxu0 0.0
        %3218 = vmatpush.msra.mxu0 0.0
        %3219 = vmatpush.msra.mxu0 0.0
        %3220 = vmatpush.msra.mxu0 0.0
        %3221 = vmatpush.msra.mxu0 0.0
        %3222 = vmatpush.msra.mxu0 0.0
        %3223 = vmatpush.msra.mxu0 %v3180
        %3224 = vmatmul.f32.gmra.mxu0 %v3186
        %v3225 = vpop.f32.mrf.mxu0
        %v3226 = vadd.f32 0.0, %v3225
        %3227 = vdwg.mxu0
        %3228 = vmatpush.msra.mxu0 0.0
        %3229 = vmatpush.msra.mxu0 0.0
        %3230 = vmatpush.msra.mxu0 0.0
        %3231 = vmatpush.msra.mxu0 0.0
        %3232 = vmatpush.msra.mxu0 0.0
        %3233 = vmatpush.msra.mxu0 0.0
        %3234 = vmatpush.msra.mxu0 0.0
        %3235 = vmatpush.msra.mxu0 0.0
        %3236 = vmatpush.msra.mxu0 0.0
        %3237 = vmatpush.msra.mxu0 0.0
        %3238 = vmatpush.msra.mxu0 0.0
        %3239 = vmatpush.msra.mxu0 0.0
        %3240 = vmatpush.msra.mxu0 0.0
        %3241 = vmatpush.msra.mxu0 0.0
        %3242 = vmatpush.msra.mxu0 0.0
        %3243 = vmatpush.msra.mxu0 %v3178
        %3244 = vmatmul.f32.gmra.mxu0 %v3186
        %v3245 = vpop.f32.mrf.mxu0
        %v3246 = vadd.f32 0.0, %v3245
        %3247 = vdwg.mxu0
        %v3249 = vsel %vm3184, %v3167, 0
        %3251 = vmatpush.msra.mxu0 0.0
        %3252 = vmatpush.msra.mxu0 0.0
        %3253 = vmatpush.msra.mxu0 0.0
        %3254 = vmatpush.msra.mxu0 0.0
        %3255 = vmatpush.msra.mxu0 0.0
        %3256 = vmatpush.msra.mxu0 0.0
        %3257 = vmatpush.msra.mxu0 0.0
        %3258 = vmatpush.msra.mxu0 0.0
        %3259 = vmatpush.msra.mxu0 0.0
        %3260 = vmatpush.msra.mxu0 0.0
        %3261 = vmatpush.msra.mxu0 0.0
        %3262 = vmatpush.msra.mxu0 0.0
        %3263 = vmatpush.msra.mxu0 0.0
        %3264 = vmatpush.msra.mxu0 0.0
        %3265 = vmatpush.msra.mxu0 0.0
        %3266 = vmatpush.msra.mxu0 %v2985
        %3267 = vmatmul.f32.gmra.mxu0 %v3249
        %v3268 = vpop.f32.mrf.mxu0
        %v3269 = vadd.f32 %v3206, %v3268
        %3270 = vdwg.mxu0
        %3271 = vmatpush.msra.mxu0 0.0
        %3272 = vmatpush.msra.mxu0 0.0
        %3273 = vmatpush.msra.mxu0 0.0
        %3274 = vmatpush.msra.mxu0 0.0
        %3275 = vmatpush.msra.mxu0 0.0
        %3276 = vmatpush.msra.mxu0 0.0
        %3277 = vmatpush.msra.mxu0 0.0
        %3278 = vmatpush.msra.mxu0 0.0
        %3279 = vmatpush.msra.mxu0 0.0
        %3280 = vmatpush.msra.mxu0 0.0
        %3281 = vmatpush.msra.mxu0 0.0
        %3282 = vmatpush.msra.mxu0 0.0
        %3283 = vmatpush.msra.mxu0 0.0
        %3284 = vmatpush.msra.mxu0 0.0
        %3285 = vmatpush.msra.mxu0 0.0
        %3286 = vmatpush.msra.mxu0 %v3045
        %3287 = vmatmul.f32.gmra.mxu0 %v3249
        %v3288 = vpop.f32.mrf.mxu0
        %v3289 = vadd.f32 %v3226, %v3288
        %3290 = vdwg.mxu0
        %3291 = vmatpush.msra.mxu0 0.0
        %3292 = vmatpush.msra.mxu0 0.0
        %3293 = vmatpush.msra.mxu0 0.0
        %3294 = vmatpush.msra.mxu0 0.0
        %3295 = vmatpush.msra.mxu0 0.0
        %3296 = vmatpush.msra.mxu0 0.0
        %3297 = vmatpush.msra.mxu0 0.0
        %3298 = vmatpush.msra.mxu0 0.0
        %3299 = vmatpush.msra.mxu0 0.0
        %3300 = vmatpush.msra.mxu0 0.0
        %3301 = vmatpush.msra.mxu0 0.0
        %3302 = vmatpush.msra.mxu0 0.0
        %3303 = vmatpush.msra.mxu0 0.0
        %3304 = vmatpush.msra.mxu0 0.0
        %3305 = vmatpush.msra.mxu0 0.0
        %3306 = vmatpush.msra.mxu0 %v3105
        %3307 = vmatmul.f32.gmra.mxu0 %v3249
        %v3308 = vpop.f32.mrf.mxu0
        %v3309 = vadd.f32 %v3246, %v3308
        %3310 = vdwg.mxu0
        %s3311 = scalar_lea.vmem %s7, 16
        %v3312 = vld [vmem:[%s3311] sm:$0xff]
        %3313 = vrot.lane.b32.xlu0 %v2985, 126
        %v3314 = vpop.permute.xlu0 %3313
        %3315 = vrot.lane.b32.xlu0 %v3045, 126
        %v3316 = vpop.permute.xlu0 %3315
        %3317 = vrot.lane.b32.xlu0 %v3105, 126
        %v3318 = vpop.permute.xlu0 %3317
        %v3319 = vsel %vm611, %v3314, %v3316
        %v3320 = vsel %vm611, %v3316, %v3318
        %v3325 = vsel %vm3184, %v3312, 0
        %3327 = vmatpush.msra.mxu0 0.0
        %3328 = vmatpush.msra.mxu0 0.0
        %3329 = vmatpush.msra.mxu0 0.0
        %3330 = vmatpush.msra.mxu0 0.0
        %3331 = vmatpush.msra.mxu0 0.0
        %3332 = vmatpush.msra.mxu0 0.0
        %3333 = vmatpush.msra.mxu0 0.0
        %3334 = vmatpush.msra.mxu0 0.0
        %3335 = vmatpush.msra.mxu0 0.0
        %3336 = vmatpush.msra.mxu0 0.0
        %3337 = vmatpush.msra.mxu0 0.0
        %3338 = vmatpush.msra.mxu0 0.0
        %3339 = vmatpush.msra.mxu0 0.0
        %3340 = vmatpush.msra.mxu0 0.0
        %3341 = vmatpush.msra.mxu0 0.0
        %3342 = vmatpush.msra.mxu0 %v3319
        %3343 = vmatmul.f32.gmra.mxu0 %v3325
        %v3344 = vpop.f32.mrf.mxu0
        %v3345 = vadd.f32 0.0, %v3344
        %3346 = vdwg.mxu0
        %3347 = vmatpush.msra.mxu0 0.0
        %3348 = vmatpush.msra.mxu0 0.0
        %3349 = vmatpush.msra.mxu0 0.0
        %3350 = vmatpush.msra.mxu0 0.0
        %3351 = vmatpush.msra.mxu0 0.0
        %3352 = vmatpush.msra.mxu0 0.0
        %3353 = vmatpush.msra.mxu0 0.0
        %3354 = vmatpush.msra.mxu0 0.0
        %3355 = vmatpush.msra.mxu0 0.0
        %3356 = vmatpush.msra.mxu0 0.0
        %3357 = vmatpush.msra.mxu0 0.0
        %3358 = vmatpush.msra.mxu0 0.0
        %3359 = vmatpush.msra.mxu0 0.0
        %3360 = vmatpush.msra.mxu0 0.0
        %3361 = vmatpush.msra.mxu0 0.0
        %3362 = vmatpush.msra.mxu0 %v3320
        %3363 = vmatmul.f32.gmra.mxu0 %v3325
        %v3364 = vpop.f32.mrf.mxu0
        %v3365 = vadd.f32 0.0, %v3364
        %3366 = vdwg.mxu0
        %3367 = vmatpush.msra.mxu0 0.0
        %3368 = vmatpush.msra.mxu0 0.0
        %3369 = vmatpush.msra.mxu0 0.0
        %3370 = vmatpush.msra.mxu0 0.0
        %3371 = vmatpush.msra.mxu0 0.0
        %3372 = vmatpush.msra.mxu0 0.0
        %3373 = vmatpush.msra.mxu0 0.0
        %3374 = vmatpush.msra.mxu0 0.0
        %3375 = vmatpush.msra.mxu0 0.0
        %3376 = vmatpush.msra.mxu0 0.0
        %3377 = vmatpush.msra.mxu0 0.0
        %3378 = vmatpush.msra.mxu0 0.0
        %3379 = vmatpush.msra.mxu0 0.0
        %3380 = vmatpush.msra.mxu0 0.0
        %3381 = vmatpush.msra.mxu0 0.0
        %3382 = vmatpush.msra.mxu0 %v3318
        %3383 = vmatmul.f32.gmra.mxu0 %v3325
        %v3384 = vpop.f32.mrf.mxu0
        %v3385 = vadd.f32 0.0, %v3384
        %3386 = vdwg.mxu0
        %v3387 = vadd.f32 %v3269, %v3345
        %v3388 = vadd.f32 %v3289, %v3365
        %v3389 = vadd.f32 %v3309, %v3385
        %s3390 = scalar_lea.vmem %s7, 24
        %v3391 = vld [vmem:[%s3390] sm:$0xff]
        %3392 = vrot.lane.b32.xlu0 %v2985, 125
        %v3393 = vpop.permute.xlu0 %3392
        %3394 = vrot.lane.b32.xlu0 %v3045, 125
        %v3395 = vpop.permute.xlu0 %3394
        %3396 = vrot.lane.b32.xlu0 %v3105, 125
        %v3397 = vpop.permute.xlu0 %3396
        %v3398 = vsel %vm700, %v3393, %v3395
        %v3399 = vsel %vm700, %v3395, %v3397
        %v3404 = vsel %vm3184, %v3391, 0
        %3406 = vmatpush.msra.mxu0 0.0
        %3407 = vmatpush.msra.mxu0 0.0
        %3408 = vmatpush.msra.mxu0 0.0
        %3409 = vmatpush.msra.mxu0 0.0
        %3410 = vmatpush.msra.mxu0 0.0
        %3411 = vmatpush.msra.mxu0 0.0
        %3412 = vmatpush.msra.mxu0 0.0
        %3413 = vmatpush.msra.mxu0 0.0
        %3414 = vmatpush.msra.mxu0 0.0
        %3415 = vmatpush.msra.mxu0 0.0
        %3416 = vmatpush.msra.mxu0 0.0
        %3417 = vmatpush.msra.mxu0 0.0
        %3418 = vmatpush.msra.mxu0 0.0
        %3419 = vmatpush.msra.mxu0 0.0
        %3420 = vmatpush.msra.mxu0 0.0
        %3421 = vmatpush.msra.mxu0 %v3398
        %3422 = vmatmul.f32.gmra.mxu0 %v3404
        %v3423 = vpop.f32.mrf.mxu0
        %v3424 = vadd.f32 0.0, %v3423
        %3425 = vdwg.mxu0
        %3426 = vmatpush.msra.mxu0 0.0
        %3427 = vmatpush.msra.mxu0 0.0
        %3428 = vmatpush.msra.mxu0 0.0
        %3429 = vmatpush.msra.mxu0 0.0
        %3430 = vmatpush.msra.mxu0 0.0
        %3431 = vmatpush.msra.mxu0 0.0
        %3432 = vmatpush.msra.mxu0 0.0
        %3433 = vmatpush.msra.mxu0 0.0
        %3434 = vmatpush.msra.mxu0 0.0
        %3435 = vmatpush.msra.mxu0 0.0
        %3436 = vmatpush.msra.mxu0 0.0
        %3437 = vmatpush.msra.mxu0 0.0
        %3438 = vmatpush.msra.mxu0 0.0
        %3439 = vmatpush.msra.mxu0 0.0
        %3440 = vmatpush.msra.mxu0 0.0
        %3441 = vmatpush.msra.mxu0 %v3399
        %3442 = vmatmul.f32.gmra.mxu0 %v3404
        %v3443 = vpop.f32.mrf.mxu0
        %v3444 = vadd.f32 0.0, %v3443
        %3445 = vdwg.mxu0
        %3446 = vmatpush.msra.mxu0 0.0
        %3447 = vmatpush.msra.mxu0 0.0
        %3448 = vmatpush.msra.mxu0 0.0
        %3449 = vmatpush.msra.mxu0 0.0
        %3450 = vmatpush.msra.mxu0 0.0
        %3451 = vmatpush.msra.mxu0 0.0
        %3452 = vmatpush.msra.mxu0 0.0
        %3453 = vmatpush.msra.mxu0 0.0
        %3454 = vmatpush.msra.mxu0 0.0
        %3455 = vmatpush.msra.mxu0 0.0
        %3456 = vmatpush.msra.mxu0 0.0
        %3457 = vmatpush.msra.mxu0 0.0
        %3458 = vmatpush.msra.mxu0 0.0
        %3459 = vmatpush.msra.mxu0 0.0
        %3460 = vmatpush.msra.mxu0 0.0
        %3461 = vmatpush.msra.mxu0 %v3397
        %3462 = vmatmul.f32.gmra.mxu0 %v3404
        %v3463 = vpop.f32.mrf.mxu0
        %v3464 = vadd.f32 0.0, %v3463
        %3465 = vdwg.mxu0
        %v3466 = vadd.f32 %v3387, %v3424
        %v3467 = vadd.f32 %v3388, %v3444
        %v3468 = vadd.f32 %v3389, %v3464
        %s3469 = scalar_lea.vmem %s7, 32
        %v3470 = vld [vmem:[%s3469] sm:$0xff]
        %3471 = vrot.lane.b32.xlu0 %v2985, 124
        %v3472 = vpop.permute.xlu0 %3471
        %3473 = vrot.lane.b32.xlu0 %v3045, 124
        %v3474 = vpop.permute.xlu0 %3473
        %3475 = vrot.lane.b32.xlu0 %v3105, 124
        %v3476 = vpop.permute.xlu0 %3475
        %v3477 = vsel %vm789, %v3472, %v3474
        %v3478 = vsel %vm789, %v3474, %v3476
        %v3483 = vsel %vm3184, %v3470, 0
        %3485 = vmatpush.msra.mxu0 0.0
        %3486 = vmatpush.msra.mxu0 0.0
        %3487 = vmatpush.msra.mxu0 0.0
        %3488 = vmatpush.msra.mxu0 0.0
        %3489 = vmatpush.msra.mxu0 0.0
        %3490 = vmatpush.msra.mxu0 0.0
        %3491 = vmatpush.msra.mxu0 0.0
        %3492 = vmatpush.msra.mxu0 0.0
        %3493 = vmatpush.msra.mxu0 0.0
        %3494 = vmatpush.msra.mxu0 0.0
        %3495 = vmatpush.msra.mxu0 0.0
        %3496 = vmatpush.msra.mxu0 0.0
        %3497 = vmatpush.msra.mxu0 0.0
        %3498 = vmatpush.msra.mxu0 0.0
        %3499 = vmatpush.msra.mxu0 0.0
        %3500 = vmatpush.msra.mxu0 %v3477
        %3501 = vmatmul.f32.gmra.mxu0 %v3483
        %v3502 = vpop.f32.mrf.mxu0
        %v3503 = vadd.f32 0.0, %v3502
        %3504 = vdwg.mxu0
        %3505 = vmatpush.msra.mxu0 0.0
        %3506 = vmatpush.msra.mxu0 0.0
        %3507 = vmatpush.msra.mxu0 0.0
        %3508 = vmatpush.msra.mxu0 0.0
        %3509 = vmatpush.msra.mxu0 0.0
        %3510 = vmatpush.msra.mxu0 0.0
        %3511 = vmatpush.msra.mxu0 0.0
        %3512 = vmatpush.msra.mxu0 0.0
        %3513 = vmatpush.msra.mxu0 0.0
        %3514 = vmatpush.msra.mxu0 0.0
        %3515 = vmatpush.msra.mxu0 0.0
        %3516 = vmatpush.msra.mxu0 0.0
        %3517 = vmatpush.msra.mxu0 0.0
        %3518 = vmatpush.msra.mxu0 0.0
        %3519 = vmatpush.msra.mxu0 0.0
        %3520 = vmatpush.msra.mxu0 %v3478
        %3521 = vmatmul.f32.gmra.mxu0 %v3483
        %v3522 = vpop.f32.mrf.mxu0
        %v3523 = vadd.f32 0.0, %v3522
        %3524 = vdwg.mxu0
        %3525 = vmatpush.msra.mxu0 0.0
        %3526 = vmatpush.msra.mxu0 0.0
        %3527 = vmatpush.msra.mxu0 0.0
        %3528 = vmatpush.msra.mxu0 0.0
        %3529 = vmatpush.msra.mxu0 0.0
        %3530 = vmatpush.msra.mxu0 0.0
        %3531 = vmatpush.msra.mxu0 0.0
        %3532 = vmatpush.msra.mxu0 0.0
        %3533 = vmatpush.msra.mxu0 0.0
        %3534 = vmatpush.msra.mxu0 0.0
        %3535 = vmatpush.msra.mxu0 0.0
        %3536 = vmatpush.msra.mxu0 0.0
        %3537 = vmatpush.msra.mxu0 0.0
        %3538 = vmatpush.msra.mxu0 0.0
        %3539 = vmatpush.msra.mxu0 0.0
        %3540 = vmatpush.msra.mxu0 %v3476
        %3541 = vmatmul.f32.gmra.mxu0 %v3483
        %v3542 = vpop.f32.mrf.mxu0
        %v3543 = vadd.f32 0.0, %v3542
        %3544 = vdwg.mxu0
        %v3545 = vadd.f32 %v3466, %v3503
        %v3546 = vadd.f32 %v3467, %v3523
        %v3547 = vadd.f32 %v3468, %v3543
        %s3548 = scalar_lea.vmem %s7, 40
        %v3549 = vld [vmem:[%s3548] sm:$0xff]
        %3550 = vrot.lane.b32.xlu0 %v2985, 108
        %v3551 = vpop.permute.xlu0 %3550
        %3552 = vrot.lane.b32.xlu0 %v3045, 108
        %v3553 = vpop.permute.xlu0 %3552
        %3554 = vrot.lane.b32.xlu0 %v3105, 108
        %v3555 = vpop.permute.xlu0 %3554
        %v3556 = vsel %vm878, %v3551, %v3553
        %v3557 = vsel %vm878, %v3553, %v3555
        %v3562 = vsel %vm3184, %v3549, 0
        %3564 = vmatpush.msra.mxu0 0.0
        %3565 = vmatpush.msra.mxu0 0.0
        %3566 = vmatpush.msra.mxu0 0.0
        %3567 = vmatpush.msra.mxu0 0.0
        %3568 = vmatpush.msra.mxu0 0.0
        %3569 = vmatpush.msra.mxu0 0.0
        %3570 = vmatpush.msra.mxu0 0.0
        %3571 = vmatpush.msra.mxu0 0.0
        %3572 = vmatpush.msra.mxu0 0.0
        %3573 = vmatpush.msra.mxu0 0.0
        %3574 = vmatpush.msra.mxu0 0.0
        %3575 = vmatpush.msra.mxu0 0.0
        %3576 = vmatpush.msra.mxu0 0.0
        %3577 = vmatpush.msra.mxu0 0.0
        %3578 = vmatpush.msra.mxu0 0.0
        %3579 = vmatpush.msra.mxu0 %v3556
        %3580 = vmatmul.f32.gmra.mxu0 %v3562
        %v3581 = vpop.f32.mrf.mxu0
        %v3582 = vadd.f32 0.0, %v3581
        %3583 = vdwg.mxu0
        %3584 = vmatpush.msra.mxu0 0.0
        %3585 = vmatpush.msra.mxu0 0.0
        %3586 = vmatpush.msra.mxu0 0.0
        %3587 = vmatpush.msra.mxu0 0.0
        %3588 = vmatpush.msra.mxu0 0.0
        %3589 = vmatpush.msra.mxu0 0.0
        %3590 = vmatpush.msra.mxu0 0.0
        %3591 = vmatpush.msra.mxu0 0.0
        %3592 = vmatpush.msra.mxu0 0.0
        %3593 = vmatpush.msra.mxu0 0.0
        %3594 = vmatpush.msra.mxu0 0.0
        %3595 = vmatpush.msra.mxu0 0.0
        %3596 = vmatpush.msra.mxu0 0.0
        %3597 = vmatpush.msra.mxu0 0.0
        %3598 = vmatpush.msra.mxu0 0.0
        %3599 = vmatpush.msra.mxu0 %v3557
        %3600 = vmatmul.f32.gmra.mxu0 %v3562
        %v3601 = vpop.f32.mrf.mxu0
        %v3602 = vadd.f32 0.0, %v3601
        %3603 = vdwg.mxu0
        %3604 = vmatpush.msra.mxu0 0.0
        %3605 = vmatpush.msra.mxu0 0.0
        %3606 = vmatpush.msra.mxu0 0.0
        %3607 = vmatpush.msra.mxu0 0.0
        %3608 = vmatpush.msra.mxu0 0.0
        %3609 = vmatpush.msra.mxu0 0.0
        %3610 = vmatpush.msra.mxu0 0.0
        %3611 = vmatpush.msra.mxu0 0.0
        %3612 = vmatpush.msra.mxu0 0.0
        %3613 = vmatpush.msra.mxu0 0.0
        %3614 = vmatpush.msra.mxu0 0.0
        %3615 = vmatpush.msra.mxu0 0.0
        %3616 = vmatpush.msra.mxu0 0.0
        %3617 = vmatpush.msra.mxu0 0.0
        %3618 = vmatpush.msra.mxu0 0.0
        %3619 = vmatpush.msra.mxu0 %v3555
        %3620 = vmatmul.f32.gmra.mxu0 %v3562
        %v3621 = vpop.f32.mrf.mxu0
        %v3622 = vadd.f32 0.0, %v3621
        %3623 = vdwg.mxu0
        %v3624 = vadd.f32 %v3545, %v3582
        %v3625 = vadd.f32 %v3546, %v3602
        %v3626 = vadd.f32 %v3547, %v3622
        %s3627 = scalar_lea.vmem %s7, 48
        %v3628 = vld [vmem:[%s3627] sm:$0xff]
        %3629 = vrot.lane.b32.xlu0 %v2985, 107
        %v3630 = vpop.permute.xlu0 %3629
        %3631 = vrot.lane.b32.xlu0 %v3045, 107
        %v3632 = vpop.permute.xlu0 %3631
        %3633 = vrot.lane.b32.xlu0 %v3105, 107
        %v3634 = vpop.permute.xlu0 %3633
        %v3635 = vsel %vm967, %v3630, %v3632
        %v3636 = vsel %vm967, %v3632, %v3634
        %v3641 = vsel %vm3184, %v3628, 0
        %3643 = vmatpush.msra.mxu0 0.0
        %3644 = vmatpush.msra.mxu0 0.0
        %3645 = vmatpush.msra.mxu0 0.0
        %3646 = vmatpush.msra.mxu0 0.0
        %3647 = vmatpush.msra.mxu0 0.0
        %3648 = vmatpush.msra.mxu0 0.0
        %3649 = vmatpush.msra.mxu0 0.0
        %3650 = vmatpush.msra.mxu0 0.0
        %3651 = vmatpush.msra.mxu0 0.0
        %3652 = vmatpush.msra.mxu0 0.0
        %3653 = vmatpush.msra.mxu0 0.0
        %3654 = vmatpush.msra.mxu0 0.0
        %3655 = vmatpush.msra.mxu0 0.0
        %3656 = vmatpush.msra.mxu0 0.0
        %3657 = vmatpush.msra.mxu0 0.0
        %3658 = vmatpush.msra.mxu0 %v3635
        %3659 = vmatmul.f32.gmra.mxu0 %v3641
        %v3660 = vpop.f32.mrf.mxu0
        %v3661 = vadd.f32 0.0, %v3660
        %3662 = vdwg.mxu0
        %3663 = vmatpush.msra.mxu0 0.0
        %3664 = vmatpush.msra.mxu0 0.0
        %3665 = vmatpush.msra.mxu0 0.0
        %3666 = vmatpush.msra.mxu0 0.0
        %3667 = vmatpush.msra.mxu0 0.0
        %3668 = vmatpush.msra.mxu0 0.0
        %3669 = vmatpush.msra.mxu0 0.0
        %3670 = vmatpush.msra.mxu0 0.0
        %3671 = vmatpush.msra.mxu0 0.0
        %3672 = vmatpush.msra.mxu0 0.0
        %3673 = vmatpush.msra.mxu0 0.0
        %3674 = vmatpush.msra.mxu0 0.0
        %3675 = vmatpush.msra.mxu0 0.0
        %3676 = vmatpush.msra.mxu0 0.0
        %3677 = vmatpush.msra.mxu0 0.0
        %3678 = vmatpush.msra.mxu0 %v3636
        %3679 = vmatmul.f32.gmra.mxu0 %v3641
        %v3680 = vpop.f32.mrf.mxu0
        %v3681 = vadd.f32 0.0, %v3680
        %3682 = vdwg.mxu0
        %3683 = vmatpush.msra.mxu0 0.0
        %3684 = vmatpush.msra.mxu0 0.0
        %3685 = vmatpush.msra.mxu0 0.0
        %3686 = vmatpush.msra.mxu0 0.0
        %3687 = vmatpush.msra.mxu0 0.0
        %3688 = vmatpush.msra.mxu0 0.0
        %3689 = vmatpush.msra.mxu0 0.0
        %3690 = vmatpush.msra.mxu0 0.0
        %3691 = vmatpush.msra.mxu0 0.0
        %3692 = vmatpush.msra.mxu0 0.0
        %3693 = vmatpush.msra.mxu0 0.0
        %3694 = vmatpush.msra.mxu0 0.0
        %3695 = vmatpush.msra.mxu0 0.0
        %3696 = vmatpush.msra.mxu0 0.0
        %3697 = vmatpush.msra.mxu0 0.0
        %3698 = vmatpush.msra.mxu0 %v3634
        %3699 = vmatmul.f32.gmra.mxu0 %v3641
        %v3700 = vpop.f32.mrf.mxu0
        %v3701 = vadd.f32 0.0, %v3700
        %3702 = vdwg.mxu0
        %v3703 = vadd.f32 %v3624, %v3661
        %v3704 = vadd.f32 %v3625, %v3681
        %v3705 = vadd.f32 %v3626, %v3701
        %s3706 = scalar_lea.vmem %s7, 56
        %v3707 = vld [vmem:[%s3706] sm:$0xff]
        %3708 = vrot.lane.b32.xlu0 %v2985, 106
        %v3709 = vpop.permute.xlu0 %3708
        %3710 = vrot.lane.b32.xlu0 %v3045, 106
        %v3711 = vpop.permute.xlu0 %3710
        %3712 = vrot.lane.b32.xlu0 %v3105, 106
        %v3713 = vpop.permute.xlu0 %3712
        %v3714 = vsel %vm1056, %v3709, %v3711
        %v3715 = vsel %vm1056, %v3711, %v3713
        %v3720 = vsel %vm3184, %v3707, 0
        %3722 = vmatpush.msra.mxu0 0.0
        %3723 = vmatpush.msra.mxu0 0.0
        %3724 = vmatpush.msra.mxu0 0.0
        %3725 = vmatpush.msra.mxu0 0.0
        %3726 = vmatpush.msra.mxu0 0.0
        %3727 = vmatpush.msra.mxu0 0.0
        %3728 = vmatpush.msra.mxu0 0.0
        %3729 = vmatpush.msra.mxu0 0.0
        %3730 = vmatpush.msra.mxu0 0.0
        %3731 = vmatpush.msra.mxu0 0.0
        %3732 = vmatpush.msra.mxu0 0.0
        %3733 = vmatpush.msra.mxu0 0.0
        %3734 = vmatpush.msra.mxu0 0.0
        %3735 = vmatpush.msra.mxu0 0.0
        %3736 = vmatpush.msra.mxu0 0.0
        %3737 = vmatpush.msra.mxu0 %v3714
        %3738 = vmatmul.f32.gmra.mxu0 %v3720
        %v3739 = vpop.f32.mrf.mxu0
        %v3740 = vadd.f32 0.0, %v3739
        %3741 = vdwg.mxu0
        %3742 = vmatpush.msra.mxu0 0.0
        %3743 = vmatpush.msra.mxu0 0.0
        %3744 = vmatpush.msra.mxu0 0.0
        %3745 = vmatpush.msra.mxu0 0.0
        %3746 = vmatpush.msra.mxu0 0.0
        %3747 = vmatpush.msra.mxu0 0.0
        %3748 = vmatpush.msra.mxu0 0.0
        %3749 = vmatpush.msra.mxu0 0.0
        %3750 = vmatpush.msra.mxu0 0.0
        %3751 = vmatpush.msra.mxu0 0.0
        %3752 = vmatpush.msra.mxu0 0.0
        %3753 = vmatpush.msra.mxu0 0.0
        %3754 = vmatpush.msra.mxu0 0.0
        %3755 = vmatpush.msra.mxu0 0.0
        %3756 = vmatpush.msra.mxu0 0.0
        %3757 = vmatpush.msra.mxu0 %v3715
        %3758 = vmatmul.f32.gmra.mxu0 %v3720
        %v3759 = vpop.f32.mrf.mxu0
        %v3760 = vadd.f32 0.0, %v3759
        %3761 = vdwg.mxu0
        %3762 = vmatpush.msra.mxu0 0.0
        %3763 = vmatpush.msra.mxu0 0.0
        %3764 = vmatpush.msra.mxu0 0.0
        %3765 = vmatpush.msra.mxu0 0.0
        %3766 = vmatpush.msra.mxu0 0.0
        %3767 = vmatpush.msra.mxu0 0.0
        %3768 = vmatpush.msra.mxu0 0.0
        %3769 = vmatpush.msra.mxu0 0.0
        %3770 = vmatpush.msra.mxu0 0.0
        %3771 = vmatpush.msra.mxu0 0.0
        %3772 = vmatpush.msra.mxu0 0.0
        %3773 = vmatpush.msra.mxu0 0.0
        %3774 = vmatpush.msra.mxu0 0.0
        %3775 = vmatpush.msra.mxu0 0.0
        %3776 = vmatpush.msra.mxu0 0.0
        %3777 = vmatpush.msra.mxu0 %v3713
        %3778 = vmatmul.f32.gmra.mxu0 %v3720
        %v3779 = vpop.f32.mrf.mxu0
        %v3780 = vadd.f32 0.0, %v3779
        %3781 = vdwg.mxu0
        %v3782 = vadd.f32 %v3703, %v3740
        %v3783 = vadd.f32 %v3704, %v3760
        %v3784 = vadd.f32 %v3705, %v3780
        %s3785 = scalar_lea.vmem %s7, 64
        %v3786 = vld [vmem:[%s3785] sm:$0xff]
        %3787 = vrot.lane.b32.xlu0 %v2985, 105
        %v3788 = vpop.permute.xlu0 %3787
        %3789 = vrot.lane.b32.xlu0 %v3045, 105
        %v3790 = vpop.permute.xlu0 %3789
        %3791 = vrot.lane.b32.xlu0 %v3105, 105
        %v3792 = vpop.permute.xlu0 %3791
        %v3793 = vsel %vm1145, %v3788, %v3790
        %v3794 = vsel %vm1145, %v3790, %v3792
        %v3799 = vsel %vm3184, %v3786, 0
        %3801 = vmatpush.msra.mxu0 0.0
        %3802 = vmatpush.msra.mxu0 0.0
        %3803 = vmatpush.msra.mxu0 0.0
        %3804 = vmatpush.msra.mxu0 0.0
        %3805 = vmatpush.msra.mxu0 0.0
        %3806 = vmatpush.msra.mxu0 0.0
        %3807 = vmatpush.msra.mxu0 0.0
        %3808 = vmatpush.msra.mxu0 0.0
        %3809 = vmatpush.msra.mxu0 0.0
        %3810 = vmatpush.msra.mxu0 0.0
        %3811 = vmatpush.msra.mxu0 0.0
        %3812 = vmatpush.msra.mxu0 0.0
        %3813 = vmatpush.msra.mxu0 0.0
        %3814 = vmatpush.msra.mxu0 0.0
        %3815 = vmatpush.msra.mxu0 0.0
        %3816 = vmatpush.msra.mxu0 %v3793
        %3817 = vmatmul.f32.gmra.mxu0 %v3799
        %v3818 = vpop.f32.mrf.mxu0
        %v3819 = vadd.f32 0.0, %v3818
        %3820 = vdwg.mxu0
        %3821 = vmatpush.msra.mxu0 0.0
        %3822 = vmatpush.msra.mxu0 0.0
        %3823 = vmatpush.msra.mxu0 0.0
        %3824 = vmatpush.msra.mxu0 0.0
        %3825 = vmatpush.msra.mxu0 0.0
        %3826 = vmatpush.msra.mxu0 0.0
        %3827 = vmatpush.msra.mxu0 0.0
        %3828 = vmatpush.msra.mxu0 0.0
        %3829 = vmatpush.msra.mxu0 0.0
        %3830 = vmatpush.msra.mxu0 0.0
        %3831 = vmatpush.msra.mxu0 0.0
        %3832 = vmatpush.msra.mxu0 0.0
        %3833 = vmatpush.msra.mxu0 0.0
        %3834 = vmatpush.msra.mxu0 0.0
        %3835 = vmatpush.msra.mxu0 0.0
        %3836 = vmatpush.msra.mxu0 %v3794
        %3837 = vmatmul.f32.gmra.mxu0 %v3799
        %v3838 = vpop.f32.mrf.mxu0
        %v3839 = vadd.f32 0.0, %v3838
        %3840 = vdwg.mxu0
        %3841 = vmatpush.msra.mxu0 0.0
        %3842 = vmatpush.msra.mxu0 0.0
        %3843 = vmatpush.msra.mxu0 0.0
        %3844 = vmatpush.msra.mxu0 0.0
        %3845 = vmatpush.msra.mxu0 0.0
        %3846 = vmatpush.msra.mxu0 0.0
        %3847 = vmatpush.msra.mxu0 0.0
        %3848 = vmatpush.msra.mxu0 0.0
        %3849 = vmatpush.msra.mxu0 0.0
        %3850 = vmatpush.msra.mxu0 0.0
        %3851 = vmatpush.msra.mxu0 0.0
        %3852 = vmatpush.msra.mxu0 0.0
        %3853 = vmatpush.msra.mxu0 0.0
        %3854 = vmatpush.msra.mxu0 0.0
        %3855 = vmatpush.msra.mxu0 0.0
        %3856 = vmatpush.msra.mxu0 %v3792
        %3857 = vmatmul.f32.gmra.mxu0 %v3799
        %v3858 = vpop.f32.mrf.mxu0
        %v3859 = vadd.f32 0.0, %v3858
        %3860 = vdwg.mxu0
        %v3861 = vadd.f32 %v3782, %v3819
        %v3862 = vadd.f32 %v3783, %v3839
        %v3863 = vadd.f32 %v3784, %v3859
        %s3864 = scalar_lea.vmem %s7, 72
        %v3865 = vld [vmem:[%s3864] sm:$0xff]
        %3866 = vrot.lane.b32.xlu0 %v2985, 104
        %v3867 = vpop.permute.xlu0 %3866
        %3868 = vrot.lane.b32.xlu0 %v3045, 104
        %v3869 = vpop.permute.xlu0 %3868
        %3870 = vrot.lane.b32.xlu0 %v3105, 104
        %v3871 = vpop.permute.xlu0 %3870
        %v3872 = vsel %vm1234, %v3867, %v3869
        %v3873 = vsel %vm1234, %v3869, %v3871
        %v3878 = vsel %vm3184, %v3865, 0
        %3880 = vmatpush.msra.mxu0 0.0
        %3881 = vmatpush.msra.mxu0 0.0
        %3882 = vmatpush.msra.mxu0 0.0
        %3883 = vmatpush.msra.mxu0 0.0
        %3884 = vmatpush.msra.mxu0 0.0
        %3885 = vmatpush.msra.mxu0 0.0
        %3886 = vmatpush.msra.mxu0 0.0
        %3887 = vmatpush.msra.mxu0 0.0
        %3888 = vmatpush.msra.mxu0 0.0
        %3889 = vmatpush.msra.mxu0 0.0
        %3890 = vmatpush.msra.mxu0 0.0
        %3891 = vmatpush.msra.mxu0 0.0
        %3892 = vmatpush.msra.mxu0 0.0
        %3893 = vmatpush.msra.mxu0 0.0
        %3894 = vmatpush.msra.mxu0 0.0
        %3895 = vmatpush.msra.mxu0 %v3872
        %3896 = vmatmul.f32.gmra.mxu0 %v3878
        %v3897 = vpop.f32.mrf.mxu0
        %v3898 = vadd.f32 0.0, %v3897
        %3899 = vdwg.mxu0
        %3900 = vmatpush.msra.mxu0 0.0
        %3901 = vmatpush.msra.mxu0 0.0
        %3902 = vmatpush.msra.mxu0 0.0
        %3903 = vmatpush.msra.mxu0 0.0
        %3904 = vmatpush.msra.mxu0 0.0
        %3905 = vmatpush.msra.mxu0 0.0
        %3906 = vmatpush.msra.mxu0 0.0
        %3907 = vmatpush.msra.mxu0 0.0
        %3908 = vmatpush.msra.mxu0 0.0
        %3909 = vmatpush.msra.mxu0 0.0
        %3910 = vmatpush.msra.mxu0 0.0
        %3911 = vmatpush.msra.mxu0 0.0
        %3912 = vmatpush.msra.mxu0 0.0
        %3913 = vmatpush.msra.mxu0 0.0
        %3914 = vmatpush.msra.mxu0 0.0
        %3915 = vmatpush.msra.mxu0 %v3873
        %3916 = vmatmul.f32.gmra.mxu0 %v3878
        %v3917 = vpop.f32.mrf.mxu0
        %v3918 = vadd.f32 0.0, %v3917
        %3919 = vdwg.mxu0
        %3920 = vmatpush.msra.mxu0 0.0
        %3921 = vmatpush.msra.mxu0 0.0
        %3922 = vmatpush.msra.mxu0 0.0
        %3923 = vmatpush.msra.mxu0 0.0
        %3924 = vmatpush.msra.mxu0 0.0
        %3925 = vmatpush.msra.mxu0 0.0
        %3926 = vmatpush.msra.mxu0 0.0
        %3927 = vmatpush.msra.mxu0 0.0
        %3928 = vmatpush.msra.mxu0 0.0
        %3929 = vmatpush.msra.mxu0 0.0
        %3930 = vmatpush.msra.mxu0 0.0
        %3931 = vmatpush.msra.mxu0 0.0
        %3932 = vmatpush.msra.mxu0 0.0
        %3933 = vmatpush.msra.mxu0 0.0
        %3934 = vmatpush.msra.mxu0 0.0
        %3935 = vmatpush.msra.mxu0 %v3871
        %3936 = vmatmul.f32.gmra.mxu0 %v3878
        %v3937 = vpop.f32.mrf.mxu0
        %v3938 = vadd.f32 0.0, %v3937
        %3939 = vdwg.mxu0
        %v3940 = vadd.f32 %v3861, %v3898
        %v3941 = vadd.f32 %v3862, %v3918
        %v3942 = vadd.f32 %v3863, %v3938
        %s3943 = scalar_lea.vmem %s7, 80
        %v3944 = vld [vmem:[%s3943] sm:$0xff]
        %3945 = vrot.lane.b32.xlu0 %v2985, 88
        %v3946 = vpop.permute.xlu0 %3945
        %3947 = vrot.lane.b32.xlu0 %v3045, 88
        %v3948 = vpop.permute.xlu0 %3947
        %3949 = vrot.lane.b32.xlu0 %v3105, 88
        %v3950 = vpop.permute.xlu0 %3949
        %v3951 = vsel %vm1323, %v3946, %v3948
        %v3952 = vsel %vm1323, %v3948, %v3950
        %v3957 = vsel %vm3184, %v3944, 0
        %3959 = vmatpush.msra.mxu0 0.0
        %3960 = vmatpush.msra.mxu0 0.0
        %3961 = vmatpush.msra.mxu0 0.0
        %3962 = vmatpush.msra.mxu0 0.0
        %3963 = vmatpush.msra.mxu0 0.0
        %3964 = vmatpush.msra.mxu0 0.0
        %3965 = vmatpush.msra.mxu0 0.0
        %3966 = vmatpush.msra.mxu0 0.0
        %3967 = vmatpush.msra.mxu0 0.0
        %3968 = vmatpush.msra.mxu0 0.0
        %3969 = vmatpush.msra.mxu0 0.0
        %3970 = vmatpush.msra.mxu0 0.0
        %3971 = vmatpush.msra.mxu0 0.0
        %3972 = vmatpush.msra.mxu0 0.0
        %3973 = vmatpush.msra.mxu0 0.0
        %3974 = vmatpush.msra.mxu0 %v3951
        %3975 = vmatmul.f32.gmra.mxu0 %v3957
        %v3976 = vpop.f32.mrf.mxu0
        %v3977 = vadd.f32 0.0, %v3976
        %3978 = vdwg.mxu0
        %3979 = vmatpush.msra.mxu0 0.0
        %3980 = vmatpush.msra.mxu0 0.0
        %3981 = vmatpush.msra.mxu0 0.0
        %3982 = vmatpush.msra.mxu0 0.0
        %3983 = vmatpush.msra.mxu0 0.0
        %3984 = vmatpush.msra.mxu0 0.0
        %3985 = vmatpush.msra.mxu0 0.0
        %3986 = vmatpush.msra.mxu0 0.0
        %3987 = vmatpush.msra.mxu0 0.0
        %3988 = vmatpush.msra.mxu0 0.0
        %3989 = vmatpush.msra.mxu0 0.0
        %3990 = vmatpush.msra.mxu0 0.0
        %3991 = vmatpush.msra.mxu0 0.0
        %3992 = vmatpush.msra.mxu0 0.0
        %3993 = vmatpush.msra.mxu0 0.0
        %3994 = vmatpush.msra.mxu0 %v3952
        %3995 = vmatmul.f32.gmra.mxu0 %v3957
        %v3996 = vpop.f32.mrf.mxu0
        %v3997 = vadd.f32 0.0, %v3996
        %3998 = vdwg.mxu0
        %3999 = vmatpush.msra.mxu0 0.0
        %4000 = vmatpush.msra.mxu0 0.0
        %4001 = vmatpush.msra.mxu0 0.0
        %4002 = vmatpush.msra.mxu0 0.0
        %4003 = vmatpush.msra.mxu0 0.0
        %4004 = vmatpush.msra.mxu0 0.0
        %4005 = vmatpush.msra.mxu0 0.0
        %4006 = vmatpush.msra.mxu0 0.0
        %4007 = vmatpush.msra.mxu0 0.0
        %4008 = vmatpush.msra.mxu0 0.0
        %4009 = vmatpush.msra.mxu0 0.0
        %4010 = vmatpush.msra.mxu0 0.0
        %4011 = vmatpush.msra.mxu0 0.0
        %4012 = vmatpush.msra.mxu0 0.0
        %4013 = vmatpush.msra.mxu0 0.0
        %4014 = vmatpush.msra.mxu0 %v3950
        %4015 = vmatmul.f32.gmra.mxu0 %v3957
        %v4016 = vpop.f32.mrf.mxu0
        %v4017 = vadd.f32 0.0, %v4016
        %4018 = vdwg.mxu0
        %v4019 = vadd.f32 %v3940, %v3977
        %v4020 = vadd.f32 %v3941, %v3997
        %v4021 = vadd.f32 %v3942, %v4017
        %s4022 = scalar_lea.vmem %s7, 88
        %v4023 = vld [vmem:[%s4022] sm:$0xff]
        %4024 = vrot.lane.b32.xlu0 %v2985, 87
        %v4025 = vpop.permute.xlu0 %4024
        %4026 = vrot.lane.b32.xlu0 %v3045, 87
        %v4027 = vpop.permute.xlu0 %4026
        %4028 = vrot.lane.b32.xlu0 %v3105, 87
        %v4029 = vpop.permute.xlu0 %4028
        %v4030 = vsel %vm1412, %v4025, %v4027
        %v4031 = vsel %vm1412, %v4027, %v4029
        %v4036 = vsel %vm3184, %v4023, 0
        %4038 = vmatpush.msra.mxu0 0.0
        %4039 = vmatpush.msra.mxu0 0.0
        %4040 = vmatpush.msra.mxu0 0.0
        %4041 = vmatpush.msra.mxu0 0.0
        %4042 = vmatpush.msra.mxu0 0.0
        %4043 = vmatpush.msra.mxu0 0.0
        %4044 = vmatpush.msra.mxu0 0.0
        %4045 = vmatpush.msra.mxu0 0.0
        %4046 = vmatpush.msra.mxu0 0.0
        %4047 = vmatpush.msra.mxu0 0.0
        %4048 = vmatpush.msra.mxu0 0.0
        %4049 = vmatpush.msra.mxu0 0.0
        %4050 = vmatpush.msra.mxu0 0.0
        %4051 = vmatpush.msra.mxu0 0.0
        %4052 = vmatpush.msra.mxu0 0.0
        %4053 = vmatpush.msra.mxu0 %v4030
        %4054 = vmatmul.f32.gmra.mxu0 %v4036
        %v4055 = vpop.f32.mrf.mxu0
        %v4056 = vadd.f32 0.0, %v4055
        %4057 = vdwg.mxu0
        %4058 = vmatpush.msra.mxu0 0.0
        %4059 = vmatpush.msra.mxu0 0.0
        %4060 = vmatpush.msra.mxu0 0.0
        %4061 = vmatpush.msra.mxu0 0.0
        %4062 = vmatpush.msra.mxu0 0.0
        %4063 = vmatpush.msra.mxu0 0.0
        %4064 = vmatpush.msra.mxu0 0.0
        %4065 = vmatpush.msra.mxu0 0.0
        %4066 = vmatpush.msra.mxu0 0.0
        %4067 = vmatpush.msra.mxu0 0.0
        %4068 = vmatpush.msra.mxu0 0.0
        %4069 = vmatpush.msra.mxu0 0.0
        %4070 = vmatpush.msra.mxu0 0.0
        %4071 = vmatpush.msra.mxu0 0.0
        %4072 = vmatpush.msra.mxu0 0.0
        %4073 = vmatpush.msra.mxu0 %v4031
        %4074 = vmatmul.f32.gmra.mxu0 %v4036
        %v4075 = vpop.f32.mrf.mxu0
        %v4076 = vadd.f32 0.0, %v4075
        %4077 = vdwg.mxu0
        %4078 = vmatpush.msra.mxu0 0.0
        %4079 = vmatpush.msra.mxu0 0.0
        %4080 = vmatpush.msra.mxu0 0.0
        %4081 = vmatpush.msra.mxu0 0.0
        %4082 = vmatpush.msra.mxu0 0.0
        %4083 = vmatpush.msra.mxu0 0.0
        %4084 = vmatpush.msra.mxu0 0.0
        %4085 = vmatpush.msra.mxu0 0.0
        %4086 = vmatpush.msra.mxu0 0.0
        %4087 = vmatpush.msra.mxu0 0.0
        %4088 = vmatpush.msra.mxu0 0.0
        %4089 = vmatpush.msra.mxu0 0.0
        %4090 = vmatpush.msra.mxu0 0.0
        %4091 = vmatpush.msra.mxu0 0.0
        %4092 = vmatpush.msra.mxu0 0.0
        %4093 = vmatpush.msra.mxu0 %v4029
        %4094 = vmatmul.f32.gmra.mxu0 %v4036
        %v4095 = vpop.f32.mrf.mxu0
        %v4096 = vadd.f32 0.0, %v4095
        %4097 = vdwg.mxu0
        %v4098 = vadd.f32 %v4019, %v4056
        %v4099 = vadd.f32 %v4020, %v4076
        %v4100 = vadd.f32 %v4021, %v4096
        %s4101 = scalar_lea.vmem %s7, 96
        %v4102 = vld [vmem:[%s4101] sm:$0xff]
        %4103 = vrot.lane.b32.xlu0 %v2985, 86
        %v4104 = vpop.permute.xlu0 %4103
        %4105 = vrot.lane.b32.xlu0 %v3045, 86
        %v4106 = vpop.permute.xlu0 %4105
        %4107 = vrot.lane.b32.xlu0 %v3105, 86
        %v4108 = vpop.permute.xlu0 %4107
        %v4109 = vsel %vm1501, %v4104, %v4106
        %v4110 = vsel %vm1501, %v4106, %v4108
        %v4115 = vsel %vm3184, %v4102, 0
        %4117 = vmatpush.msra.mxu0 0.0
        %4118 = vmatpush.msra.mxu0 0.0
        %4119 = vmatpush.msra.mxu0 0.0
        %4120 = vmatpush.msra.mxu0 0.0
        %4121 = vmatpush.msra.mxu0 0.0
        %4122 = vmatpush.msra.mxu0 0.0
        %4123 = vmatpush.msra.mxu0 0.0
        %4124 = vmatpush.msra.mxu0 0.0
        %4125 = vmatpush.msra.mxu0 0.0
        %4126 = vmatpush.msra.mxu0 0.0
        %4127 = vmatpush.msra.mxu0 0.0
        %4128 = vmatpush.msra.mxu0 0.0
        %4129 = vmatpush.msra.mxu0 0.0
        %4130 = vmatpush.msra.mxu0 0.0
        %4131 = vmatpush.msra.mxu0 0.0
        %4132 = vmatpush.msra.mxu0 %v4109
        %4133 = vmatmul.f32.gmra.mxu0 %v4115
        %v4134 = vpop.f32.mrf.mxu0
        %v4135 = vadd.f32 0.0, %v4134
        %4136 = vdwg.mxu0
        %4137 = vmatpush.msra.mxu0 0.0
        %4138 = vmatpush.msra.mxu0 0.0
        %4139 = vmatpush.msra.mxu0 0.0
        %4140 = vmatpush.msra.mxu0 0.0
        %4141 = vmatpush.msra.mxu0 0.0
        %4142 = vmatpush.msra.mxu0 0.0
        %4143 = vmatpush.msra.mxu0 0.0
        %4144 = vmatpush.msra.mxu0 0.0
        %4145 = vmatpush.msra.mxu0 0.0
        %4146 = vmatpush.msra.mxu0 0.0
        %4147 = vmatpush.msra.mxu0 0.0
        %4148 = vmatpush.msra.mxu0 0.0
        %4149 = vmatpush.msra.mxu0 0.0
        %4150 = vmatpush.msra.mxu0 0.0
        %4151 = vmatpush.msra.mxu0 0.0
        %4152 = vmatpush.msra.mxu0 %v4110
        %4153 = vmatmul.f32.gmra.mxu0 %v4115
        %v4154 = vpop.f32.mrf.mxu0
        %v4155 = vadd.f32 0.0, %v4154
        %4156 = vdwg.mxu0
        %4157 = vmatpush.msra.mxu0 0.0
        %4158 = vmatpush.msra.mxu0 0.0
        %4159 = vmatpush.msra.mxu0 0.0
        %4160 = vmatpush.msra.mxu0 0.0
        %4161 = vmatpush.msra.mxu0 0.0
        %4162 = vmatpush.msra.mxu0 0.0
        %4163 = vmatpush.msra.mxu0 0.0
        %4164 = vmatpush.msra.mxu0 0.0
        %4165 = vmatpush.msra.mxu0 0.0
        %4166 = vmatpush.msra.mxu0 0.0
        %4167 = vmatpush.msra.mxu0 0.0
        %4168 = vmatpush.msra.mxu0 0.0
        %4169 = vmatpush.msra.mxu0 0.0
        %4170 = vmatpush.msra.mxu0 0.0
        %4171 = vmatpush.msra.mxu0 0.0
        %4172 = vmatpush.msra.mxu0 %v4108
        %4173 = vmatmul.f32.gmra.mxu0 %v4115
        %v4174 = vpop.f32.mrf.mxu0
        %v4175 = vadd.f32 0.0, %v4174
        %4176 = vdwg.mxu0
        %v4177 = vadd.f32 %v4098, %v4135
        %v4178 = vadd.f32 %v4099, %v4155
        %v4179 = vadd.f32 %v4100, %v4175
        %s4180 = scalar_lea.vmem %s7, 104
        %v4181 = vld [vmem:[%s4180] sm:$0xff]
        %4182 = vrot.lane.b32.xlu0 %v2985, 85
        %v4183 = vpop.permute.xlu0 %4182
        %4184 = vrot.lane.b32.xlu0 %v3045, 85
        %v4185 = vpop.permute.xlu0 %4184
        %4186 = vrot.lane.b32.xlu0 %v3105, 85
        %v4187 = vpop.permute.xlu0 %4186
        %v4188 = vsel %vm1590, %v4183, %v4185
        %v4189 = vsel %vm1590, %v4185, %v4187
        %v4194 = vsel %vm3184, %v4181, 0
        %4196 = vmatpush.msra.mxu0 0.0
        %4197 = vmatpush.msra.mxu0 0.0
        %4198 = vmatpush.msra.mxu0 0.0
        %4199 = vmatpush.msra.mxu0 0.0
        %4200 = vmatpush.msra.mxu0 0.0
        %4201 = vmatpush.msra.mxu0 0.0
        %4202 = vmatpush.msra.mxu0 0.0
        %4203 = vmatpush.msra.mxu0 0.0
        %4204 = vmatpush.msra.mxu0 0.0
        %4205 = vmatpush.msra.mxu0 0.0
        %4206 = vmatpush.msra.mxu0 0.0
        %4207 = vmatpush.msra.mxu0 0.0
        %4208 = vmatpush.msra.mxu0 0.0
        %4209 = vmatpush.msra.mxu0 0.0
        %4210 = vmatpush.msra.mxu0 0.0
        %4211 = vmatpush.msra.mxu0 %v4188
        %4212 = vmatmul.f32.gmra.mxu0 %v4194
        %v4213 = vpop.f32.mrf.mxu0
        %v4214 = vadd.f32 0.0, %v4213
        %4215 = vdwg.mxu0
        %4216 = vmatpush.msra.mxu0 0.0
        %4217 = vmatpush.msra.mxu0 0.0
        %4218 = vmatpush.msra.mxu0 0.0
        %4219 = vmatpush.msra.mxu0 0.0
        %4220 = vmatpush.msra.mxu0 0.0
        %4221 = vmatpush.msra.mxu0 0.0
        %4222 = vmatpush.msra.mxu0 0.0
        %4223 = vmatpush.msra.mxu0 0.0
        %4224 = vmatpush.msra.mxu0 0.0
        %4225 = vmatpush.msra.mxu0 0.0
        %4226 = vmatpush.msra.mxu0 0.0
        %4227 = vmatpush.msra.mxu0 0.0
        %4228 = vmatpush.msra.mxu0 0.0
        %4229 = vmatpush.msra.mxu0 0.0
        %4230 = vmatpush.msra.mxu0 0.0
        %4231 = vmatpush.msra.mxu0 %v4189
        %4232 = vmatmul.f32.gmra.mxu0 %v4194
        %v4233 = vpop.f32.mrf.mxu0
        %v4234 = vadd.f32 0.0, %v4233
        %4235 = vdwg.mxu0
        %4236 = vmatpush.msra.mxu0 0.0
        %4237 = vmatpush.msra.mxu0 0.0
        %4238 = vmatpush.msra.mxu0 0.0
        %4239 = vmatpush.msra.mxu0 0.0
        %4240 = vmatpush.msra.mxu0 0.0
        %4241 = vmatpush.msra.mxu0 0.0
        %4242 = vmatpush.msra.mxu0 0.0
        %4243 = vmatpush.msra.mxu0 0.0
        %4244 = vmatpush.msra.mxu0 0.0
        %4245 = vmatpush.msra.mxu0 0.0
        %4246 = vmatpush.msra.mxu0 0.0
        %4247 = vmatpush.msra.mxu0 0.0
        %4248 = vmatpush.msra.mxu0 0.0
        %4249 = vmatpush.msra.mxu0 0.0
        %4250 = vmatpush.msra.mxu0 0.0
        %4251 = vmatpush.msra.mxu0 %v4187
        %4252 = vmatmul.f32.gmra.mxu0 %v4194
        %v4253 = vpop.f32.mrf.mxu0
        %v4254 = vadd.f32 0.0, %v4253
        %4255 = vdwg.mxu0
        %v4256 = vadd.f32 %v4177, %v4214
        %v4257 = vadd.f32 %v4178, %v4234
        %v4258 = vadd.f32 %v4179, %v4254
        %s4259 = scalar_lea.vmem %s7, 112
        %v4260 = vld [vmem:[%s4259] sm:$0xff]
        %4261 = vrot.lane.b32.xlu0 %v2985, 84
        %v4262 = vpop.permute.xlu0 %4261
        %4263 = vrot.lane.b32.xlu0 %v3045, 84
        %v4264 = vpop.permute.xlu0 %4263
        %4265 = vrot.lane.b32.xlu0 %v3105, 84
        %v4266 = vpop.permute.xlu0 %4265
        %v4267 = vsel %vm1679, %v4262, %v4264
        %v4268 = vsel %vm1679, %v4264, %v4266
        %v4273 = vsel %vm3184, %v4260, 0
        %4275 = vmatpush.msra.mxu0 0.0
        %4276 = vmatpush.msra.mxu0 0.0
        %4277 = vmatpush.msra.mxu0 0.0
        %4278 = vmatpush.msra.mxu0 0.0
        %4279 = vmatpush.msra.mxu0 0.0
        %4280 = vmatpush.msra.mxu0 0.0
        %4281 = vmatpush.msra.mxu0 0.0
        %4282 = vmatpush.msra.mxu0 0.0
        %4283 = vmatpush.msra.mxu0 0.0
        %4284 = vmatpush.msra.mxu0 0.0
        %4285 = vmatpush.msra.mxu0 0.0
        %4286 = vmatpush.msra.mxu0 0.0
        %4287 = vmatpush.msra.mxu0 0.0
        %4288 = vmatpush.msra.mxu0 0.0
        %4289 = vmatpush.msra.mxu0 0.0
        %4290 = vmatpush.msra.mxu0 %v4267
        %4291 = vmatmul.f32.gmra.mxu0 %v4273
        %v4292 = vpop.f32.mrf.mxu0
        %v4293 = vadd.f32 0.0, %v4292
        %4294 = vdwg.mxu0
        %4295 = vmatpush.msra.mxu0 0.0
        %4296 = vmatpush.msra.mxu0 0.0
        %4297 = vmatpush.msra.mxu0 0.0
        %4298 = vmatpush.msra.mxu0 0.0
        %4299 = vmatpush.msra.mxu0 0.0
        %4300 = vmatpush.msra.mxu0 0.0
        %4301 = vmatpush.msra.mxu0 0.0
        %4302 = vmatpush.msra.mxu0 0.0
        %4303 = vmatpush.msra.mxu0 0.0
        %4304 = vmatpush.msra.mxu0 0.0
        %4305 = vmatpush.msra.mxu0 0.0
        %4306 = vmatpush.msra.mxu0 0.0
        %4307 = vmatpush.msra.mxu0 0.0
        %4308 = vmatpush.msra.mxu0 0.0
        %4309 = vmatpush.msra.mxu0 0.0
        %4310 = vmatpush.msra.mxu0 %v4268
        %4311 = vmatmul.f32.gmra.mxu0 %v4273
        %v4312 = vpop.f32.mrf.mxu0
        %v4313 = vadd.f32 0.0, %v4312
        %4314 = vdwg.mxu0
        %4315 = vmatpush.msra.mxu0 0.0
        %4316 = vmatpush.msra.mxu0 0.0
        %4317 = vmatpush.msra.mxu0 0.0
        %4318 = vmatpush.msra.mxu0 0.0
        %4319 = vmatpush.msra.mxu0 0.0
        %4320 = vmatpush.msra.mxu0 0.0
        %4321 = vmatpush.msra.mxu0 0.0
        %4322 = vmatpush.msra.mxu0 0.0
        %4323 = vmatpush.msra.mxu0 0.0
        %4324 = vmatpush.msra.mxu0 0.0
        %4325 = vmatpush.msra.mxu0 0.0
        %4326 = vmatpush.msra.mxu0 0.0
        %4327 = vmatpush.msra.mxu0 0.0
        %4328 = vmatpush.msra.mxu0 0.0
        %4329 = vmatpush.msra.mxu0 0.0
        %4330 = vmatpush.msra.mxu0 %v4266
        %4331 = vmatmul.f32.gmra.mxu0 %v4273
        %v4332 = vpop.f32.mrf.mxu0
        %v4333 = vadd.f32 0.0, %v4332
        %4334 = vdwg.mxu0
        %v4335 = vadd.f32 %v4256, %v4293
        %v4336 = vadd.f32 %v4257, %v4313
        %v4337 = vadd.f32 %v4258, %v4333
        %s4338 = scalar_lea.vmem %s7, 120
        %v4339 = vld [vmem:[%s4338] sm:$0xff]
        %4340 = vrot.lane.b32.xlu0 %v2985, 68
        %v4341 = vpop.permute.xlu0 %4340
        %4342 = vrot.lane.b32.xlu0 %v3045, 68
        %v4343 = vpop.permute.xlu0 %4342
        %4344 = vrot.lane.b32.xlu0 %v3105, 68
        %v4345 = vpop.permute.xlu0 %4344
        %v4346 = vsel %vm1768, %v4341, %v4343
        %v4347 = vsel %vm1768, %v4343, %v4345
        %v4352 = vsel %vm3184, %v4339, 0
        %4354 = vmatpush.msra.mxu0 0.0
        %4355 = vmatpush.msra.mxu0 0.0
        %4356 = vmatpush.msra.mxu0 0.0
        %4357 = vmatpush.msra.mxu0 0.0
        %4358 = vmatpush.msra.mxu0 0.0
        %4359 = vmatpush.msra.mxu0 0.0
        %4360 = vmatpush.msra.mxu0 0.0
        %4361 = vmatpush.msra.mxu0 0.0
        %4362 = vmatpush.msra.mxu0 0.0
        %4363 = vmatpush.msra.mxu0 0.0
        %4364 = vmatpush.msra.mxu0 0.0
        %4365 = vmatpush.msra.mxu0 0.0
        %4366 = vmatpush.msra.mxu0 0.0
        %4367 = vmatpush.msra.mxu0 0.0
        %4368 = vmatpush.msra.mxu0 0.0
        %4369 = vmatpush.msra.mxu0 %v4346
        %4370 = vmatmul.f32.gmra.mxu0 %v4352
        %v4371 = vpop.f32.mrf.mxu0
        %v4372 = vadd.f32 0.0, %v4371
        %4373 = vdwg.mxu0
        %4374 = vmatpush.msra.mxu0 0.0
        %4375 = vmatpush.msra.mxu0 0.0
        %4376 = vmatpush.msra.mxu0 0.0
        %4377 = vmatpush.msra.mxu0 0.0
        %4378 = vmatpush.msra.mxu0 0.0
        %4379 = vmatpush.msra.mxu0 0.0
        %4380 = vmatpush.msra.mxu0 0.0
        %4381 = vmatpush.msra.mxu0 0.0
        %4382 = vmatpush.msra.mxu0 0.0
        %4383 = vmatpush.msra.mxu0 0.0
        %4384 = vmatpush.msra.mxu0 0.0
        %4385 = vmatpush.msra.mxu0 0.0
        %4386 = vmatpush.msra.mxu0 0.0
        %4387 = vmatpush.msra.mxu0 0.0
        %4388 = vmatpush.msra.mxu0 0.0
        %4389 = vmatpush.msra.mxu0 %v4347
        %4390 = vmatmul.f32.gmra.mxu0 %v4352
        %v4391 = vpop.f32.mrf.mxu0
        %v4392 = vadd.f32 0.0, %v4391
        %4393 = vdwg.mxu0
        %4394 = vmatpush.msra.mxu0 0.0
        %4395 = vmatpush.msra.mxu0 0.0
        %4396 = vmatpush.msra.mxu0 0.0
        %4397 = vmatpush.msra.mxu0 0.0
        %4398 = vmatpush.msra.mxu0 0.0
        %4399 = vmatpush.msra.mxu0 0.0
        %4400 = vmatpush.msra.mxu0 0.0
        %4401 = vmatpush.msra.mxu0 0.0
        %4402 = vmatpush.msra.mxu0 0.0
        %4403 = vmatpush.msra.mxu0 0.0
        %4404 = vmatpush.msra.mxu0 0.0
        %4405 = vmatpush.msra.mxu0 0.0
        %4406 = vmatpush.msra.mxu0 0.0
        %4407 = vmatpush.msra.mxu0 0.0
        %4408 = vmatpush.msra.mxu0 0.0
        %4409 = vmatpush.msra.mxu0 %v4345
        %4410 = vmatmul.f32.gmra.mxu0 %v4352
        %v4411 = vpop.f32.mrf.mxu0
        %v4412 = vadd.f32 0.0, %v4411
        %4413 = vdwg.mxu0
        %v4414 = vadd.f32 %v4335, %v4372
        %v4415 = vadd.f32 %v4336, %v4392
        %v4416 = vadd.f32 %v4337, %v4412
        %s4417 = scalar_lea.vmem %s7, 128
        %v4418 = vld [vmem:[%s4417] sm:$0xff]
        %4419 = vrot.lane.b32.xlu0 %v2985, 67
        %v4420 = vpop.permute.xlu0 %4419
        %4421 = vrot.lane.b32.xlu0 %v3045, 67
        %v4422 = vpop.permute.xlu0 %4421
        %4423 = vrot.lane.b32.xlu0 %v3105, 67
        %v4424 = vpop.permute.xlu0 %4423
        %v4425 = vsel %vm1857, %v4420, %v4422
        %v4426 = vsel %vm1857, %v4422, %v4424
        %v4431 = vsel %vm3184, %v4418, 0
        %4433 = vmatpush.msra.mxu0 0.0
        %4434 = vmatpush.msra.mxu0 0.0
        %4435 = vmatpush.msra.mxu0 0.0
        %4436 = vmatpush.msra.mxu0 0.0
        %4437 = vmatpush.msra.mxu0 0.0
        %4438 = vmatpush.msra.mxu0 0.0
        %4439 = vmatpush.msra.mxu0 0.0
        %4440 = vmatpush.msra.mxu0 0.0
        %4441 = vmatpush.msra.mxu0 0.0
        %4442 = vmatpush.msra.mxu0 0.0
        %4443 = vmatpush.msra.mxu0 0.0
        %4444 = vmatpush.msra.mxu0 0.0
        %4445 = vmatpush.msra.mxu0 0.0
        %4446 = vmatpush.msra.mxu0 0.0
        %4447 = vmatpush.msra.mxu0 0.0
        %4448 = vmatpush.msra.mxu0 %v4425
        %4449 = vmatmul.f32.gmra.mxu0 %v4431
        %v4450 = vpop.f32.mrf.mxu0
        %v4451 = vadd.f32 0.0, %v4450
        %4452 = vdwg.mxu0
        %4453 = vmatpush.msra.mxu0 0.0
        %4454 = vmatpush.msra.mxu0 0.0
        %4455 = vmatpush.msra.mxu0 0.0
        %4456 = vmatpush.msra.mxu0 0.0
        %4457 = vmatpush.msra.mxu0 0.0
        %4458 = vmatpush.msra.mxu0 0.0
        %4459 = vmatpush.msra.mxu0 0.0
        %4460 = vmatpush.msra.mxu0 0.0
        %4461 = vmatpush.msra.mxu0 0.0
        %4462 = vmatpush.msra.mxu0 0.0
        %4463 = vmatpush.msra.mxu0 0.0
        %4464 = vmatpush.msra.mxu0 0.0
        %4465 = vmatpush.msra.mxu0 0.0
        %4466 = vmatpush.msra.mxu0 0.0
        %4467 = vmatpush.msra.mxu0 0.0
        %4468 = vmatpush.msra.mxu0 %v4426
        %4469 = vmatmul.f32.gmra.mxu0 %v4431
        %v4470 = vpop.f32.mrf.mxu0
        %v4471 = vadd.f32 0.0, %v4470
        %4472 = vdwg.mxu0
        %4473 = vmatpush.msra.mxu0 0.0
        %4474 = vmatpush.msra.mxu0 0.0
        %4475 = vmatpush.msra.mxu0 0.0
        %4476 = vmatpush.msra.mxu0 0.0
        %4477 = vmatpush.msra.mxu0 0.0
        %4478 = vmatpush.msra.mxu0 0.0
        %4479 = vmatpush.msra.mxu0 0.0
        %4480 = vmatpush.msra.mxu0 0.0
        %4481 = vmatpush.msra.mxu0 0.0
        %4482 = vmatpush.msra.mxu0 0.0
        %4483 = vmatpush.msra.mxu0 0.0
        %4484 = vmatpush.msra.mxu0 0.0
        %4485 = vmatpush.msra.mxu0 0.0
        %4486 = vmatpush.msra.mxu0 0.0
        %4487 = vmatpush.msra.mxu0 0.0
        %4488 = vmatpush.msra.mxu0 %v4424
        %4489 = vmatmul.f32.gmra.mxu0 %v4431
        %v4490 = vpop.f32.mrf.mxu0
        %v4491 = vadd.f32 0.0, %v4490
        %4492 = vdwg.mxu0
        %v4493 = vadd.f32 %v4414, %v4451
        %v4494 = vadd.f32 %v4415, %v4471
        %v4495 = vadd.f32 %v4416, %v4491
        %s4496 = scalar_lea.vmem %s7, 136
        %v4497 = vld [vmem:[%s4496] sm:$0xff]
        %4498 = vrot.lane.b32.xlu0 %v2985, 66
        %v4499 = vpop.permute.xlu0 %4498
        %4500 = vrot.lane.b32.xlu0 %v3045, 66
        %v4501 = vpop.permute.xlu0 %4500
        %4502 = vrot.lane.b32.xlu0 %v3105, 66
        %v4503 = vpop.permute.xlu0 %4502
        %v4504 = vsel %vm1946, %v4499, %v4501
        %v4505 = vsel %vm1946, %v4501, %v4503
        %v4510 = vsel %vm3184, %v4497, 0
        %4512 = vmatpush.msra.mxu0 0.0
        %4513 = vmatpush.msra.mxu0 0.0
        %4514 = vmatpush.msra.mxu0 0.0
        %4515 = vmatpush.msra.mxu0 0.0
        %4516 = vmatpush.msra.mxu0 0.0
        %4517 = vmatpush.msra.mxu0 0.0
        %4518 = vmatpush.msra.mxu0 0.0
        %4519 = vmatpush.msra.mxu0 0.0
        %4520 = vmatpush.msra.mxu0 0.0
        %4521 = vmatpush.msra.mxu0 0.0
        %4522 = vmatpush.msra.mxu0 0.0
        %4523 = vmatpush.msra.mxu0 0.0
        %4524 = vmatpush.msra.mxu0 0.0
        %4525 = vmatpush.msra.mxu0 0.0
        %4526 = vmatpush.msra.mxu0 0.0
        %4527 = vmatpush.msra.mxu0 %v4504
        %4528 = vmatmul.f32.gmra.mxu0 %v4510
        %v4529 = vpop.f32.mrf.mxu0
        %v4530 = vadd.f32 0.0, %v4529
        %4531 = vdwg.mxu0
        %4532 = vmatpush.msra.mxu0 0.0
        %4533 = vmatpush.msra.mxu0 0.0
        %4534 = vmatpush.msra.mxu0 0.0
        %4535 = vmatpush.msra.mxu0 0.0
        %4536 = vmatpush.msra.mxu0 0.0
        %4537 = vmatpush.msra.mxu0 0.0
        %4538 = vmatpush.msra.mxu0 0.0
        %4539 = vmatpush.msra.mxu0 0.0
        %4540 = vmatpush.msra.mxu0 0.0
        %4541 = vmatpush.msra.mxu0 0.0
        %4542 = vmatpush.msra.mxu0 0.0
        %4543 = vmatpush.msra.mxu0 0.0
        %4544 = vmatpush.msra.mxu0 0.0
        %4545 = vmatpush.msra.mxu0 0.0
        %4546 = vmatpush.msra.mxu0 0.0
        %4547 = vmatpush.msra.mxu0 %v4505
        %4548 = vmatmul.f32.gmra.mxu0 %v4510
        %v4549 = vpop.f32.mrf.mxu0
        %v4550 = vadd.f32 0.0, %v4549
        %4551 = vdwg.mxu0
        %4552 = vmatpush.msra.mxu0 0.0
        %4553 = vmatpush.msra.mxu0 0.0
        %4554 = vmatpush.msra.mxu0 0.0
        %4555 = vmatpush.msra.mxu0 0.0
        %4556 = vmatpush.msra.mxu0 0.0
        %4557 = vmatpush.msra.mxu0 0.0
        %4558 = vmatpush.msra.mxu0 0.0
        %4559 = vmatpush.msra.mxu0 0.0
        %4560 = vmatpush.msra.mxu0 0.0
        %4561 = vmatpush.msra.mxu0 0.0
        %4562 = vmatpush.msra.mxu0 0.0
        %4563 = vmatpush.msra.mxu0 0.0
        %4564 = vmatpush.msra.mxu0 0.0
        %4565 = vmatpush.msra.mxu0 0.0
        %4566 = vmatpush.msra.mxu0 0.0
        %4567 = vmatpush.msra.mxu0 %v4503
        %4568 = vmatmul.f32.gmra.mxu0 %v4510
        %v4569 = vpop.f32.mrf.mxu0
        %v4570 = vadd.f32 0.0, %v4569
        %4571 = vdwg.mxu0
        %v4572 = vadd.f32 %v4493, %v4530
        %v4573 = vadd.f32 %v4494, %v4550
        %v4574 = vadd.f32 %v4495, %v4570
        %s4575 = scalar_lea.vmem %s7, 144
        %v4576 = vld [vmem:[%s4575] sm:$0xff]
        %4577 = vrot.lane.b32.xlu0 %v2985, 65
        %v4578 = vpop.permute.xlu0 %4577
        %4579 = vrot.lane.b32.xlu0 %v3045, 65
        %v4580 = vpop.permute.xlu0 %4579
        %4581 = vrot.lane.b32.xlu0 %v3105, 65
        %v4582 = vpop.permute.xlu0 %4581
        %v4583 = vsel %vm2035, %v4578, %v4580
        %v4584 = vsel %vm2035, %v4580, %v4582
        %v4589 = vsel %vm3184, %v4576, 0
        %4591 = vmatpush.msra.mxu0 0.0
        %4592 = vmatpush.msra.mxu0 0.0
        %4593 = vmatpush.msra.mxu0 0.0
        %4594 = vmatpush.msra.mxu0 0.0
        %4595 = vmatpush.msra.mxu0 0.0
        %4596 = vmatpush.msra.mxu0 0.0
        %4597 = vmatpush.msra.mxu0 0.0
        %4598 = vmatpush.msra.mxu0 0.0
        %4599 = vmatpush.msra.mxu0 0.0
        %4600 = vmatpush.msra.mxu0 0.0
        %4601 = vmatpush.msra.mxu0 0.0
        %4602 = vmatpush.msra.mxu0 0.0
        %4603 = vmatpush.msra.mxu0 0.0
        %4604 = vmatpush.msra.mxu0 0.0
        %4605 = vmatpush.msra.mxu0 0.0
        %4606 = vmatpush.msra.mxu0 %v4583
        %4607 = vmatmul.f32.gmra.mxu0 %v4589
        %v4608 = vpop.f32.mrf.mxu0
        %v4609 = vadd.f32 0.0, %v4608
        %4610 = vdwg.mxu0
        %4611 = vmatpush.msra.mxu0 0.0
        %4612 = vmatpush.msra.mxu0 0.0
        %4613 = vmatpush.msra.mxu0 0.0
        %4614 = vmatpush.msra.mxu0 0.0
        %4615 = vmatpush.msra.mxu0 0.0
        %4616 = vmatpush.msra.mxu0 0.0
        %4617 = vmatpush.msra.mxu0 0.0
        %4618 = vmatpush.msra.mxu0 0.0
        %4619 = vmatpush.msra.mxu0 0.0
        %4620 = vmatpush.msra.mxu0 0.0
        %4621 = vmatpush.msra.mxu0 0.0
        %4622 = vmatpush.msra.mxu0 0.0
        %4623 = vmatpush.msra.mxu0 0.0
        %4624 = vmatpush.msra.mxu0 0.0
        %4625 = vmatpush.msra.mxu0 0.0
        %4626 = vmatpush.msra.mxu0 %v4584
        %4627 = vmatmul.f32.gmra.mxu0 %v4589
        %v4628 = vpop.f32.mrf.mxu0
        %v4629 = vadd.f32 0.0, %v4628
        %4630 = vdwg.mxu0
        %4631 = vmatpush.msra.mxu0 0.0
        %4632 = vmatpush.msra.mxu0 0.0
        %4633 = vmatpush.msra.mxu0 0.0
        %4634 = vmatpush.msra.mxu0 0.0
        %4635 = vmatpush.msra.mxu0 0.0
        %4636 = vmatpush.msra.mxu0 0.0
        %4637 = vmatpush.msra.mxu0 0.0
        %4638 = vmatpush.msra.mxu0 0.0
        %4639 = vmatpush.msra.mxu0 0.0
        %4640 = vmatpush.msra.mxu0 0.0
        %4641 = vmatpush.msra.mxu0 0.0
        %4642 = vmatpush.msra.mxu0 0.0
        %4643 = vmatpush.msra.mxu0 0.0
        %4644 = vmatpush.msra.mxu0 0.0
        %4645 = vmatpush.msra.mxu0 0.0
        %4646 = vmatpush.msra.mxu0 %v4582
        %4647 = vmatmul.f32.gmra.mxu0 %v4589
        %v4648 = vpop.f32.mrf.mxu0
        %v4649 = vadd.f32 0.0, %v4648
        %4650 = vdwg.mxu0
        %v4651 = vadd.f32 %v4572, %v4609
        %v4652 = vadd.f32 %v4573, %v4629
        %v4653 = vadd.f32 %v4574, %v4649
        %s4654 = scalar_lea.vmem %s7, 152
        %v4655 = vld [vmem:[%s4654] sm:$0xff]
        %4656 = vrot.lane.b32.xlu0 %v2985, 64
        %v4657 = vpop.permute.xlu0 %4656
        %4658 = vrot.lane.b32.xlu0 %v3045, 64
        %v4659 = vpop.permute.xlu0 %4658
        %4660 = vrot.lane.b32.xlu0 %v3105, 64
        %v4661 = vpop.permute.xlu0 %4660
        %v4662 = vsel %vm2124, %v4657, %v4659
        %v4663 = vsel %vm2124, %v4659, %v4661
        %v4668 = vsel %vm3184, %v4655, 0
        %4670 = vmatpush.msra.mxu0 0.0
        %4671 = vmatpush.msra.mxu0 0.0
        %4672 = vmatpush.msra.mxu0 0.0
        %4673 = vmatpush.msra.mxu0 0.0
        %4674 = vmatpush.msra.mxu0 0.0
        %4675 = vmatpush.msra.mxu0 0.0
        %4676 = vmatpush.msra.mxu0 0.0
        %4677 = vmatpush.msra.mxu0 0.0
        %4678 = vmatpush.msra.mxu0 0.0
        %4679 = vmatpush.msra.mxu0 0.0
        %4680 = vmatpush.msra.mxu0 0.0
        %4681 = vmatpush.msra.mxu0 0.0
        %4682 = vmatpush.msra.mxu0 0.0
        %4683 = vmatpush.msra.mxu0 0.0
        %4684 = vmatpush.msra.mxu0 0.0
        %4685 = vmatpush.msra.mxu0 %v4662
        %4686 = vmatmul.f32.gmra.mxu0 %v4668
        %v4687 = vpop.f32.mrf.mxu0
        %v4688 = vadd.f32 0.0, %v4687
        %4689 = vdwg.mxu0
        %4690 = vmatpush.msra.mxu0 0.0
        %4691 = vmatpush.msra.mxu0 0.0
        %4692 = vmatpush.msra.mxu0 0.0
        %4693 = vmatpush.msra.mxu0 0.0
        %4694 = vmatpush.msra.mxu0 0.0
        %4695 = vmatpush.msra.mxu0 0.0
        %4696 = vmatpush.msra.mxu0 0.0
        %4697 = vmatpush.msra.mxu0 0.0
        %4698 = vmatpush.msra.mxu0 0.0
        %4699 = vmatpush.msra.mxu0 0.0
        %4700 = vmatpush.msra.mxu0 0.0
        %4701 = vmatpush.msra.mxu0 0.0
        %4702 = vmatpush.msra.mxu0 0.0
        %4703 = vmatpush.msra.mxu0 0.0
        %4704 = vmatpush.msra.mxu0 0.0
        %4705 = vmatpush.msra.mxu0 %v4663
        %4706 = vmatmul.f32.gmra.mxu0 %v4668
        %v4707 = vpop.f32.mrf.mxu0
        %v4708 = vadd.f32 0.0, %v4707
        %4709 = vdwg.mxu0
        %4710 = vmatpush.msra.mxu0 0.0
        %4711 = vmatpush.msra.mxu0 0.0
        %4712 = vmatpush.msra.mxu0 0.0
        %4713 = vmatpush.msra.mxu0 0.0
        %4714 = vmatpush.msra.mxu0 0.0
        %4715 = vmatpush.msra.mxu0 0.0
        %4716 = vmatpush.msra.mxu0 0.0
        %4717 = vmatpush.msra.mxu0 0.0
        %4718 = vmatpush.msra.mxu0 0.0
        %4719 = vmatpush.msra.mxu0 0.0
        %4720 = vmatpush.msra.mxu0 0.0
        %4721 = vmatpush.msra.mxu0 0.0
        %4722 = vmatpush.msra.mxu0 0.0
        %4723 = vmatpush.msra.mxu0 0.0
        %4724 = vmatpush.msra.mxu0 0.0
        %4725 = vmatpush.msra.mxu0 %v4661
        %4726 = vmatmul.f32.gmra.mxu0 %v4668
        %v4727 = vpop.f32.mrf.mxu0
        %v4728 = vadd.f32 0.0, %v4727
        %4729 = vdwg.mxu0
        %v4730 = vadd.f32 %v4651, %v4688
        %v4731 = vadd.f32 %v4652, %v4708
        %v4732 = vadd.f32 %v4653, %v4728
        %s4733 = scalar_lea.vmem %s7, 160
        %v4734 = vld [vmem:[%s4733] sm:$0xff]
        %4736 = vrot.lane.b32.xlu0 %v2985, 48
        %v4737 = vpop.permute.xlu0 %4736
        %4738 = vrot.lane.b32.xlu0 %v3045, 48
        %v4739 = vpop.permute.xlu0 %4738
        %4740 = vrot.lane.b32.xlu0 %v3105, 48
        %v4741 = vpop.permute.xlu0 %4740
        %4742 = vrot.lane.b32.xlu0 %v3165, 48
        %v4743 = vpop.permute.xlu0 %4742
        %v4744 = vsel %vm2216, %v4737, %v4739
        %v4745 = vsel %vm2216, %v4739, %v4741
        %v4746 = vsel %vm2216, %v4741, %v4743
        %v4751 = vsel %vm3184, %v4734, 0
        %4753 = vmatpush.msra.mxu0 0.0
        %4754 = vmatpush.msra.mxu0 0.0
        %4755 = vmatpush.msra.mxu0 0.0
        %4756 = vmatpush.msra.mxu0 0.0
        %4757 = vmatpush.msra.mxu0 0.0
        %4758 = vmatpush.msra.mxu0 0.0
        %4759 = vmatpush.msra.mxu0 0.0
        %4760 = vmatpush.msra.mxu0 0.0
        %4761 = vmatpush.msra.mxu0 0.0
        %4762 = vmatpush.msra.mxu0 0.0
        %4763 = vmatpush.msra.mxu0 0.0
        %4764 = vmatpush.msra.mxu0 0.0
        %4765 = vmatpush.msra.mxu0 0.0
        %4766 = vmatpush.msra.mxu0 0.0
        %4767 = vmatpush.msra.mxu0 0.0
        %4768 = vmatpush.msra.mxu0 %v4744
        %4769 = vmatmul.f32.gmra.mxu0 %v4751
        %v4770 = vpop.f32.mrf.mxu0
        %v4771 = vadd.f32 0.0, %v4770
        %4772 = vdwg.mxu0
        %4773 = vmatpush.msra.mxu0 0.0
        %4774 = vmatpush.msra.mxu0 0.0
        %4775 = vmatpush.msra.mxu0 0.0
        %4776 = vmatpush.msra.mxu0 0.0
        %4777 = vmatpush.msra.mxu0 0.0
        %4778 = vmatpush.msra.mxu0 0.0
        %4779 = vmatpush.msra.mxu0 0.0
        %4780 = vmatpush.msra.mxu0 0.0
        %4781 = vmatpush.msra.mxu0 0.0
        %4782 = vmatpush.msra.mxu0 0.0
        %4783 = vmatpush.msra.mxu0 0.0
        %4784 = vmatpush.msra.mxu0 0.0
        %4785 = vmatpush.msra.mxu0 0.0
        %4786 = vmatpush.msra.mxu0 0.0
        %4787 = vmatpush.msra.mxu0 0.0
        %4788 = vmatpush.msra.mxu0 %v4745
        %4789 = vmatmul.f32.gmra.mxu0 %v4751
        %v4790 = vpop.f32.mrf.mxu0
        %v4791 = vadd.f32 0.0, %v4790
        %4792 = vdwg.mxu0
        %4793 = vmatpush.msra.mxu0 0.0
        %4794 = vmatpush.msra.mxu0 0.0
        %4795 = vmatpush.msra.mxu0 0.0
        %4796 = vmatpush.msra.mxu0 0.0
        %4797 = vmatpush.msra.mxu0 0.0
        %4798 = vmatpush.msra.mxu0 0.0
        %4799 = vmatpush.msra.mxu0 0.0
        %4800 = vmatpush.msra.mxu0 0.0
        %4801 = vmatpush.msra.mxu0 0.0
        %4802 = vmatpush.msra.mxu0 0.0
        %4803 = vmatpush.msra.mxu0 0.0
        %4804 = vmatpush.msra.mxu0 0.0
        %4805 = vmatpush.msra.mxu0 0.0
        %4806 = vmatpush.msra.mxu0 0.0
        %4807 = vmatpush.msra.mxu0 0.0
        %4808 = vmatpush.msra.mxu0 %v4746
        %4809 = vmatmul.f32.gmra.mxu0 %v4751
        %v4810 = vpop.f32.mrf.mxu0
        %v4811 = vadd.f32 0.0, %v4810
        %4812 = vdwg.mxu0
        %v4813 = vadd.f32 %v4730, %v4771
        %v4814 = vadd.f32 %v4731, %v4791
        %v4815 = vadd.f32 %v4732, %v4811
        %s4816 = scalar_lea.vmem %s7, 168
        %v4817 = vld [vmem:[%s4816] sm:$0xff]
        %4818 = vrot.lane.b32.xlu0 %v2985, 47
        %v4819 = vpop.permute.xlu0 %4818
        %4820 = vrot.lane.b32.xlu0 %v3045, 47
        %v4821 = vpop.permute.xlu0 %4820
        %4822 = vrot.lane.b32.xlu0 %v3105, 47
        %v4823 = vpop.permute.xlu0 %4822
        %4824 = vrot.lane.b32.xlu0 %v3165, 47
        %v4825 = vpop.permute.xlu0 %4824
        %v4826 = vsel %vm2309, %v4819, %v4821
        %v4827 = vsel %vm2309, %v4821, %v4823
        %v4828 = vsel %vm2309, %v4823, %v4825
        %v4833 = vsel %vm3184, %v4817, 0
        %4835 = vmatpush.msra.mxu0 0.0
        %4836 = vmatpush.msra.mxu0 0.0
        %4837 = vmatpush.msra.mxu0 0.0
        %4838 = vmatpush.msra.mxu0 0.0
        %4839 = vmatpush.msra.mxu0 0.0
        %4840 = vmatpush.msra.mxu0 0.0
        %4841 = vmatpush.msra.mxu0 0.0
        %4842 = vmatpush.msra.mxu0 0.0
        %4843 = vmatpush.msra.mxu0 0.0
        %4844 = vmatpush.msra.mxu0 0.0
        %4845 = vmatpush.msra.mxu0 0.0
        %4846 = vmatpush.msra.mxu0 0.0
        %4847 = vmatpush.msra.mxu0 0.0
        %4848 = vmatpush.msra.mxu0 0.0
        %4849 = vmatpush.msra.mxu0 0.0
        %4850 = vmatpush.msra.mxu0 %v4826
        %4851 = vmatmul.f32.gmra.mxu0 %v4833
        %v4852 = vpop.f32.mrf.mxu0
        %v4853 = vadd.f32 0.0, %v4852
        %4854 = vdwg.mxu0
        %4855 = vmatpush.msra.mxu0 0.0
        %4856 = vmatpush.msra.mxu0 0.0
        %4857 = vmatpush.msra.mxu0 0.0
        %4858 = vmatpush.msra.mxu0 0.0
        %4859 = vmatpush.msra.mxu0 0.0
        %4860 = vmatpush.msra.mxu0 0.0
        %4861 = vmatpush.msra.mxu0 0.0
        %4862 = vmatpush.msra.mxu0 0.0
        %4863 = vmatpush.msra.mxu0 0.0
        %4864 = vmatpush.msra.mxu0 0.0
        %4865 = vmatpush.msra.mxu0 0.0
        %4866 = vmatpush.msra.mxu0 0.0
        %4867 = vmatpush.msra.mxu0 0.0
        %4868 = vmatpush.msra.mxu0 0.0
        %4869 = vmatpush.msra.mxu0 0.0
        %4870 = vmatpush.msra.mxu0 %v4827
        %4871 = vmatmul.f32.gmra.mxu0 %v4833
        %v4872 = vpop.f32.mrf.mxu0
        %v4873 = vadd.f32 0.0, %v4872
        %4874 = vdwg.mxu0
        %4875 = vmatpush.msra.mxu0 0.0
        %4876 = vmatpush.msra.mxu0 0.0
        %4877 = vmatpush.msra.mxu0 0.0
        %4878 = vmatpush.msra.mxu0 0.0
        %4879 = vmatpush.msra.mxu0 0.0
        %4880 = vmatpush.msra.mxu0 0.0
        %4881 = vmatpush.msra.mxu0 0.0
        %4882 = vmatpush.msra.mxu0 0.0
        %4883 = vmatpush.msra.mxu0 0.0
        %4884 = vmatpush.msra.mxu0 0.0
        %4885 = vmatpush.msra.mxu0 0.0
        %4886 = vmatpush.msra.mxu0 0.0
        %4887 = vmatpush.msra.mxu0 0.0
        %4888 = vmatpush.msra.mxu0 0.0
        %4889 = vmatpush.msra.mxu0 0.0
        %4890 = vmatpush.msra.mxu0 %v4828
        %4891 = vmatmul.f32.gmra.mxu0 %v4833
        %v4892 = vpop.f32.mrf.mxu0
        %v4893 = vadd.f32 0.0, %v4892
        %4894 = vdwg.mxu0
        %v4895 = vadd.f32 %v4813, %v4853
        %v4896 = vadd.f32 %v4814, %v4873
        %v4897 = vadd.f32 %v4815, %v4893
        %s4898 = scalar_lea.vmem %s7, 176
        %v4899 = vld [vmem:[%s4898] sm:$0xff]
        %4900 = vrot.lane.b32.xlu0 %v2985, 46
        %v4901 = vpop.permute.xlu0 %4900
        %4902 = vrot.lane.b32.xlu0 %v3045, 46
        %v4903 = vpop.permute.xlu0 %4902
        %4904 = vrot.lane.b32.xlu0 %v3105, 46
        %v4905 = vpop.permute.xlu0 %4904
        %4906 = vrot.lane.b32.xlu0 %v3165, 46
        %v4907 = vpop.permute.xlu0 %4906
        %v4908 = vsel %vm2402, %v4901, %v4903
        %v4909 = vsel %vm2402, %v4903, %v4905
        %v4910 = vsel %vm2402, %v4905, %v4907
        %v4915 = vsel %vm3184, %v4899, 0
        %4917 = vmatpush.msra.mxu0 0.0
        %4918 = vmatpush.msra.mxu0 0.0
        %4919 = vmatpush.msra.mxu0 0.0
        %4920 = vmatpush.msra.mxu0 0.0
        %4921 = vmatpush.msra.mxu0 0.0
        %4922 = vmatpush.msra.mxu0 0.0
        %4923 = vmatpush.msra.mxu0 0.0
        %4924 = vmatpush.msra.mxu0 0.0
        %4925 = vmatpush.msra.mxu0 0.0
        %4926 = vmatpush.msra.mxu0 0.0
        %4927 = vmatpush.msra.mxu0 0.0
        %4928 = vmatpush.msra.mxu0 0.0
        %4929 = vmatpush.msra.mxu0 0.0
        %4930 = vmatpush.msra.mxu0 0.0
        %4931 = vmatpush.msra.mxu0 0.0
        %4932 = vmatpush.msra.mxu0 %v4908
        %4933 = vmatmul.f32.gmra.mxu0 %v4915
        %v4934 = vpop.f32.mrf.mxu0
        %v4935 = vadd.f32 0.0, %v4934
        %4936 = vdwg.mxu0
        %4937 = vmatpush.msra.mxu0 0.0
        %4938 = vmatpush.msra.mxu0 0.0
        %4939 = vmatpush.msra.mxu0 0.0
        %4940 = vmatpush.msra.mxu0 0.0
        %4941 = vmatpush.msra.mxu0 0.0
        %4942 = vmatpush.msra.mxu0 0.0
        %4943 = vmatpush.msra.mxu0 0.0
        %4944 = vmatpush.msra.mxu0 0.0
        %4945 = vmatpush.msra.mxu0 0.0
        %4946 = vmatpush.msra.mxu0 0.0
        %4947 = vmatpush.msra.mxu0 0.0
        %4948 = vmatpush.msra.mxu0 0.0
        %4949 = vmatpush.msra.mxu0 0.0
        %4950 = vmatpush.msra.mxu0 0.0
        %4951 = vmatpush.msra.mxu0 0.0
        %4952 = vmatpush.msra.mxu0 %v4909
        %4953 = vmatmul.f32.gmra.mxu0 %v4915
        %v4954 = vpop.f32.mrf.mxu0
        %v4955 = vadd.f32 0.0, %v4954
        %4956 = vdwg.mxu0
        %4957 = vmatpush.msra.mxu0 0.0
        %4958 = vmatpush.msra.mxu0 0.0
        %4959 = vmatpush.msra.mxu0 0.0
        %4960 = vmatpush.msra.mxu0 0.0
        %4961 = vmatpush.msra.mxu0 0.0
        %4962 = vmatpush.msra.mxu0 0.0
        %4963 = vmatpush.msra.mxu0 0.0
        %4964 = vmatpush.msra.mxu0 0.0
        %4965 = vmatpush.msra.mxu0 0.0
        %4966 = vmatpush.msra.mxu0 0.0
        %4967 = vmatpush.msra.mxu0 0.0
        %4968 = vmatpush.msra.mxu0 0.0
        %4969 = vmatpush.msra.mxu0 0.0
        %4970 = vmatpush.msra.mxu0 0.0
        %4971 = vmatpush.msra.mxu0 0.0
        %4972 = vmatpush.msra.mxu0 %v4910
        %4973 = vmatmul.f32.gmra.mxu0 %v4915
        %v4974 = vpop.f32.mrf.mxu0
        %v4975 = vadd.f32 0.0, %v4974
        %4976 = vdwg.mxu0
        %v4977 = vadd.f32 %v4895, %v4935
        %v4978 = vadd.f32 %v4896, %v4955
        %v4979 = vadd.f32 %v4897, %v4975
        %s4980 = scalar_lea.vmem %s7, 184
        %v4981 = vld [vmem:[%s4980] sm:$0xff]
        %4982 = vrot.lane.b32.xlu0 %v2985, 45
        %v4983 = vpop.permute.xlu0 %4982
        %4984 = vrot.lane.b32.xlu0 %v3045, 45
        %v4985 = vpop.permute.xlu0 %4984
        %4986 = vrot.lane.b32.xlu0 %v3105, 45
        %v4987 = vpop.permute.xlu0 %4986
        %4988 = vrot.lane.b32.xlu0 %v3165, 45
        %v4989 = vpop.permute.xlu0 %4988
        %v4990 = vsel %vm2495, %v4983, %v4985
        %v4991 = vsel %vm2495, %v4985, %v4987
        %v4992 = vsel %vm2495, %v4987, %v4989
        %v4997 = vsel %vm3184, %v4981, 0
        %4999 = vmatpush.msra.mxu0 0.0
        %5000 = vmatpush.msra.mxu0 0.0
        %5001 = vmatpush.msra.mxu0 0.0
        %5002 = vmatpush.msra.mxu0 0.0
        %5003 = vmatpush.msra.mxu0 0.0
        %5004 = vmatpush.msra.mxu0 0.0
        %5005 = vmatpush.msra.mxu0 0.0
        %5006 = vmatpush.msra.mxu0 0.0
        %5007 = vmatpush.msra.mxu0 0.0
        %5008 = vmatpush.msra.mxu0 0.0
        %5009 = vmatpush.msra.mxu0 0.0
        %5010 = vmatpush.msra.mxu0 0.0
        %5011 = vmatpush.msra.mxu0 0.0
        %5012 = vmatpush.msra.mxu0 0.0
        %5013 = vmatpush.msra.mxu0 0.0
        %5014 = vmatpush.msra.mxu0 %v4990
        %5015 = vmatmul.f32.gmra.mxu0 %v4997
        %v5016 = vpop.f32.mrf.mxu0
        %v5017 = vadd.f32 0.0, %v5016
        %5018 = vdwg.mxu0
        %5019 = vmatpush.msra.mxu0 0.0
        %5020 = vmatpush.msra.mxu0 0.0
        %5021 = vmatpush.msra.mxu0 0.0
        %5022 = vmatpush.msra.mxu0 0.0
        %5023 = vmatpush.msra.mxu0 0.0
        %5024 = vmatpush.msra.mxu0 0.0
        %5025 = vmatpush.msra.mxu0 0.0
        %5026 = vmatpush.msra.mxu0 0.0
        %5027 = vmatpush.msra.mxu0 0.0
        %5028 = vmatpush.msra.mxu0 0.0
        %5029 = vmatpush.msra.mxu0 0.0
        %5030 = vmatpush.msra.mxu0 0.0
        %5031 = vmatpush.msra.mxu0 0.0
        %5032 = vmatpush.msra.mxu0 0.0
        %5033 = vmatpush.msra.mxu0 0.0
        %5034 = vmatpush.msra.mxu0 %v4991
        %5035 = vmatmul.f32.gmra.mxu0 %v4997
        %v5036 = vpop.f32.mrf.mxu0
        %v5037 = vadd.f32 0.0, %v5036
        %5038 = vdwg.mxu0
        %5039 = vmatpush.msra.mxu0 0.0
        %5040 = vmatpush.msra.mxu0 0.0
        %5041 = vmatpush.msra.mxu0 0.0
        %5042 = vmatpush.msra.mxu0 0.0
        %5043 = vmatpush.msra.mxu0 0.0
        %5044 = vmatpush.msra.mxu0 0.0
        %5045 = vmatpush.msra.mxu0 0.0
        %5046 = vmatpush.msra.mxu0 0.0
        %5047 = vmatpush.msra.mxu0 0.0
        %5048 = vmatpush.msra.mxu0 0.0
        %5049 = vmatpush.msra.mxu0 0.0
        %5050 = vmatpush.msra.mxu0 0.0
        %5051 = vmatpush.msra.mxu0 0.0
        %5052 = vmatpush.msra.mxu0 0.0
        %5053 = vmatpush.msra.mxu0 0.0
        %5054 = vmatpush.msra.mxu0 %v4992
        %5055 = vmatmul.f32.gmra.mxu0 %v4997
        %v5056 = vpop.f32.mrf.mxu0
        %v5057 = vadd.f32 0.0, %v5056
        %5058 = vdwg.mxu0
        %v5059 = vadd.f32 %v4977, %v5017
        %v5060 = vadd.f32 %v4978, %v5037
        %v5061 = vadd.f32 %v4979, %v5057
        %s5062 = scalar_lea.vmem %s7, 192
        %v5063 = vld [vmem:[%s5062] sm:$0xff]
        %5064 = vrot.lane.b32.xlu0 %v2985, 44
        %v5065 = vpop.permute.xlu0 %5064
        %5066 = vrot.lane.b32.xlu0 %v3045, 44
        %v5067 = vpop.permute.xlu0 %5066
        %5068 = vrot.lane.b32.xlu0 %v3105, 44
        %v5069 = vpop.permute.xlu0 %5068
        %5070 = vrot.lane.b32.xlu0 %v3165, 44
        %v5071 = vpop.permute.xlu0 %5070
        %v5072 = vsel %vm2588, %v5065, %v5067
        %v5073 = vsel %vm2588, %v5067, %v5069
        %v5074 = vsel %vm2588, %v5069, %v5071
        %v5079 = vsel %vm3184, %v5063, 0
        %5081 = vmatpush.msra.mxu0 0.0
        %5082 = vmatpush.msra.mxu0 0.0
        %5083 = vmatpush.msra.mxu0 0.0
        %5084 = vmatpush.msra.mxu0 0.0
        %5085 = vmatpush.msra.mxu0 0.0
        %5086 = vmatpush.msra.mxu0 0.0
        %5087 = vmatpush.msra.mxu0 0.0
        %5088 = vmatpush.msra.mxu0 0.0
        %5089 = vmatpush.msra.mxu0 0.0
        %5090 = vmatpush.msra.mxu0 0.0
        %5091 = vmatpush.msra.mxu0 0.0
        %5092 = vmatpush.msra.mxu0 0.0
        %5093 = vmatpush.msra.mxu0 0.0
        %5094 = vmatpush.msra.mxu0 0.0
        %5095 = vmatpush.msra.mxu0 0.0
        %5096 = vmatpush.msra.mxu0 %v5072
        %5097 = vmatmul.f32.gmra.mxu0 %v5079
        %v5098 = vpop.f32.mrf.mxu0
        %v5099 = vadd.f32 0.0, %v5098
        %5100 = vdwg.mxu0
        %5101 = vmatpush.msra.mxu0 0.0
        %5102 = vmatpush.msra.mxu0 0.0
        %5103 = vmatpush.msra.mxu0 0.0
        %5104 = vmatpush.msra.mxu0 0.0
        %5105 = vmatpush.msra.mxu0 0.0
        %5106 = vmatpush.msra.mxu0 0.0
        %5107 = vmatpush.msra.mxu0 0.0
        %5108 = vmatpush.msra.mxu0 0.0
        %5109 = vmatpush.msra.mxu0 0.0
        %5110 = vmatpush.msra.mxu0 0.0
        %5111 = vmatpush.msra.mxu0 0.0
        %5112 = vmatpush.msra.mxu0 0.0
        %5113 = vmatpush.msra.mxu0 0.0
        %5114 = vmatpush.msra.mxu0 0.0
        %5115 = vmatpush.msra.mxu0 0.0
        %5116 = vmatpush.msra.mxu0 %v5073
        %5117 = vmatmul.f32.gmra.mxu0 %v5079
        %v5118 = vpop.f32.mrf.mxu0
        %v5119 = vadd.f32 0.0, %v5118
        %5120 = vdwg.mxu0
        %5121 = vmatpush.msra.mxu0 0.0
        %5122 = vmatpush.msra.mxu0 0.0
        %5123 = vmatpush.msra.mxu0 0.0
        %5124 = vmatpush.msra.mxu0 0.0
        %5125 = vmatpush.msra.mxu0 0.0
        %5126 = vmatpush.msra.mxu0 0.0
        %5127 = vmatpush.msra.mxu0 0.0
        %5128 = vmatpush.msra.mxu0 0.0
        %5129 = vmatpush.msra.mxu0 0.0
        %5130 = vmatpush.msra.mxu0 0.0
        %5131 = vmatpush.msra.mxu0 0.0
        %5132 = vmatpush.msra.mxu0 0.0
        %5133 = vmatpush.msra.mxu0 0.0
        %5134 = vmatpush.msra.mxu0 0.0
        %5135 = vmatpush.msra.mxu0 0.0
        %5136 = vmatpush.msra.mxu0 %v5074
        %5137 = vmatmul.f32.gmra.mxu0 %v5079
        %v5138 = vpop.f32.mrf.mxu0
        %v5139 = vadd.f32 0.0, %v5138
        %5140 = vdwg.mxu0
        %v5141 = vadd.f32 %v5059, %v5099
        %v5142 = vadd.f32 %v5060, %v5119
        %v5143 = vadd.f32 %v5061, %v5139
        %v5144 = vld [vmem:[%s11] sm:$0xff]
        %v5145 = vld [vmem:[%s11 + $0x8] sm:$0xff]
        %v5146 = vld [vmem:[%s11 + $0x10] sm:$0xff]
        %v5147 = vld [vmem:[%s11 + $0x18] sm:$0xff]
        %v5148 = vld [vmem:[%s11 + $0x20] sm:$0xff]
        %v5149 = vld [vmem:[%s11 + $0x28] sm:$0xff]
        %v5150 = vld [vmem:[%s11 + $0x30] sm:$0xff]
        %v5151 = vld [vmem:[%s11 + $0x38] sm:$0xff]
        %v5152 = vld [vmem:[%s11 + $0x40] sm:$0xff]
        %v5153 = vld [vmem:[%s11 + $0x48] sm:$0xff]
        %v5154 = vld [vmem:[%s11 + $0x50] sm:$0xff]
        %v5155 = vld [vmem:[%s11 + $0x58] sm:$0xff]
        %v5156 = vld [vmem:[%s11 + $0x60] sm:$0xff]
        %v5157 = vld [vmem:[%s11 + $0x68] sm:$0xff]
        %v5158 = vld [vmem:[%s11 + $0x70] sm:$0xff]
        %v5159 = vld [vmem:[%s11 + $0x78] sm:$0xff]
        %v5160 = vld [vmem:[%s11 + $0x80] sm:$0xff]
        %v5161 = vld [vmem:[%s11 + $0x88] sm:$0xff]
        %v5162 = vld [vmem:[%s11 + $0x90] sm:$0xff]
        %v5163 = vld [vmem:[%s11 + $0x98] sm:$0xff]
        %v5164 = vld [vmem:[%s11 + $0xa0] sm:$0xff]
        %v5165 = vld [vmem:[%s11 + $0xa8] sm:$0xff]
        %v5166 = vld [vmem:[%s11 + $0xb0] sm:$0xff]
        %v5167 = vld [vmem:[%s11 + $0xb8] sm:$0xff]
        %v5168 = vld [vmem:[%s11 + $0xc0] sm:$0xff]
        %v5169 = vld [vmem:[%s11 + $0xc8] sm:$0xff]
        %v5170 = vld [vmem:[%s11 + $0xd0] sm:$0xff]
        %v5171 = vld [vmem:[%s11 + $0xd8] sm:$0xff]
        %v5172 = vld [vmem:[%s11 + $0xe0] sm:$0xff]
        %v5173 = vld [vmem:[%s11 + $0xe8] sm:$0xff]
        %v5174 = vld [vmem:[%s11 + $0xf0] sm:$0xff]
        %v5175 = vld [vmem:[%s11 + $0xf8] sm:$0xff]
        %v5176 = vld [vmem:[%s11 + $0x100] sm:$0xff]
        %v5177 = vld [vmem:[%s11 + $0x108] sm:$0xff]
        %v5178 = vld [vmem:[%s11 + $0x110] sm:$0xff]
        %v5179 = vld [vmem:[%s11 + $0x118] sm:$0xff]
        %v5180 = vld [vmem:[%s11 + $0x120] sm:$0xff]
        %v5181 = vld [vmem:[%s11 + $0x128] sm:$0xff]
        %v5182 = vld [vmem:[%s11 + $0x130] sm:$0xff]
        %v5183 = vld [vmem:[%s11 + $0x138] sm:$0xf]
        %v5184 = vld [vmem:[%s8] sm:$0xff]
        %5186 = vset.pattern.permute.xlu0 0
        %5187 = vperm.xlu0 %5186, %v5184
        %v5188 = vpop.permute.xlu0 %5187
        %v5191 = vsel %vm2685, %v5143, 0
        %v5194 = vsel %vm455, %v5183, 0
        %5196 = vmatpush.msra.mxu0 %v5159
        %5197 = vmatpush.msra.mxu0 %v5158
        %5198 = vmatpush.msra.mxu0 %v5157
        %5199 = vmatpush.msra.mxu0 %v5156
        %5200 = vmatpush.msra.mxu0 %v5155
        %5201 = vmatpush.msra.mxu0 %v5154
        %5202 = vmatpush.msra.mxu0 %v5153
        %5203 = vmatpush.msra.mxu0 %v5152
        %5204 = vmatpush.msra.mxu0 %v5151
        %5205 = vmatpush.msra.mxu0 %v5150
        %5206 = vmatpush.msra.mxu0 %v5149
        %5207 = vmatpush.msra.mxu0 %v5148
        %5208 = vmatpush.msra.mxu0 %v5147
        %5209 = vmatpush.msra.mxu0 %v5146
        %5210 = vmatpush.msra.mxu0 %v5145
        %5211 = vmatpush.msra.mxu0 %v5144
        %5212 = vmatmul.f32.gmra.mxu0 %v5141
        %v5213 = vpop.f32.mrf.mxu0
        %v5214 = vadd.f32 %v5188, %v5213
        %5215 = vdwg.mxu0
        %5216 = vmatpush.msra.mxu0 %v5175
        %5217 = vmatpush.msra.mxu0 %v5174
        %5218 = vmatpush.msra.mxu0 %v5173
        %5219 = vmatpush.msra.mxu0 %v5172
        %5220 = vmatpush.msra.mxu0 %v5171
        %5221 = vmatpush.msra.mxu0 %v5170
        %5222 = vmatpush.msra.mxu0 %v5169
        %5223 = vmatpush.msra.mxu0 %v5168
        %5224 = vmatpush.msra.mxu0 %v5167
        %5225 = vmatpush.msra.mxu0 %v5166
        %5226 = vmatpush.msra.mxu0 %v5165
        %5227 = vmatpush.msra.mxu0 %v5164
        %5228 = vmatpush.msra.mxu0 %v5163
        %5229 = vmatpush.msra.mxu0 %v5162
        %5230 = vmatpush.msra.mxu0 %v5161
        %5231 = vmatpush.msra.mxu0 %v5160
        %5232 = vmatmul.f32.gmra.mxu0 %v5142
        %v5233 = vpop.f32.mrf.mxu0
        %v5234 = vadd.f32 %v5214, %v5233
        %5235 = vdwg.mxu0
        %5236 = vmatpush.msra.mxu0 0.0
        %5237 = vmatpush.msra.mxu0 0.0
        %5238 = vmatpush.msra.mxu0 0.0
        %5239 = vmatpush.msra.mxu0 0.0
        %5240 = vmatpush.msra.mxu0 0.0
        %5241 = vmatpush.msra.mxu0 0.0
        %5242 = vmatpush.msra.mxu0 0.0
        %5243 = vmatpush.msra.mxu0 0.0
        %5244 = vmatpush.msra.mxu0 %v5194
        %5245 = vmatpush.msra.mxu0 %v5182
        %5246 = vmatpush.msra.mxu0 %v5181
        %5247 = vmatpush.msra.mxu0 %v5180
        %5248 = vmatpush.msra.mxu0 %v5179
        %5249 = vmatpush.msra.mxu0 %v5178
        %5250 = vmatpush.msra.mxu0 %v5177
        %5251 = vmatpush.msra.mxu0 %v5176
        %5252 = vmatmul.f32.gmra.mxu0 %v5191
        %v5253 = vpop.f32.mrf.mxu0
        %v5254 = vadd.f32 %v5234, %v5253
        %5255 = vdwg.mxu0
        %v5256 = vsel %vm2124, %v5254, 0.0
        %5257 = vadd.xlane.f32.xlu0 %v5256
        %v5258 = vpop.xlane.xlu0 %5257
        %v5259 = vrot.slane %v5258, 4
        %v5260 = vadd.f32 %v5258, %v5259
        %v5261 = vrot.slane %v5260, 2
        %v5262 = vadd.f32 %v5260, %v5261
        %v5263 = vrot.slane %v5262, 1
        %v5264 = vadd.f32 %v5262, %v5263
        %s5265 = vtos %v5264
        %s5266 = smul.f32 %s5265, 0.001953125
        %v5267 = vmul.f32 %v5254, %v5254
        %v5268 = vsel %vm2124, %v5267, 0.0
        %5269 = vadd.xlane.f32.xlu0 %v5268
        %v5270 = vpop.xlane.xlu0 %5269
        %v5271 = vrot.slane %v5270, 4
        %v5272 = vadd.f32 %v5270, %v5271
        %v5273 = vrot.slane %v5272, 2
        %v5274 = vadd.f32 %v5272, %v5273
        %v5275 = vrot.slane %v5274, 1
        %v5276 = vadd.f32 %v5274, %v5275
        %s5277 = vtos %v5276
        %s5278 = smul.f32 %s5277, 0.001953125
        %s5279 = smul.f32 %s5266, %s5266
        %s5280 = ssub.f32 %s5278, %s5279
        %v5281 = vstv %s5266
        %v5282 = vsub.f32 %v5254, %v5281
        %s5283 = sadd.f32 %s5280, 1e-05
        %v5284 = vstv %s5283
        %v5285 = vrsqrt.pop %v5284
        %v5286 = vmul.f32 %v5285, %v5284
        %v5287 = vmul.f32 %v5286, %v5285
        %v5288 = vmul.f32 0.5, %v5287
        %v5289 = vsub.f32 1.5, %v5288
        %v5290 = vmul.f32 %v5285, %v5289
        %vm5291 = vweird.f32 %v5284
        %vm5292 = vweird.f32 %v5285
        %vm5293 = vmor %vm5291, %vm5292
        %v5294 = vsel %vm5293, %v5285, %v5290
        %s5295 = vtos %v5294
        %v5296 = vstv %s5295
        %v5297 = vmul.f32 %v5282, %v5296
        %v5298 = vld [vmem:[%s9] sm:$0xff]
        %v5299 = vmul.f32 %v5297, %v5298
        %v5300 = vld [vmem:[%s10] sm:$0xff]
        %v5301 = vadd.f32 %v5299, %v5300
        %v5302 = vmax.f32 %v5301, 0.0
        %5303 = vst.msk [vmem:[%s428] sm:$0xff] %vm2124, %v5302
        %p5304 = scmp.lt.s32.totalorder %s24, 1
        %s5305 = scalar_select %p5304, %s24, 1
        %s5306 = smul.addr %s5305, 8
        %s5307 = scalar_lea.vmem %s12, %s5306
        // Predicated region
        $region73: #{encoder_block_forward.1} parent=67 // pred_check
          %p5308 = pneg %p299
        $region74: #{encoder_block_forward.1} parent=67 // pred_check_branch
          %5310 = sbr.rel (%p5308) target = $region76
        $region75: #{encoder_block_forward.1} parent=67 // pred_region
          _
        $region76: #{encoder_block_forward.1} parent=67 // pred_fallthru
          _
      $region68: #{encoder_block_forward.1} parent=5 // pred_fallthru
        _
      %p5311 = scmp.le.s32.totalorder 2, %s19
      // Predicated region
      $region77: #{encoder_block_forward.1} parent=5 // pred_check
        %p5312 = pneg %p5311
      $region78: #{encoder_block_forward.1} parent=5 // pred_check_branch
        %5314 = sbr.rel (%p5312) target = $region80
      $region79: #{encoder_block_forward.1} parent=5 // pred_region
        %s5315 = ssub.s32 %s19, 2
        // Predicated region
        $region81: #{encoder_block_forward.1} parent=79 // pred_check
          %p5316 = pneg %p305
        $region82: #{encoder_block_forward.1} parent=79 // pred_check_branch
          %5318 = sbr.rel (%p5316) target = $region84
        $region83: #{encoder_block_forward.1} parent=79 // pred_region
          %p5319 = scmp.lt.s32.totalorder %s25, 1
          %s5320 = scalar_select %p5319, %s25, 1
          %s5321 = smul.addr %s5320, 8
          %s5322 = scalar_lea.vmem %s12, %s5321
        $region84: #{encoder_block_forward.1} parent=79 // pred_fallthru
          _
      $region80: #{encoder_block_forward.1} parent=5 // pred_fallthru
        _
    $region6: #{encoder_block_forward.1} parent=1 // loop_footer
      %s23 = sadd.s32 1, %s19
    $region7: #{encoder_block_forward.1} parent=1 // loop_footer_branch
      %18 = sbr.rel target = $region3
    $region8: #{encoder_block_forward.1} parent=1 // loop_exit
      _
    %5323 = vsyncpa [#allocation3], 1
    %s5324 = scalar_lea.sflag [#allocation3], 1
    %5325 = vsyncpa %s5324, 1

</llo_original>
